<compile_context>
chip_gen: v7x
topology: tpu7x:2x2x1
jax: 0.10.0
libtpu: 0.0.40
codegen_flags: <defaults>
</compile_context>

<pallas_src>
import jax
import jax.numpy as jnp
from jax.experimental import pallas as pl
from jax.experimental.pallas import tpu as pltpu


def se_bottleneck_kernel(x_ref, w1_ref, b1_ref, w2_ref, b2_ref,
                         w3_ref, b3_ref, sew1_ref, sew2_ref, out_ref):
    Bb, L, Cin = x_ref.shape
    C4 = out_ref.shape[-1]
    M = Bb * L
    x = x_ref[...].reshape(M, Cin)                            # (Bb*L, Cin) bf16

    # --- conv1 (k=1, BN1 scale folded into w1) + shift + ReLU ---
    h = jnp.dot(x, w1_ref[...], preferred_element_type=jnp.float32)
    h = jnp.maximum(h + b1_ref[...], 0.0)                     # (M, P) f32
    P = h.shape[-1]

    # --- conv2 (k=3, pad=1, stride=1, BN2 folded) as ONE merged matmul ---
    # Taps built via sublane roll (XLU) + iota mask; (row % L) boundaries stop
    # taps leaking across the Bb batch elements packed along the sublane axis.
    row = jax.lax.broadcasted_iota(jnp.int32, h.shape, 0)
    rmod = row % L
    h_prev = jnp.where(rmod == 0, 0.0,
                       pltpu.roll(h, shift=1, axis=0)).astype(jnp.bfloat16)
    h_next = jnp.where(rmod == L - 1, 0.0,
                       pltpu.roll(h, shift=M - 1, axis=0)).astype(jnp.bfloat16)
    taps = jnp.concatenate([h_prev, h.astype(jnp.bfloat16), h_next], axis=1)
    h2 = jnp.dot(taps, w2_ref[...], preferred_element_type=jnp.float32)
    h2 = jnp.maximum(h2 + b2_ref[...], 0.0)                   # (M, P) f32
    h2b = h2.astype(jnp.bfloat16)

    # --- conv3 (k=1, BN3 folded) -> residual (module's residual is bn3 output) ---
    resid = jnp.dot(h2b, w3_ref[...],
                    preferred_element_type=jnp.float32) + b3_ref[...]   # (M, 4P) f32

    # --- SE: mean over L, fc -> ReLU -> fc -> sigmoid ---
    # mean_L(resid) == mean_L(h2) @ w3 + b3 (mean commutes with the k=1 conv),
    # so we reduce the (., P) tensor instead of (., 4P).
    y = jnp.mean(h2.reshape(Bb, L, P), axis=1)                # (Bb, P) f32
    y = jnp.dot(y.astype(jnp.bfloat16), w3_ref[...],
                preferred_element_type=jnp.float32) + b3_ref[...]       # (Bb, 4P)
    z = jnp.maximum(jnp.dot(y.astype(jnp.bfloat16), sew1_ref[...],
                            preferred_element_type=jnp.float32), 0.0)
    g = jax.nn.sigmoid(jnp.dot(z.astype(jnp.bfloat16), sew2_ref[...],
                               preferred_element_type=jnp.float32))     # (Bb, 4P)

    # out = relu(se(out) + residual) = relu(resid * (g + 1))
    resid3 = resid.reshape(Bb, L, C4)
    out_ref[...] = jnp.maximum(resid3 * (g + 1.0)[:, None, :],
                               0.0).astype(out_ref.dtype)


def prepare_params(p):
    """Fold BN scales into conv weights, merge conv2 taps along K, cast to bf16."""
    P = p["w1"].shape[1]
    return {
        "w1": (p["w1"] * p["s1"]).astype(jnp.bfloat16),                     # (Cin, P)
        "b1": p["b1"],
        "w2m": (p["w2"] * p["s2"]).reshape(3 * P, P).astype(jnp.bfloat16),  # (3P, P)
        "b2": p["b2"],
        "w3": (p["w3"] * p["s3"]).astype(jnp.bfloat16),                     # (P, 4P)
        "b3": p["b3"],
        "se_w1": p["se_w1"].astype(jnp.bfloat16),                           # (4P, H)
        "se_w2": p["se_w2"].astype(jnp.bfloat16),                           # (H, 4P)
    }


def se_bottleneck(x_blc, q, *, block_b=8):
    """x_blc: (B, L, Cin) bf16 (channels-last).  Returns (B, L, 4*planes) bf16."""
    B, L, Cin = x_blc.shape
    P = q["w1"].shape[1]
    C4 = 4 * P
    Hs = q["se_w1"].shape[1]
    Bb = min(block_b, B)
    assert B % Bb == 0, "batch must be divisible by block_b"

    def full(shape):
        n = len(shape)
        return pl.BlockSpec(shape, lambda b, _n=n: (0,) * _n)

    in_specs = [
        pl.BlockSpec((Bb, L, Cin), lambda b: (b, 0, 0)),  # x (streamed per step)
        full((Cin, P)), full((1, P)),                     # conv1 / bn1 shift
        full((3 * P, P)), full((1, P)),                   # merged conv2 / bn2 shift
        full((P, C4)), full((1, C4)),                     # conv3 / bn3 shift
        full((C4, Hs)), full((Hs, C4)),                   # SE fc weights (bf16)
    ]
    out_specs = pl.BlockSpec((Bb, L, C4), lambda b: (b, 0, 0))

    # Per-step VMEM at Bb=4, L=128: x 2x128KiB + out 2x512KiB + resid 1MiB +
    # taps 384KiB + h/h2 512KiB + weights ~260KiB  => ~3.5 MiB (fits every gen).
    return pl.pallas_call(
        se_bottleneck_kernel,
        out_shape=jax.ShapeDtypeStruct((B, L, C4), jnp.bfloat16),
        grid_spec=pltpu.PrefetchScalarGridSpec(
            num_scalar_prefetch=0,
            grid=(B // Bb,),
            in_specs=in_specs,
            out_specs=out_specs,
        ),
        compiler_params=pltpu.CompilerParams(
            dimension_semantics=("parallel",)),
    )(x_blc,
      q["w1"], q["b1"], q["w2m"], q["b2"],
      q["w3"], q["b3"], q["se_w1"], q["se_w2"])


def reference_matched(x_bf16, q):
    """Pure-JAX mirror of the kernel numerics (bf16 matmul operands, f32 acc)."""
    B, L, Cin = x_bf16.shape
    h = jnp.einsum("blc,cp->blp", x_bf16, q["w1"],
                   preferred_element_type=jnp.float32)
    h = jnp.maximum(h + q["b1"], 0.0)
    hp = jnp.pad(h, ((0, 0), (1, 1), (0, 0)))
    taps = jnp.concatenate([hp[:, 0:L], hp[:, 1:L + 1], hp[:, 2:L + 2]],
                           axis=-1).astype(jnp.bfloat16)
    h2 = jnp.einsum("blk,kp->blp", taps, q["w2m"],
                    preferred_element_type=jnp.float32)
    h2 = jnp.maximum(h2 + q["b2"], 0.0)
    resid = jnp.einsum("blp,pc->blc", h2.astype(jnp.bfloat16), q["w3"],
                       preferred_element_type=jnp.float32) + q["b3"]
    y = jnp.mean(h2, axis=1)                                   # (B, P) f32
    y = jnp.dot(y.astype(jnp.bfloat16), q["w3"],
                preferred_element_type=jnp.float32) + q["b3"]
    z = jnp.maximum(jnp.dot(y.astype(jnp.bfloat16), q["se_w1"],
                            preferred_element_type=jnp.float32), 0.0)
    g = jax.nn.sigmoid(jnp.dot(z.astype(jnp.bfloat16), q["se_w2"],
                               preferred_element_type=jnp.float32))
    return jnp.maximum(resid * (g + 1.0)[:, None, :], 0.0)


def reference_module_f32(x_blc, p):
    """f32 reference of the PyTorch module's forward (inference-mode BN)."""
    L = x_blc.shape[1]
    h = jnp.maximum((x_blc @ p["w1"]) * p["s1"] + p["b1"], 0.0)
    hp = jnp.pad(h, ((0, 0), (1, 1), (0, 0)))
    acc = sum(hp[:, k:k + L] @ p["w2"][k] for k in range(3))
    h2 = jnp.maximum(acc * p["s2"] + p["b2"], 0.0)
    resid = (h2 @ p["w3"]) * p["s3"] + p["b3"]
    y = jnp.mean(resid, axis=1, keepdims=True)
    z = jnp.maximum(y @ p["se_w1"], 0.0)
    g = jax.nn.sigmoid(z @ p["se_w2"])
    return jnp.maximum(resid * g + resid, 0.0)


def make_params(key, inplanes, planes, reduction=16, eps=1e-5):
    c4 = planes * 4
    hid = c4 // reduction
    ks = jax.random.split(key, 20)

    def bn(k1, k2, k3, k4, c):
        gamma = 1.0 + 0.1 * jax.random.normal(k1, (c,), jnp.float32)
        beta = 0.1 * jax.random.normal(k2, (c,), jnp.float32)
        mean = 0.1 * jax.random.normal(k3, (c,), jnp.float32)
        var = jnp.abs(jax.random.normal(k4, (c,), jnp.float32)) + 0.5
        scale = gamma / jnp.sqrt(var + eps)
        shift = beta - mean * scale
        return scale.reshape(1, c), shift.reshape(1, c)

    s1, b1 = bn(ks[0], ks[1], ks[2], ks[3], planes)
    s2, b2 = bn(ks[4], ks[5], ks[6], ks[7], planes)
    s3, b3 = bn(ks[8], ks[9], ks[10], ks[11], c4)

    return {
        "w1": 0.1 * jax.random.normal(ks[12], (inplanes, planes), jnp.float32),
        "s1": s1, "b1": b1,
        "w2": 0.1 * jax.random.normal(ks[13], (3, planes, planes), jnp.float32),
        "s2": s2, "b2": b2,
        "w3": 0.1 * jax.random.normal(ks[14], (planes, c4), jnp.float32),
        "s3": s3, "b3": b3,
        "se_w1": 0.1 * jax.random.normal(ks[15], (c4, hid), jnp.float32),
        "se_w2": 0.1 * jax.random.normal(ks[16], (hid, c4), jnp.float32),
    }


if __name__ == "__main__":
    # planes chosen so P=128 and 4P=512 are lane-dense; Bb=4 batch elements per
    # grid step (at scale use Bb=8-16 and keep grid length >= 4 on v7x).
    B, INPLANES, PLANES, L = 8, 128, 128, 128   # SE hidden = 512 // 16 = 32
    BB = 4

    key = jax.random.PRNGKey(0)
    kx, kp = jax.random.split(key)
    # PyTorch input is NCL (B, C, L); transpose to kernel layout (B, L, C).
    x_ncl = jax.random.normal(kx, (B, INPLANES, L), jnp.float32)
    x_blc = jnp.transpose(x_ncl, (0, 2, 1))

    params = make_params(kp, INPLANES, PLANES, reduction=16)
    prep = prepare_params(params)
    x_bf16 = x_blc.astype(jnp.bfloat16)   # halves streaming-input DMA bytes

    out = se_bottleneck(x_bf16, prep, block_b=BB)
    out = jax.block_until_ready(out)
    assert out.shape == (B, L, PLANES * 4)
    assert out.dtype == jnp.bfloat16
    out_f32 = out.astype(jnp.float32)

    # Tight check: pure-JAX mirror of the kernel's numerics (same folded bf16
    # weights and SE mean-commute); tolerance covers the bf16 output cast.
    ref_m = reference_matched(x_bf16, prep)
    assert jnp.allclose(out_f32, ref_m, rtol=2e-2, atol=2e-2), \
        "mismatch vs matched reference"

    # Loose check: full-f32 module math (bf16 matmuls give percent-level deviation).
    ref_f = reference_module_f32(x_blc, params)
    assert jnp.allclose(out_f32, ref_f, rtol=1e-1, atol=1e-1), \
        "mismatch vs f32 module reference"

    print("KERNEL_OK")
</pallas_src>

<mosaic_0001>
module attributes {stable_mosaic.version = 11 : i64} {
  func.func @se_bottleneck_kernel(%arg0: i32, %arg1: memref<4x128x128xbf16, #tpu.memory_space<vmem>>, %arg2: memref<128x128xbf16, #tpu.memory_space<vmem>>, %arg3: memref<1x128xf32, #tpu.memory_space<vmem>>, %arg4: memref<384x128xbf16, #tpu.memory_space<vmem>>, %arg5: memref<1x128xf32, #tpu.memory_space<vmem>>, %arg6: memref<128x512xbf16, #tpu.memory_space<vmem>>, %arg7: memref<1x512xf32, #tpu.memory_space<vmem>>, %arg8: memref<512x32xbf16, #tpu.memory_space<vmem>>, %arg9: memref<32x512xbf16, #tpu.memory_space<vmem>>, %arg10: memref<4x128x512xbf16, #tpu.memory_space<vmem>>) attributes {dimension_semantics = [#tpu.dimension_semantics<parallel>], iteration_bounds = array<i64: 2>, scalar_prefetch = 0 : i64, scratch_operands = 0 : i64, tpu.core_type = #tpu.core_type<tc>, window_params = [{transform_indices = @transform_0, window_bounds = array<i64: 4, 128, 128>}, {pipeline_mode = #tpu.pipeline_mode<synchronous>, transform_indices = @transform_1, window_bounds = array<i64: 128, 128>}, {pipeline_mode = #tpu.pipeline_mode<synchronous>, transform_indices = @transform_2, window_bounds = array<i64: 1, 128>}, {pipeline_mode = #tpu.pipeline_mode<synchronous>, transform_indices = @transform_3, window_bounds = array<i64: 384, 128>}, {pipeline_mode = #tpu.pipeline_mode<synchronous>, transform_indices = @transform_4, window_bounds = array<i64: 1, 128>}, {pipeline_mode = #tpu.pipeline_mode<synchronous>, transform_indices = @transform_5, window_bounds = array<i64: 128, 512>}, {pipeline_mode = #tpu.pipeline_mode<synchronous>, transform_indices = @transform_6, window_bounds = array<i64: 1, 512>}, {pipeline_mode = #tpu.pipeline_mode<synchronous>, transform_indices = @transform_7, window_bounds = array<i64: 512, 32>}, {pipeline_mode = #tpu.pipeline_mode<synchronous>, transform_indices = @transform_8, window_bounds = array<i64: 32, 512>}, {transform_indices = @transform_9, window_bounds = array<i64: 4, 128, 512>}]} {
    %c0 = arith.constant 0 : index
    %c0_0 = arith.constant 0 : index
    %c0_1 = arith.constant 0 : index
    %0 = vector.load %arg1[%c0, %c0_0, %c0_1] : memref<4x128x128xbf16, #tpu.memory_space<vmem>>, vector<4x128x128xbf16>
    %1 = vector.shape_cast %0 : vector<4x128x128xbf16> to vector<512x128xbf16>
    %c0_2 = arith.constant 0 : index
    %c0_3 = arith.constant 0 : index
    %2 = vector.load %arg2[%c0_2, %c0_3] : memref<128x128xbf16, #tpu.memory_space<vmem>>, vector<128x128xbf16>
    %cst = arith.constant dense<0.000000e+00> : vector<512x128xf32>
    %3 = tpu.matmul %1, %2, %cst {dimension_numbers = #tpu.dot_dimension_numbers<[1], [0], [0], [1], [0, 0, 1, 1], [], []>} : vector<512x128xbf16>, vector<128x128xbf16>, vector<512x128xf32> -> vector<512x128xf32>
    %c0_4 = arith.constant 0 : index
    %c0_5 = arith.constant 0 : index
    %4 = vector.load %arg3[%c0_4, %c0_5] : memref<1x128xf32, #tpu.memory_space<vmem>>, vector<1x128xf32>
    %5 = vector.broadcast %4 : vector<1x128xf32> to vector<512x128xf32>
    %6 = arith.addf %3, %5 : vector<512x128xf32>
    %cst_6 = arith.constant 0.000000e+00 : f32
    %7 = vector.broadcast %cst_6 : f32 to vector<512x128xf32>
    %8 = arith.maximumf %6, %7 : vector<512x128xf32>
    %9 = tpu.iota {dimensions = array<i32: 0>} : vector<512x128xi32>
    %c128_i32 = arith.constant 128 : i32
    %c0_i32 = arith.constant 0 : i32
    %10 = arith.cmpi eq, %c128_i32, %c0_i32 : i32
    %c1_i32 = arith.constant 1 : i32
    %11 = arith.select %10, %c1_i32, %c128_i32 : i32
    %12 = vector.broadcast %11 : i32 to vector<512x128xi32>
    %13 = arith.remsi %9, %12 : vector<512x128xi32>
    %c0_i32_7 = arith.constant 0 : i32
    %14 = vector.broadcast %c0_i32_7 : i32 to vector<512x128xi32>
    %15 = arith.cmpi ne, %13, %14 : vector<512x128xi32>
    %c0_i32_8 = arith.constant 0 : i32
    %16 = vector.broadcast %c0_i32_8 : i32 to vector<512x128xi32>
    %17 = arith.cmpi slt, %13, %16 : vector<512x128xi32>
    %c0_i32_9 = arith.constant 0 : i32
    %18 = arith.cmpi slt, %11, %c0_i32_9 : i32
    %19 = vector.broadcast %18 : i1 to vector<512x128xi1>
    %20 = vector.broadcast %19 : vector<512x128xi1> to vector<512x128xi1>
    %21 = arith.xori %17, %20 : vector<512x128xi1>
    %22 = arith.andi %21, %15 : vector<512x128xi1>
    %23 = vector.broadcast %11 : i32 to vector<512x128xi32>
    %24 = arith.addi %13, %23 : vector<512x128xi32>
    %25 = arith.select %22, %24, %13 : vector<512x128xi1>, vector<512x128xi32>
    %c0_i32_10 = arith.constant 0 : i32
    %26 = vector.broadcast %c0_i32_10 : i32 to vector<512x128xi32>
    %27 = arith.cmpi eq, %25, %26 : vector<512x128xi32>
    %c1_i32_11 = arith.constant 1 : i32
    %28 = tpu.dynamic_rotate %8 by %c1_i32_11 dim 0 : vector<512x128xf32>, i32 -> vector<512x128xf32>
    %cst_12 = arith.constant 0.000000e+00 : f32
    %29 = vector.broadcast %cst_12 : f32 to vector<512x128xf32>
    %30 = arith.select %27, %29, %28 : vector<512x128xi1>, vector<512x128xf32>
    %31 = arith.truncf %30 : vector<512x128xf32> to vector<512x128xbf16>
    %c127_i32 = arith.constant 127 : i32
    %32 = vector.broadcast %c127_i32 : i32 to vector<512x128xi32>
    %33 = arith.cmpi eq, %25, %32 : vector<512x128xi32>
    %c511_i32 = arith.constant 511 : i32
    %34 = tpu.dynamic_rotate %8 by %c511_i32 dim 0 : vector<512x128xf32>, i32 -> vector<512x128xf32>
    %cst_13 = arith.constant 0.000000e+00 : f32
    %35 = vector.broadcast %cst_13 : f32 to vector<512x128xf32>
    %36 = arith.select %33, %35, %34 : vector<512x128xi1>, vector<512x128xf32>
    %37 = arith.truncf %36 : vector<512x128xf32> to vector<512x128xbf16>
    %38 = arith.truncf %8 : vector<512x128xf32> to vector<512x128xbf16>
    %39 = tpu.concatenate %31, %38, %37 in 1 : vector<512x128xbf16>, vector<512x128xbf16>, vector<512x128xbf16> -> vector<512x384xbf16>
    %c0_14 = arith.constant 0 : index
    %c0_15 = arith.constant 0 : index
    %40 = vector.load %arg4[%c0_14, %c0_15] : memref<384x128xbf16, #tpu.memory_space<vmem>>, vector<384x128xbf16>
    %cst_16 = arith.constant dense<0.000000e+00> : vector<512x128xf32>
    %41 = tpu.matmul %39, %40, %cst_16 {dimension_numbers = #tpu.dot_dimension_numbers<[1], [0], [0], [1], [0, 0, 1, 1], [], []>} : vector<512x384xbf16>, vector<384x128xbf16>, vector<512x128xf32> -> vector<512x128xf32>
    %c0_17 = arith.constant 0 : index
    %c0_18 = arith.constant 0 : index
    %42 = vector.load %arg5[%c0_17, %c0_18] : memref<1x128xf32, #tpu.memory_space<vmem>>, vector<1x128xf32>
    %43 = vector.broadcast %42 : vector<1x128xf32> to vector<512x128xf32>
    %44 = arith.addf %41, %43 : vector<512x128xf32>
    %cst_19 = arith.constant 0.000000e+00 : f32
    %45 = vector.broadcast %cst_19 : f32 to vector<512x128xf32>
    %46 = arith.maximumf %44, %45 : vector<512x128xf32>
    %47 = arith.truncf %46 : vector<512x128xf32> to vector<512x128xbf16>
    %c0_20 = arith.constant 0 : index
    %c0_21 = arith.constant 0 : index
    %48 = vector.load %arg6[%c0_20, %c0_21] : memref<128x512xbf16, #tpu.memory_space<vmem>>, vector<128x512xbf16>
    %cst_22 = arith.constant dense<0.000000e+00> : vector<512x512xf32>
    %49 = tpu.matmul %47, %48, %cst_22 {dimension_numbers = #tpu.dot_dimension_numbers<[1], [0], [0], [1], [0, 0, 1, 1], [], []>} : vector<512x128xbf16>, vector<128x512xbf16>, vector<512x512xf32> -> vector<512x512xf32>
    %c0_23 = arith.constant 0 : index
    %c0_24 = arith.constant 0 : index
    %50 = vector.load %arg7[%c0_23, %c0_24] : memref<1x512xf32, #tpu.memory_space<vmem>>, vector<1x512xf32>
    %51 = vector.broadcast %50 : vector<1x512xf32> to vector<512x512xf32>
    %52 = arith.addf %49, %51 : vector<512x512xf32>
    %53 = vector.shape_cast %46 : vector<512x128xf32> to vector<4x128x128xf32>
    %cst_25 = arith.constant dense<0.000000e+00> : vector<4x128xf32>
    %54 = vector.multi_reduction <add>, %53, %cst_25 [1] : vector<4x128x128xf32> to vector<4x128xf32>
    %cst_26 = arith.constant 1.280000e+02 : f32
    %55 = vector.broadcast %cst_26 : f32 to vector<4x128xf32>
    %56 = arith.divf %54, %55 : vector<4x128xf32>
    %57 = arith.truncf %56 : vector<4x128xf32> to vector<4x128xbf16>
    %c0_27 = arith.constant 0 : index
    %c0_28 = arith.constant 0 : index
    %58 = vector.load %arg6[%c0_27, %c0_28] : memref<128x512xbf16, #tpu.memory_space<vmem>>, vector<128x512xbf16>
    %cst_29 = arith.constant dense<0.000000e+00> : vector<4x512xf32>
    %59 = tpu.matmul %57, %58, %cst_29 {dimension_numbers = #tpu.dot_dimension_numbers<[1], [0], [0], [1], [0, 0, 1, 1], [], []>} : vector<4x128xbf16>, vector<128x512xbf16>, vector<4x512xf32> -> vector<4x512xf32>
    %c0_30 = arith.constant 0 : index
    %c0_31 = arith.constant 0 : index
    %60 = vector.load %arg7[%c0_30, %c0_31] : memref<1x512xf32, #tpu.memory_space<vmem>>, vector<1x512xf32>
    %61 = vector.broadcast %60 : vector<1x512xf32> to vector<4x512xf32>
    %62 = arith.addf %59, %61 : vector<4x512xf32>
    %63 = arith.truncf %62 : vector<4x512xf32> to vector<4x512xbf16>
    %c0_32 = arith.constant 0 : index
    %c0_33 = arith.constant 0 : index
    %64 = vector.load %arg8[%c0_32, %c0_33] : memref<512x32xbf16, #tpu.memory_space<vmem>>, vector<512x32xbf16>
    %cst_34 = arith.constant dense<0.000000e+00> : vector<4x32xf32>
    %65 = tpu.matmul %63, %64, %cst_34 {dimension_numbers = #tpu.dot_dimension_numbers<[1], [0], [0], [1], [0, 0, 1, 1], [], []>} : vector<4x512xbf16>, vector<512x32xbf16>, vector<4x32xf32> -> vector<4x32xf32>
    %cst_35 = arith.constant 0.000000e+00 : f32
    %66 = vector.broadcast %cst_35 : f32 to vector<4x32xf32>
    %67 = arith.maximumf %65, %66 : vector<4x32xf32>
    %68 = arith.truncf %67 : vector<4x32xf32> to vector<4x32xbf16>
    %c0_36 = arith.constant 0 : index
    %c0_37 = arith.constant 0 : index
    %69 = vector.load %arg9[%c0_36, %c0_37] : memref<32x512xbf16, #tpu.memory_space<vmem>>, vector<32x512xbf16>
    %cst_38 = arith.constant dense<0.000000e+00> : vector<4x512xf32>
    %70 = tpu.matmul %68, %69, %cst_38 {dimension_numbers = #tpu.dot_dimension_numbers<[1], [0], [0], [1], [0, 0, 1, 1], [], []>} : vector<4x32xbf16>, vector<32x512xbf16>, vector<4x512xf32> -> vector<4x512xf32>
    %71 = arith.negf %70 : vector<4x512xf32>
    %72 = math.exp %71 : vector<4x512xf32>
    %cst_39 = arith.constant 1.000000e+00 : f32
    %73 = vector.broadcast %cst_39 : f32 to vector<4x512xf32>
    %74 = arith.addf %73, %72 : vector<4x512xf32>
    %75 = arith.divf %73, %74 : vector<4x512xf32>
    %76 = vector.shape_cast %52 : vector<512x512xf32> to vector<4x128x512xf32>
    %cst_40 = arith.constant 1.000000e+00 : f32
    %77 = vector.broadcast %cst_40 : f32 to vector<4x512xf32>
    %78 = arith.addf %75, %77 : vector<4x512xf32>
    %79 = vector.shape_cast %78 : vector<4x512xf32> to vector<4x1x512xf32>
    %80 = vector.broadcast %79 : vector<4x1x512xf32> to vector<4x128x512xf32>
    %81 = arith.mulf %76, %80 : vector<4x128x512xf32>
    %cst_41 = arith.constant 0.000000e+00 : f32
    %82 = vector.broadcast %cst_41 : f32 to vector<4x128x512xf32>
    %83 = arith.maximumf %81, %82 : vector<4x128x512xf32>
    %84 = arith.truncf %83 : vector<4x128x512xf32> to vector<4x128x512xbf16>
    %c0_42 = arith.constant 0 : index
    %c0_43 = arith.constant 0 : index
    %c0_44 = arith.constant 0 : index
    %85 = vector.load %arg10[%c0_42, %c0_43, %c0_44] : memref<4x128x512xbf16, #tpu.memory_space<vmem>>, vector<4x128x512xbf16>
    tpu.vector_store %arg10[%c0_42, %c0_43, %c0_44], %84 {strides = array<i32>} : memref<4x128x512xbf16, #tpu.memory_space<vmem>>, vector<4x128x512xbf16>,
    return
  }
  func.func @transform_0(%arg0: i32) -> (i32, i32, i32) {
    %c0_i32 = arith.constant 0 : i32
    %c0_i32_0 = arith.constant 0 : i32
    %c0_i32_1 = arith.constant 0 : i32
    return %arg0, %c0_i32, %c0_i32_0 : i32, i32, i32
  }
  func.func @transform_1(%arg0: i32) -> (i32, i32) {
    %c0_i32 = arith.constant 0 : i32
    %c0_i32_0 = arith.constant 0 : i32
    %c0_i32_1 = arith.constant 0 : i32
    return %c0_i32, %c0_i32_0 : i32, i32
  }
  func.func @transform_2(%arg0: i32) -> (i32, i32) {
    %c0_i32 = arith.constant 0 : i32
    %c0_i32_0 = arith.constant 0 : i32
    %c0_i32_1 = arith.constant 0 : i32
    return %c0_i32, %c0_i32_0 : i32, i32
  }
  func.func @transform_3(%arg0: i32) -> (i32, i32) {
    %c0_i32 = arith.constant 0 : i32
    %c0_i32_0 = arith.constant 0 : i32
    %c0_i32_1 = arith.constant 0 : i32
    return %c0_i32, %c0_i32_0 : i32, i32
  }
  func.func @transform_4(%arg0: i32) -> (i32, i32) {
    %c0_i32 = arith.constant 0 : i32
    %c0_i32_0 = arith.constant 0 : i32
    %c0_i32_1 = arith.constant 0 : i32
    return %c0_i32, %c0_i32_0 : i32, i32
  }
  func.func @transform_5(%arg0: i32) -> (i32, i32) {
    %c0_i32 = arith.constant 0 : i32
    %c0_i32_0 = arith.constant 0 : i32
    %c0_i32_1 = arith.constant 0 : i32
    return %c0_i32, %c0_i32_0 : i32, i32
  }
  func.func @transform_6(%arg0: i32) -> (i32, i32) {
    %c0_i32 = arith.constant 0 : i32
    %c0_i32_0 = arith.constant 0 : i32
    %c0_i32_1 = arith.constant 0 : i32
    return %c0_i32, %c0_i32_0 : i32, i32
  }
  func.func @transform_7(%arg0: i32) -> (i32, i32) {
    %c0_i32 = arith.constant 0 : i32
    %c0_i32_0 = arith.constant 0 : i32
    %c0_i32_1 = arith.constant 0 : i32
    return %c0_i32, %c0_i32_0 : i32, i32
  }
  func.func @transform_8(%arg0: i32) -> (i32, i32) {
    %c0_i32 = arith.constant 0 : i32
    %c0_i32_0 = arith.constant 0 : i32
    %c0_i32_1 = arith.constant 0 : i32
    return %c0_i32, %c0_i32_0 : i32, i32
  }
  func.func @transform_9(%arg0: i32) -> (i32, i32, i32) {
    %c0_i32 = arith.constant 0 : i32
    %c0_i32_0 = arith.constant 0 : i32
    %c0_i32_1 = arith.constant 0 : i32
    return %arg0, %c0_i32, %c0_i32_0 : i32, i32, i32
  }
}

</mosaic_0001>

<llo_original>
// kernel: tpu_custom_call.1
$region0: #{tpu_custom_call.1}
  #allocation0 [shape = 'u32[]', space=smem, size = 0x4, offset = 0x4, fixed_abs, tag = 'smem constant byte address 0x4 - core index']
  #allocation1 [shape = 'u32[144,128]{1,0:T(1,128)}', space=vmem, size = 0x12000, scoped, tag = 'internal scratch']
  %s0 = inlined_call_operand.hbm [shape: bf16[8,128,128], index: 0, kind: input, shape index: {}]
  %s1 = inlined_call_operand.vmem [shape: bf16[128,128], index: 1, kind: input, shape index: {}]
  %s2 = inlined_call_operand.vmem [shape: f32[1,128], index: 2, kind: input, shape index: {}]
  %s3 = inlined_call_operand.hbm [shape: bf16[384,128], index: 3, kind: input, shape index: {}]
  %s4 = inlined_call_operand.vmem [shape: f32[1,128], index: 4, kind: input, shape index: {}]
  %s5 = inlined_call_operand.vmem [shape: bf16[128,512], index: 5, kind: input, shape index: {}]
  %s6 = inlined_call_operand.vmem [shape: f32[1,512], index: 6, kind: input, shape index: {}]
  %s7 = inlined_call_operand.vmem [shape: bf16[512,32], index: 7, kind: input, shape index: {}]
  %s8 = inlined_call_operand.hbm [shape: bf16[32,512], index: 8, kind: input, shape index: {}]
  %s9 = inlined_call_operand.hbm [shape: bf16[8,128,512], index: 9, kind: output, shape index: {}]
  %s10 = sld [smem:[#allocation0]]
  $region81: #{tpu_custom_call.1} parent=0
    _
  %s12 = ssub.s32 1, %s10
  %s13 = scalar_select 0, %s12, %s10
  $region1: #{tpu_custom_call.1} parent=0
    #allocation2 [shape = 'u8[262144]{0}', space=vmem, size = 0x40000, scoped, tag = 'input window, operand 0']
    #allocation3 [shape = 's32[2]{0}', space=sflag, size = 0x8, scoped, tag = 'scoped memory for tpu_custom_call.1']
    #allocation4 [shape = 's32[2]{0}', space=sflag, size = 0x8, scoped, tag = 'scoped memory for tpu_custom_call.1']
    #allocation5 [shape = 'u8[98304]{0}', space=vmem, size = 0x18000, scoped, tag = 'input window, operand 3, single buffered']
    #allocation6 [shape = 's32[1]{0}', space=sflag, size = 0x4, scoped, tag = 'scoped memory for tpu_custom_call.1']
    #allocation7 [shape = 'u8[32768]{0}', space=vmem, size = 0x8000, scoped, tag = 'input window, operand 8, single buffered']
    #allocation8 [shape = 'u8[1048576]{0}', space=vmem, size = 0x100000, scoped, tag = 'output window, operand 0']
    %14 = vsyncpa [#allocation3], 0
    %s15 = scalar_lea.sflag [#allocation3], 1
    %16 = vsyncpa %s15, 0
    %17 = vsyncpa [#allocation6], 0
    %18 = vsyncpa [#allocation4], 0
    %s19 = scalar_lea.sflag [#allocation4], 1
    %20 = vsyncpa %s19, 0
    loop: start=0, step=1, limit=4
    $region2: #{tpu_custom_call.1} parent=1 // loop_pre_header
      _
    $region3: #{tpu_custom_call.1} parent=1 // loop_header
      %s22 = sphi 0, %s26
      %p23 = scmp.ge.s32.totalorder %s22, 4
      %s32 = sphi 0, %s34
      %s35 = sphi 0, %s32
      %s36 = sphi 0, %s35
      %s52 = sphi 0, %s36
      %s56 = sphi 0, %s56
      %s58 = sphi 0, %s56
      %s59 = sphi 0, %s58
      %s73 = sphi 0, %s59
      %s77 = sphi 0, %s77
      %s79 = sphi 0, %s77
      %s80 = sphi 0, %s79
      %s94 = sphi 0, %s80
      %s98 = sphi 0, %s98
      %s100 = sphi 0, %s98
      %s101 = sphi 0, %s100
      %s115 = sphi 0, %s101
      %s119 = sphi 0, %s119
      %s121 = sphi 0, %s119
      %s122 = sphi 0, %s121
      %s136 = sphi 0, %s122
      %s140 = sphi 0, %s140
      %s142 = sphi 0, %s140
      %s143 = sphi 0, %s142
      %s157 = sphi 0, %s143
      %s161 = sphi 0, %s161
      %s163 = sphi 0, %s161
      %s164 = sphi 0, %s163
      %s178 = sphi 0, %s164
      %s182 = sphi 0, %s182
      %s184 = sphi 0, %s182
      %s185 = sphi 0, %s184
      %s199 = sphi 0, %s185
      %s203 = sphi 0, %s203
      %s205 = sphi 0, %s203
      %s206 = sphi 0, %s205
      %s220 = sphi 0, %s206
      %s226 = sphi 0, %s228
      %s229 = sphi 0, %s226
      %s230 = sphi 0, %s229
      %s246 = sphi 0, %s230
    $region4: #{tpu_custom_call.1} parent=1 // loop_header_branch
      %25 = sbr.rel (%p23) target = $region8
    $region5: #{tpu_custom_call.1} parent=1 // loop_body
      %s27 = ssub.s32 %s22, 1
      %s28 = ssub.s32 %s22, 2
      %s29 = sadd.s32 %s22, 1
      %s30 = ssub.s32 %s22, %s29
      %p31 = scmp.eq.s32.totalorder %s30, 0
      %s33 = sadd.s32 %s32, 1
      %s34 = scalar_select %p31, %s32, %s33
      %p37 = pneg %p31
      %p38 = scmp.eq.s32.totalorder %s22, 1
      %p39 = por %p37, %p38
      %p40 = scmp.ne.s32.totalorder %s32, %s35
      %p41 = scmp.eq.s32.totalorder %s22, 0
      %p42 = por %p40, %p41
      %p43 = scmp.ne.s32.totalorder %s32, %s35
      %p44 = scmp.eq.s32.totalorder %s27, 1
      %p45 = por %p43, %p44
      %p46 = scmp.ne.s32.totalorder %s35, %s36
      %p47 = scmp.eq.s32.totalorder %s27, 0
      %p48 = por %p46, %p47
      %p49 = scmp.ne.s32.totalorder %s35, %s36
      %p50 = scmp.eq.s32.totalorder %s28, 1
      %p51 = por %p49, %p50
      %p53 = scmp.ne.s32.totalorder %s36, %s52
      %p54 = scmp.eq.s32.totalorder %s28, 0
      %p55 = por %p53, %p54
      %s57 = sadd.s32 %s56, 1
      %p60 = scmp.eq.s32.totalorder %s22, 1
      %p61 = scmp.ne.s32.totalorder %s56, %s58
      %p62 = scmp.eq.s32.totalorder %s22, 0
      %p63 = por %p61, %p62
      %p64 = scmp.ne.s32.totalorder %s56, %s58
      %p65 = scmp.eq.s32.totalorder %s27, 1
      %p66 = por %p64, %p65
      %p67 = scmp.ne.s32.totalorder %s58, %s59
      %p68 = scmp.eq.s32.totalorder %s27, 0
      %p69 = por %p67, %p68
      %p70 = scmp.ne.s32.totalorder %s58, %s59
      %p71 = scmp.eq.s32.totalorder %s28, 1
      %p72 = por %p70, %p71
      %p74 = scmp.ne.s32.totalorder %s59, %s73
      %p75 = scmp.eq.s32.totalorder %s28, 0
      %p76 = por %p74, %p75
      %s78 = sadd.s32 %s77, 1
      %p81 = scmp.eq.s32.totalorder %s22, 1
      %p82 = scmp.ne.s32.totalorder %s77, %s79
      %p83 = scmp.eq.s32.totalorder %s22, 0
      %p84 = por %p82, %p83
      %p85 = scmp.ne.s32.totalorder %s77, %s79
      %p86 = scmp.eq.s32.totalorder %s27, 1
      %p87 = por %p85, %p86
      %p88 = scmp.ne.s32.totalorder %s79, %s80
      %p89 = scmp.eq.s32.totalorder %s27, 0
      %p90 = por %p88, %p89
      %p91 = scmp.ne.s32.totalorder %s79, %s80
      %p92 = scmp.eq.s32.totalorder %s28, 1
      %p93 = por %p91, %p92
      %p95 = scmp.ne.s32.totalorder %s80, %s94
      %p96 = scmp.eq.s32.totalorder %s28, 0
      %p97 = por %p95, %p96
      %s99 = sadd.s32 %s98, 1
      %p102 = scmp.eq.s32.totalorder %s22, 1
      %p103 = scmp.ne.s32.totalorder %s98, %s100
      %p104 = scmp.eq.s32.totalorder %s22, 0
      %p105 = por %p103, %p104
      %p106 = scmp.ne.s32.totalorder %s98, %s100
      %p107 = scmp.eq.s32.totalorder %s27, 1
      %p108 = por %p106, %p107
      %p109 = scmp.ne.s32.totalorder %s100, %s101
      %p110 = scmp.eq.s32.totalorder %s27, 0
      %p111 = por %p109, %p110
      %p112 = scmp.ne.s32.totalorder %s100, %s101
      %p113 = scmp.eq.s32.totalorder %s28, 1
      %p114 = por %p112, %p113
      %p116 = scmp.ne.s32.totalorder %s101, %s115
      %p117 = scmp.eq.s32.totalorder %s28, 0
      %p118 = por %p116, %p117
      %s120 = sadd.s32 %s119, 1
      %p123 = scmp.eq.s32.totalorder %s22, 1
      %p124 = scmp.ne.s32.totalorder %s119, %s121
      %p125 = scmp.eq.s32.totalorder %s22, 0
      %p126 = por %p124, %p125
      %p127 = scmp.ne.s32.totalorder %s119, %s121
      %p128 = scmp.eq.s32.totalorder %s27, 1
      %p129 = por %p127, %p128
      %p130 = scmp.ne.s32.totalorder %s121, %s122
      %p131 = scmp.eq.s32.totalorder %s27, 0
      %p132 = por %p130, %p131
      %p133 = scmp.ne.s32.totalorder %s121, %s122
      %p134 = scmp.eq.s32.totalorder %s28, 1
      %p135 = por %p133, %p134
      %p137 = scmp.ne.s32.totalorder %s122, %s136
      %p138 = scmp.eq.s32.totalorder %s28, 0
      %p139 = por %p137, %p138
      %s141 = sadd.s32 %s140, 1
      %p144 = scmp.eq.s32.totalorder %s22, 1
      %p145 = scmp.ne.s32.totalorder %s140, %s142
      %p146 = scmp.eq.s32.totalorder %s22, 0
      %p147 = por %p145, %p146
      %p148 = scmp.ne.s32.totalorder %s140, %s142
      %p149 = scmp.eq.s32.totalorder %s27, 1
      %p150 = por %p148, %p149
      %p151 = scmp.ne.s32.totalorder %s142, %s143
      %p152 = scmp.eq.s32.totalorder %s27, 0
      %p153 = por %p151, %p152
      %p154 = scmp.ne.s32.totalorder %s142, %s143
      %p155 = scmp.eq.s32.totalorder %s28, 1
      %p156 = por %p154, %p155
      %p158 = scmp.ne.s32.totalorder %s143, %s157
      %p159 = scmp.eq.s32.totalorder %s28, 0
      %p160 = por %p158, %p159
      %s162 = sadd.s32 %s161, 1
      %p165 = scmp.eq.s32.totalorder %s22, 1
      %p166 = scmp.ne.s32.totalorder %s161, %s163
      %p167 = scmp.eq.s32.totalorder %s22, 0
      %p168 = por %p166, %p167
      %p169 = scmp.ne.s32.totalorder %s161, %s163
      %p170 = scmp.eq.s32.totalorder %s27, 1
      %p171 = por %p169, %p170
      %p172 = scmp.ne.s32.totalorder %s163, %s164
      %p173 = scmp.eq.s32.totalorder %s27, 0
      %p174 = por %p172, %p173
      %p175 = scmp.ne.s32.totalorder %s163, %s164
      %p176 = scmp.eq.s32.totalorder %s28, 1
      %p177 = por %p175, %p176
      %p179 = scmp.ne.s32.totalorder %s164, %s178
      %p180 = scmp.eq.s32.totalorder %s28, 0
      %p181 = por %p179, %p180
      %s183 = sadd.s32 %s182, 1
      %p186 = scmp.eq.s32.totalorder %s22, 1
      %p187 = scmp.ne.s32.totalorder %s182, %s184
      %p188 = scmp.eq.s32.totalorder %s22, 0
      %p189 = por %p187, %p188
      %p190 = scmp.ne.s32.totalorder %s182, %s184
      %p191 = scmp.eq.s32.totalorder %s27, 1
      %p192 = por %p190, %p191
      %p193 = scmp.ne.s32.totalorder %s184, %s185
      %p194 = scmp.eq.s32.totalorder %s27, 0
      %p195 = por %p193, %p194
      %p196 = scmp.ne.s32.totalorder %s184, %s185
      %p197 = scmp.eq.s32.totalorder %s28, 1
      %p198 = por %p196, %p197
      %p200 = scmp.ne.s32.totalorder %s185, %s199
      %p201 = scmp.eq.s32.totalorder %s28, 0
      %p202 = por %p200, %p201
      %s204 = sadd.s32 %s203, 1
      %p207 = scmp.eq.s32.totalorder %s22, 1
      %p208 = scmp.ne.s32.totalorder %s203, %s205
      %p209 = scmp.eq.s32.totalorder %s22, 0
      %p210 = por %p208, %p209
      %p211 = scmp.ne.s32.totalorder %s203, %s205
      %p212 = scmp.eq.s32.totalorder %s27, 1
      %p213 = por %p211, %p212
      %p214 = scmp.ne.s32.totalorder %s205, %s206
      %p215 = scmp.eq.s32.totalorder %s27, 0
      %p216 = por %p214, %p215
      %p217 = scmp.ne.s32.totalorder %s205, %s206
      %p218 = scmp.eq.s32.totalorder %s28, 1
      %p219 = por %p217, %p218
      %p221 = scmp.ne.s32.totalorder %s206, %s220
      %p222 = scmp.eq.s32.totalorder %s28, 0
      %p223 = por %p221, %p222
      %s224 = ssub.s32 %s22, %s29
      %p225 = scmp.eq.s32.totalorder %s224, 0
      %s227 = sadd.s32 %s226, 1
      %s228 = scalar_select %p225, %s226, %s227
      %p231 = pneg %p225
      %p232 = scmp.eq.s32.totalorder %s22, 1
      %p233 = por %p231, %p232
      %p234 = scmp.ne.s32.totalorder %s226, %s229
      %p235 = scmp.eq.s32.totalorder %s22, 0
      %p236 = por %p234, %p235
      %p237 = scmp.ne.s32.totalorder %s226, %s229
      %p238 = scmp.eq.s32.totalorder %s27, 1
      %p239 = por %p237, %p238
      %p240 = scmp.ne.s32.totalorder %s229, %s230
      %p241 = scmp.eq.s32.totalorder %s27, 0
      %p242 = por %p240, %p241
      %p243 = scmp.ne.s32.totalorder %s229, %s230
      %p244 = scmp.eq.s32.totalorder %s28, 1
      %p245 = por %p243, %p244
      %p247 = scmp.ne.s32.totalorder %s230, %s246
      %p248 = scmp.eq.s32.totalorder %s28, 0
      %p249 = por %p247, %p248
      %p250 = scmp.le.s32.totalorder 1, %s22
      %p251 = scmp.lt.s32.totalorder %s22, 3
      %p252 = pnand %p250, %p251
      %p253 = pneg %p252
      // Predicated region
      $region9: #{tpu_custom_call.1} parent=5 // pred_check
        _
      $region10: #{tpu_custom_call.1} parent=5 // pred_check_branch
        %255 = sbr.rel (%p252) target = $region12
      $region11: #{tpu_custom_call.1} parent=5 // pred_region
        %s256 = ssub.s32 %s22, 1
        // Predicated region
        $region13: #{tpu_custom_call.1} parent=11 // pred_check
          %p257 = pneg %p69
        $region14: #{tpu_custom_call.1} parent=11 // pred_check_branch
          %259 = sbr.rel (%p257) target = $region16
        $region15: #{tpu_custom_call.1} parent=11 // pred_region
          _
        $region16: #{tpu_custom_call.1} parent=11 // pred_fallthru
          _
        // Predicated region
        $region17: #{tpu_custom_call.1} parent=11 // pred_check
          %p260 = pneg %p90
        $region18: #{tpu_custom_call.1} parent=11 // pred_check_branch
          %262 = sbr.rel (%p260) target = $region20
        $region19: #{tpu_custom_call.1} parent=11 // pred_region
          _
        $region20: #{tpu_custom_call.1} parent=11 // pred_fallthru
          _
        // Predicated region
        $region21: #{tpu_custom_call.1} parent=11 // pred_check
          %p263 = pneg %p111
        $region22: #{tpu_custom_call.1} parent=11 // pred_check_branch
          %265 = sbr.rel (%p263) target = $region24
        $region23: #{tpu_custom_call.1} parent=11 // pred_region
          %s267 = ssub.s32 3072, 3072
          %268 = vsyncadd [#allocation6], %s267
          %s269 = sshll.u32 [#allocation5], 4
          %s270 = int_to_ptr.vmem [resolvable:$true] %s269
          %275 = dma.hbm_to_vmem [thread:$0]  %s3, 3072, %s270, [#allocation6], 64, 64, 4
        $region24: #{tpu_custom_call.1} parent=11 // pred_fallthru
          _
        // Predicated region
        $region25: #{tpu_custom_call.1} parent=11 // pred_check
          %p276 = pneg %p132
        $region26: #{tpu_custom_call.1} parent=11 // pred_check_branch
          %278 = sbr.rel (%p276) target = $region28
        $region27: #{tpu_custom_call.1} parent=11 // pred_region
          _
        $region28: #{tpu_custom_call.1} parent=11 // pred_fallthru
          _
        // Predicated region
        $region29: #{tpu_custom_call.1} parent=11 // pred_check
          %p279 = pneg %p153
        $region30: #{tpu_custom_call.1} parent=11 // pred_check_branch
          %281 = sbr.rel (%p279) target = $region32
        $region31: #{tpu_custom_call.1} parent=11 // pred_region
          _
        $region32: #{tpu_custom_call.1} parent=11 // pred_fallthru
          _
        // Predicated region
        $region33: #{tpu_custom_call.1} parent=11 // pred_check
          %p282 = pneg %p174
        $region34: #{tpu_custom_call.1} parent=11 // pred_check_branch
          %284 = sbr.rel (%p282) target = $region36
        $region35: #{tpu_custom_call.1} parent=11 // pred_region
          _
        $region36: #{tpu_custom_call.1} parent=11 // pred_fallthru
          _
        // Predicated region
        $region37: #{tpu_custom_call.1} parent=11 // pred_check
          %p285 = pneg %p195
        $region38: #{tpu_custom_call.1} parent=11 // pred_check_branch
          %287 = sbr.rel (%p285) target = $region40
        $region39: #{tpu_custom_call.1} parent=11 // pred_region
          _
        $region40: #{tpu_custom_call.1} parent=11 // pred_fallthru
          _
        // Predicated region
        $region41: #{tpu_custom_call.1} parent=11 // pred_check
          %p288 = pneg %p216
        $region42: #{tpu_custom_call.1} parent=11 // pred_check_branch
          %290 = sbr.rel (%p288) target = $region44
        $region43: #{tpu_custom_call.1} parent=11 // pred_region
          %s292 = ssub.s32 1024, 1024
          %293 = vsyncadd [#allocation6], %s292
          %s294 = sshll.u32 [#allocation7], 4
          %s295 = int_to_ptr.vmem [resolvable:$true] %s294
          %300 = dma.hbm_to_vmem [thread:$0]  %s8, 1024, %s295, [#allocation6], 256, 256, 16
        $region44: #{tpu_custom_call.1} parent=11 // pred_fallthru
          _
      $region12: #{tpu_custom_call.1} parent=5 // pred_fallthru
        _
      %p301 = scmp.lt.s32.totalorder %s22, 2
      // Predicated region
      $region45: #{tpu_custom_call.1} parent=5 // pred_check
        %p302 = pneg %p301
      $region46: #{tpu_custom_call.1} parent=5 // pred_check_branch
        %304 = sbr.rel (%p302) target = $region48
      $region47: #{tpu_custom_call.1} parent=5 // pred_region
        // Predicated region
        $region49: #{tpu_custom_call.1} parent=47 // pred_check
          %p305 = pneg %p42
        $region50: #{tpu_custom_call.1} parent=47 // pred_check_branch
          %307 = sbr.rel (%p305) target = $region52
        $region51: #{tpu_custom_call.1} parent=47 // pred_region
          %s308 = sand.u32 %s32, 1
          %s309 = scalar_lea.sflag [#allocation3], %s308
          %s310 = sand.u32 %s32, 1
          %s311 = smul.addr %s310, 256
          %s312 = scalar_lea.vmem [#allocation2], %s311
          %s313 = smul.u32 4, %s22
          %s315 = ssub.s32 4096, 4096
          %316 = vsyncadd %s309, %s315
          %s317 = smul.addr %s313, 16
          %s318 = smul.addr %s317, 64
          %s319 = scalar_lea.hbm %s0, %s318
          %s320 = sshll.u32 %s312, 4
          %s321 = int_to_ptr.vmem [resolvable:$true] %s320
          %326 = dma.hbm_to_vmem [thread:$0]  %s319, 4096, %s321, %s309, 64, 64, 4
        $region52: #{tpu_custom_call.1} parent=47 // pred_fallthru
          _
      $region48: #{tpu_custom_call.1} parent=5 // pred_fallthru
        _
      %p327 = scmp.le.s32.totalorder 1, %s22
      %p328 = scmp.lt.s32.totalorder %s22, 3
      %p329 = pnand %p327, %p328
      %p330 = pneg %p329
      // Predicated region
      $region53: #{tpu_custom_call.1} parent=5 // pred_check
        _
      $region54: #{tpu_custom_call.1} parent=5 // pred_check_branch
        %332 = sbr.rel (%p329) target = $region56
      $region55: #{tpu_custom_call.1} parent=5 // pred_region
        %s333 = ssub.s32 %s22, 1
        %s334 = sand.u32 %s35, 1
        %s335 = scalar_lea.sflag [#allocation3], %s334
        %s336 = sand.u32 %s35, 1
        %s337 = smul.addr %s336, 256
        %s338 = scalar_lea.vmem [#allocation2], %s337
        // Predicated region
        $region57: #{tpu_custom_call.1} parent=55 // pred_check
          %p339 = pneg %p48
        $region58: #{tpu_custom_call.1} parent=55 // pred_check_branch
          %341 = sbr.rel (%p339) target = $region60
        $region59: #{tpu_custom_call.1} parent=55 // pred_region
          %342 = dma.done %s335, 4096
        $region60: #{tpu_custom_call.1} parent=55 // pred_fallthru
          _
        // Predicated region
        $region61: #{tpu_custom_call.1} parent=55 // pred_check
          %p343 = pneg %p111
        $region62: #{tpu_custom_call.1} parent=55 // pred_check_branch
          %345 = sbr.rel (%p343) target = $region64
        $region63: #{tpu_custom_call.1} parent=55 // pred_region
          %346 = dma.done [#allocation6], 3072
        $region64: #{tpu_custom_call.1} parent=55 // pred_fallthru
          _
        // Predicated region
        $region65: #{tpu_custom_call.1} parent=55 // pred_check
          %p347 = pneg %p216
        $region66: #{tpu_custom_call.1} parent=55 // pred_check_branch
          %349 = sbr.rel (%p347) target = $region68
        $region67: #{tpu_custom_call.1} parent=55 // pred_region
          %350 = dma.done [#allocation6], 1024
        $region68: #{tpu_custom_call.1} parent=55 // pred_fallthru
          _
        %s351 = sand.u32 %s35, 1
        %s352 = scalar_lea.sflag [#allocation3], %s351
        %s353 = sand.u32 %s35, 1
        %s354 = smul.addr %s353, 256
        %s355 = scalar_lea.vmem [#allocation2], %s354
        %p356 = pneg %p48
        %p357 = pneg %p45
        %p358 = pneg %p69
        %p359 = pneg %p66
        %p360 = pneg %p90
        %p361 = pneg %p87
        %p362 = pneg %p111
        %p363 = pneg %p108
        %p364 = pneg %p132
        %p365 = pneg %p129
        %p366 = pneg %p153
        %p367 = pneg %p150
        %p368 = pneg %p174
        %p369 = pneg %p171
        %p370 = pneg %p195
        %p371 = pneg %p192
        %p372 = pneg %p216
        %p373 = pneg %p213
        %p374 = pneg %p242
        %p375 = pneg %p239
        %s376 = sand.u32 %s229, 1
        %s377 = scalar_lea.sflag [#allocation4], %s376
        %s378 = sand.u32 %s229, 1
        %s379 = smul.addr %s378, 1024
        %s380 = scalar_lea.vmem [#allocation8], %s379
        %s381 = smul.u32 4, %s27
        %s382 = smul.u32 4, %s27
        %v384 = vld [vmem:[%s338] sm:$0xf]
        %v385 = vld [vmem:[%s338 + $0x4] sm:$0xf]
        %v386 = vld [vmem:[%s338 + $0x8] sm:$0xf]
        %v387 = vld [vmem:[%s338 + $0xc] sm:$0xf]
        %v388 = vld [vmem:[%s338 + $0x10] sm:$0xf]
        %v389 = vld [vmem:[%s338 + $0x14] sm:$0xf]
        %v390 = vld [vmem:[%s338 + $0x18] sm:$0xf]
        %v391 = vld [vmem:[%s338 + $0x1c] sm:$0xf]
        %v392 = vld [vmem:[%s338 + $0x20] sm:$0xf]
        %v393 = vld [vmem:[%s338 + $0x24] sm:$0xf]
        %v394 = vld [vmem:[%s338 + $0x28] sm:$0xf]
        %v395 = vld [vmem:[%s338 + $0x2c] sm:$0xf]
        %v396 = vld [vmem:[%s338 + $0x30] sm:$0xf]
        %v397 = vld [vmem:[%s338 + $0x34] sm:$0xf]
        %v398 = vld [vmem:[%s338 + $0x38] sm:$0xf]
        %v399 = vld [vmem:[%s338 + $0x3c] sm:$0xf]
        %v400 = vld [vmem:[%s338 + $0x40] sm:$0xf]
        %v401 = vld [vmem:[%s338 + $0x44] sm:$0xf]
        %v402 = vld [vmem:[%s338 + $0x48] sm:$0xf]
        %v403 = vld [vmem:[%s338 + $0x4c] sm:$0xf]
        %v404 = vld [vmem:[%s338 + $0x50] sm:$0xf]
        %v405 = vld [vmem:[%s338 + $0x54] sm:$0xf]
        %v406 = vld [vmem:[%s338 + $0x58] sm:$0xf]
        %v407 = vld [vmem:[%s338 + $0x5c] sm:$0xf]
        %v408 = vld [vmem:[%s338 + $0x60] sm:$0xf]
        %v409 = vld [vmem:[%s338 + $0x64] sm:$0xf]
        %v410 = vld [vmem:[%s338 + $0x68] sm:$0xf]
        %v411 = vld [vmem:[%s338 + $0x6c] sm:$0xf]
        %v412 = vld [vmem:[%s338 + $0x70] sm:$0xf]
        %v413 = vld [vmem:[%s338 + $0x74] sm:$0xf]
        %v414 = vld [vmem:[%s338 + $0x78] sm:$0xf]
        %v415 = vld [vmem:[%s338 + $0x7c] sm:$0xf]
        %v416 = vld [vmem:[%s338 + $0x80] sm:$0xf]
        %v417 = vld [vmem:[%s338 + $0x84] sm:$0xf]
        %v418 = vld [vmem:[%s338 + $0x88] sm:$0xf]
        %v419 = vld [vmem:[%s338 + $0x8c] sm:$0xf]
        %v420 = vld [vmem:[%s338 + $0x90] sm:$0xf]
        %v421 = vld [vmem:[%s338 + $0x94] sm:$0xf]
        %v422 = vld [vmem:[%s338 + $0x98] sm:$0xf]
        %v423 = vld [vmem:[%s338 + $0x9c] sm:$0xf]
        %v424 = vld [vmem:[%s338 + $0xa0] sm:$0xf]
        %v425 = vld [vmem:[%s338 + $0xa4] sm:$0xf]
        %v426 = vld [vmem:[%s338 + $0xa8] sm:$0xf]
        %v427 = vld [vmem:[%s338 + $0xac] sm:$0xf]
        %v428 = vld [vmem:[%s338 + $0xb0] sm:$0xf]
        %v429 = vld [vmem:[%s338 + $0xb4] sm:$0xf]
        %v430 = vld [vmem:[%s338 + $0xb8] sm:$0xf]
        %v431 = vld [vmem:[%s338 + $0xbc] sm:$0xf]
        %v432 = vld [vmem:[%s338 + $0xc0] sm:$0xf]
        %v433 = vld [vmem:[%s338 + $0xc4] sm:$0xf]
        %v434 = vld [vmem:[%s338 + $0xc8] sm:$0xf]
        %v435 = vld [vmem:[%s338 + $0xcc] sm:$0xf]
        %v436 = vld [vmem:[%s338 + $0xd0] sm:$0xf]
        %v437 = vld [vmem:[%s338 + $0xd4] sm:$0xf]
        %v438 = vld [vmem:[%s338 + $0xd8] sm:$0xf]
        %v439 = vld [vmem:[%s338 + $0xdc] sm:$0xf]
        %v440 = vld [vmem:[%s338 + $0xe0] sm:$0xf]
        %v441 = vld [vmem:[%s338 + $0xe4] sm:$0xf]
        %v442 = vld [vmem:[%s338 + $0xe8] sm:$0xf]
        %v443 = vld [vmem:[%s338 + $0xec] sm:$0xf]
        %v444 = vld [vmem:[%s338 + $0xf0] sm:$0xf]
        %v445 = vld [vmem:[%s338 + $0xf4] sm:$0xf]
        %v446 = vld [vmem:[%s338 + $0xf8] sm:$0xf]
        %v447 = vld [vmem:[%s338 + $0xfc] sm:$0xf]
        %v448 = vld [vmem:[%s1] sm:$0xf]
        %v449 = vld [vmem:[%s1 + $0x4] sm:$0xf]
        %v450 = vld [vmem:[%s1 + $0x8] sm:$0xf]
        %v451 = vld [vmem:[%s1 + $0xc] sm:$0xf]
        %v452 = vld [vmem:[%s1 + $0x10] sm:$0xf]
        %v453 = vld [vmem:[%s1 + $0x14] sm:$0xf]
        %v454 = vld [vmem:[%s1 + $0x18] sm:$0xf]
        %v455 = vld [vmem:[%s1 + $0x1c] sm:$0xf]
        %v456 = vld [vmem:[%s1 + $0x20] sm:$0xf]
        %v457 = vld [vmem:[%s1 + $0x24] sm:$0xf]
        %v458 = vld [vmem:[%s1 + $0x28] sm:$0xf]
        %v459 = vld [vmem:[%s1 + $0x2c] sm:$0xf]
        %v460 = vld [vmem:[%s1 + $0x30] sm:$0xf]
        %v461 = vld [vmem:[%s1 + $0x34] sm:$0xf]
        %v462 = vld [vmem:[%s1 + $0x38] sm:$0xf]
        %v463 = vld [vmem:[%s1 + $0x3c] sm:$0xf]
        %v464 = vld [vmem:[%s2] sm:$0x1]
        %v466 = vlaneseq
        %v467 = vshrl.u32 %v466, 7
        %v468 = vsub.s32 0, %v467
        %v469 = vrot.slane %v464, %v468
        %v535 = vunpack.c.l.b16 %v384
        %v536 = vunpack.c.l.b16 %v385
        %v537 = vunpack.c.l.b16 %v386
        %v538 = vunpack.c.l.b16 %v387
        %v539 = vunpack.c.l.b16 %v388
        %v540 = vunpack.c.l.b16 %v389
        %v541 = vunpack.c.l.b16 %v390
        %v542 = vunpack.c.l.b16 %v391
        %v543 = vunpack.c.l.b16 %v392
        %v544 = vunpack.c.l.b16 %v393
        %v545 = vunpack.c.l.b16 %v394
        %v546 = vunpack.c.l.b16 %v395
        %v547 = vunpack.c.l.b16 %v396
        %v548 = vunpack.c.l.b16 %v397
        %v549 = vunpack.c.l.b16 %v398
        %v550 = vunpack.c.l.b16 %v399
        %v551 = vunpack.c.l.b16 %v400
        %v552 = vunpack.c.l.b16 %v401
        %v553 = vunpack.c.l.b16 %v402
        %v554 = vunpack.c.l.b16 %v403
        %v555 = vunpack.c.l.b16 %v404
        %v556 = vunpack.c.l.b16 %v405
        %v557 = vunpack.c.l.b16 %v406
        %v558 = vunpack.c.l.b16 %v407
        %v559 = vunpack.c.l.b16 %v408
        %v560 = vunpack.c.l.b16 %v409
        %v561 = vunpack.c.l.b16 %v410
        %v562 = vunpack.c.l.b16 %v411
        %v563 = vunpack.c.l.b16 %v412
        %v564 = vunpack.c.l.b16 %v413
        %v565 = vunpack.c.l.b16 %v414
        %v566 = vunpack.c.l.b16 %v415
        %v567 = vunpack.c.l.b16 %v416
        %v568 = vunpack.c.l.b16 %v417
        %v569 = vunpack.c.l.b16 %v418
        %v570 = vunpack.c.l.b16 %v419
        %v571 = vunpack.c.l.b16 %v420
        %v572 = vunpack.c.l.b16 %v421
        %v573 = vunpack.c.l.b16 %v422
        %v574 = vunpack.c.l.b16 %v423
        %v575 = vunpack.c.l.b16 %v424
        %v576 = vunpack.c.l.b16 %v425
        %v577 = vunpack.c.l.b16 %v426
        %v578 = vunpack.c.l.b16 %v427
        %v579 = vunpack.c.l.b16 %v428
        %v580 = vunpack.c.l.b16 %v429
        %v581 = vunpack.c.l.b16 %v430
        %v582 = vunpack.c.l.b16 %v431
        %v583 = vunpack.c.l.b16 %v432
        %v584 = vunpack.c.l.b16 %v433
        %v585 = vunpack.c.l.b16 %v434
        %v586 = vunpack.c.l.b16 %v435
        %v587 = vunpack.c.l.b16 %v436
        %v588 = vunpack.c.l.b16 %v437
        %v589 = vunpack.c.l.b16 %v438
        %v590 = vunpack.c.l.b16 %v439
        %v591 = vunpack.c.l.b16 %v440
        %v592 = vunpack.c.l.b16 %v441
        %v593 = vunpack.c.l.b16 %v442
        %v594 = vunpack.c.l.b16 %v443
        %v595 = vunpack.c.l.b16 %v444
        %v596 = vunpack.c.l.b16 %v445
        %v597 = vunpack.c.l.b16 %v446
        %v598 = vunpack.c.l.b16 %v447
        %v599 = vpack.c.b16 %v536, %v535
        %v600 = vpack.c.b16 %v538, %v537
        %v601 = vpack.c.b16 %v540, %v539
        %v602 = vpack.c.b16 %v542, %v541
        %v603 = vpack.c.b16 %v544, %v543
        %v604 = vpack.c.b16 %v546, %v545
        %v605 = vpack.c.b16 %v548, %v547
        %v606 = vpack.c.b16 %v550, %v549
        %v607 = vpack.c.b16 %v552, %v551
        %v608 = vpack.c.b16 %v554, %v553
        %v609 = vpack.c.b16 %v556, %v555
        %v610 = vpack.c.b16 %v558, %v557
        %v611 = vpack.c.b16 %v560, %v559
        %v612 = vpack.c.b16 %v562, %v561
        %v613 = vpack.c.b16 %v564, %v563
        %v614 = vpack.c.b16 %v566, %v565
        %v615 = vpack.c.b16 %v568, %v567
        %v616 = vpack.c.b16 %v570, %v569
        %v617 = vpack.c.b16 %v572, %v571
        %v618 = vpack.c.b16 %v574, %v573
        %v619 = vpack.c.b16 %v576, %v575
        %v620 = vpack.c.b16 %v578, %v577
        %v621 = vpack.c.b16 %v580, %v579
        %v622 = vpack.c.b16 %v582, %v581
        %v623 = vpack.c.b16 %v584, %v583
        %v624 = vpack.c.b16 %v586, %v585
        %v625 = vpack.c.b16 %v588, %v587
        %v626 = vpack.c.b16 %v590, %v589
        %v627 = vpack.c.b16 %v592, %v591
        %v628 = vpack.c.b16 %v594, %v593
        %v629 = vpack.c.b16 %v596, %v595
        %v630 = vpack.c.b16 %v598, %v597
        %v679 = vunpack.c.l.b16 %v448
        %v680 = vunpack.c.l.b16 %v449
        %v681 = vunpack.c.l.b16 %v450
        %v682 = vunpack.c.l.b16 %v451
        %v683 = vunpack.c.l.b16 %v452
        %v684 = vunpack.c.l.b16 %v453
        %v685 = vunpack.c.l.b16 %v454
        %v686 = vunpack.c.l.b16 %v455
        %v687 = vunpack.c.l.b16 %v456
        %v688 = vunpack.c.l.b16 %v457
        %v689 = vunpack.c.l.b16 %v458
        %v690 = vunpack.c.l.b16 %v459
        %v691 = vunpack.c.l.b16 %v460
        %v692 = vunpack.c.l.b16 %v461
        %v693 = vunpack.c.l.b16 %v462
        %v694 = vunpack.c.l.b16 %v463
        %v695 = vpack.c.b16 %v680, %v679
        %v696 = vpack.c.b16 %v682, %v681
        %v697 = vpack.c.b16 %v684, %v683
        %v698 = vpack.c.b16 %v686, %v685
        %v699 = vpack.c.b16 %v688, %v687
        %v700 = vpack.c.b16 %v690, %v689
        %v701 = vpack.c.b16 %v692, %v691
        %v702 = vpack.c.b16 %v694, %v693
        %711 = vmatprep.subr.bf16.mxu0 0
        %712 = vmatpush1.bf16.msra.mxu0 %v695
        %713 = vmatprep.subr.bf16.mxu0 0
        %714 = vmatpush1.bf16.msra.mxu0 %v696
        %715 = vmatprep.subr.bf16.mxu0 0
        %716 = vmatpush1.bf16.msra.mxu0 %v697
        %717 = vmatprep.subr.bf16.mxu0 0
        %718 = vmatpush1.bf16.msra.mxu0 %v698
        %719 = vmatprep.subr.bf16.mxu0 0
        %720 = vmatpush1.bf16.msra.mxu0 %v699
        %721 = vmatprep.subr.bf16.mxu0 0
        %722 = vmatpush1.bf16.msra.mxu0 %v700
        %723 = vmatprep.subr.bf16.mxu0 0
        %724 = vmatpush1.bf16.msra.mxu0 %v701
        %725 = vmatprep.subr.bf16.mxu0 0
        %726 = vmatpush1.bf16.msra.mxu0 %v702
        %727 = vmatprep.subr.bf16.mxu0 0
        %728 = vmatpush1.bf16.msra.mxu0 0
        %729 = vmatprep.subr.bf16.mxu0 0
        %730 = vmatpush1.bf16.msra.mxu0 0
        %731 = vmatprep.subr.bf16.mxu0 0
        %732 = vmatpush1.bf16.msra.mxu0 0
        %733 = vmatprep.subr.bf16.mxu0 0
        %734 = vmatpush1.bf16.msra.mxu0 0
        %735 = vmatprep.subr.bf16.mxu0 0
        %736 = vmatpush1.bf16.msra.mxu0 0
        %737 = vmatprep.subr.bf16.mxu0 0
        %738 = vmatpush1.bf16.msra.mxu0 0
        %739 = vmatprep.subr.bf16.mxu0 0
        %740 = vmatpush1.bf16.msra.mxu0 0
        %741 = vmatprep.subr.bf16.mxu0 0
        %742 = vmatpush1.bf16.msra.mxu0 0
        %743 = vmatprep.mubr.bf16.mxu0 0
        %744 = vmatmul.mubr.bf16.gmra.mrb[0].mxu0 %v599
        %v745 = vpop.f32.mrb[0].mxu0
        %v746 = vadd.f32 %v469, %v745
        %v747 = vpop.f32.mrb[0].mxu0
        %v748 = vpop.f32.mrb[0].mxu0
        %v749 = vadd.f32 %v469, %v748
        %v750 = vpop.f32.mrb[0].mxu0
        %751 = vmatprep.mubr.bf16.mxu0 0
        %752 = vmatmul.mubr.bf16.gmra.mrb[0].mxu0 %v600
        %v753 = vpop.f32.mrb[0].mxu0
        %v754 = vadd.f32 %v469, %v753
        %v755 = vpop.f32.mrb[0].mxu0
        %v756 = vpop.f32.mrb[0].mxu0
        %v757 = vadd.f32 %v469, %v756
        %v758 = vpop.f32.mrb[0].mxu0
        %759 = vmatprep.mubr.bf16.mxu0 0
        %760 = vmatmul.mubr.bf16.gmra.mrb[0].mxu0 %v601
        %v761 = vpop.f32.mrb[0].mxu0
        %v762 = vadd.f32 %v469, %v761
        %v763 = vpop.f32.mrb[0].mxu0
        %v764 = vpop.f32.mrb[0].mxu0
        %v765 = vadd.f32 %v469, %v764
        %v766 = vpop.f32.mrb[0].mxu0
        %767 = vmatprep.mubr.bf16.mxu0 0
        %768 = vmatmul.mubr.bf16.gmra.mrb[0].mxu0 %v602
        %v769 = vpop.f32.mrb[0].mxu0
        %v770 = vadd.f32 %v469, %v769
        %v771 = vpop.f32.mrb[0].mxu0
        %v772 = vpop.f32.mrb[0].mxu0
        %v773 = vadd.f32 %v469, %v772
        %v774 = vpop.f32.mrb[0].mxu0
        %775 = vmatprep.mubr.bf16.mxu0 0
        %776 = vmatmul.mubr.bf16.gmra.mrb[0].mxu0 %v603
        %v777 = vpop.f32.mrb[0].mxu0
        %v778 = vadd.f32 %v469, %v777
        %v779 = vpop.f32.mrb[0].mxu0
        %v780 = vpop.f32.mrb[0].mxu0
        %v781 = vadd.f32 %v469, %v780
        %v782 = vpop.f32.mrb[0].mxu0
        %783 = vmatprep.mubr.bf16.mxu0 0
        %784 = vmatmul.mubr.bf16.gmra.mrb[0].mxu0 %v604
        %v785 = vpop.f32.mrb[0].mxu0
        %v786 = vadd.f32 %v469, %v785
        %v787 = vpop.f32.mrb[0].mxu0
        %v788 = vpop.f32.mrb[0].mxu0
        %v789 = vadd.f32 %v469, %v788
        %v790 = vpop.f32.mrb[0].mxu0
        %791 = vmatprep.mubr.bf16.mxu0 0
        %792 = vmatmul.mubr.bf16.gmra.mrb[0].mxu0 %v605
        %v793 = vpop.f32.mrb[0].mxu0
        %v794 = vadd.f32 %v469, %v793
        %v795 = vpop.f32.mrb[0].mxu0
        %v796 = vpop.f32.mrb[0].mxu0
        %v797 = vadd.f32 %v469, %v796
        %v798 = vpop.f32.mrb[0].mxu0
        %799 = vmatprep.mubr.bf16.mxu0 0
        %800 = vmatmul.mubr.bf16.gmra.mrb[0].mxu0 %v606
        %v801 = vpop.f32.mrb[0].mxu0
        %v802 = vadd.f32 %v469, %v801
        %v803 = vpop.f32.mrb[0].mxu0
        %v804 = vpop.f32.mrb[0].mxu0
        %v805 = vadd.f32 %v469, %v804
        %v806 = vpop.f32.mrb[0].mxu0
        %807 = vmatprep.mubr.bf16.mxu0 0
        %808 = vmatmul.mubr.bf16.gmra.mrb[0].mxu0 %v607
        %v809 = vpop.f32.mrb[0].mxu0
        %v810 = vadd.f32 %v469, %v809
        %v811 = vpop.f32.mrb[0].mxu0
        %v812 = vpop.f32.mrb[0].mxu0
        %v813 = vadd.f32 %v469, %v812
        %v814 = vpop.f32.mrb[0].mxu0
        %815 = vmatprep.mubr.bf16.mxu0 0
        %816 = vmatmul.mubr.bf16.gmra.mrb[0].mxu0 %v608
        %v817 = vpop.f32.mrb[0].mxu0
        %v818 = vadd.f32 %v469, %v817
        %v819 = vpop.f32.mrb[0].mxu0
        %v820 = vpop.f32.mrb[0].mxu0
        %v821 = vadd.f32 %v469, %v820
        %v822 = vpop.f32.mrb[0].mxu0
        %823 = vmatprep.mubr.bf16.mxu0 0
        %824 = vmatmul.mubr.bf16.gmra.mrb[0].mxu0 %v609
        %v825 = vpop.f32.mrb[0].mxu0
        %v826 = vadd.f32 %v469, %v825
        %v827 = vpop.f32.mrb[0].mxu0
        %v828 = vpop.f32.mrb[0].mxu0
        %v829 = vadd.f32 %v469, %v828
        %v830 = vpop.f32.mrb[0].mxu0
        %831 = vmatprep.mubr.bf16.mxu0 0
        %832 = vmatmul.mubr.bf16.gmra.mrb[0].mxu0 %v610
        %v833 = vpop.f32.mrb[0].mxu0
        %v834 = vadd.f32 %v469, %v833
        %v835 = vpop.f32.mrb[0].mxu0
        %v836 = vpop.f32.mrb[0].mxu0
        %v837 = vadd.f32 %v469, %v836
        %v838 = vpop.f32.mrb[0].mxu0
        %839 = vmatprep.mubr.bf16.mxu0 0
        %840 = vmatmul.mubr.bf16.gmra.mrb[0].mxu0 %v611
        %v841 = vpop.f32.mrb[0].mxu0
        %v842 = vadd.f32 %v469, %v841
        %v843 = vpop.f32.mrb[0].mxu0
        %v844 = vpop.f32.mrb[0].mxu0
        %v845 = vadd.f32 %v469, %v844
        %v846 = vpop.f32.mrb[0].mxu0
        %847 = vmatprep.mubr.bf16.mxu0 0
        %848 = vmatmul.mubr.bf16.gmra.mrb[0].mxu0 %v612
        %v849 = vpop.f32.mrb[0].mxu0
        %v850 = vadd.f32 %v469, %v849
        %v851 = vpop.f32.mrb[0].mxu0
        %v852 = vpop.f32.mrb[0].mxu0
        %v853 = vadd.f32 %v469, %v852
        %v854 = vpop.f32.mrb[0].mxu0
        %855 = vmatprep.mubr.bf16.mxu0 0
        %856 = vmatmul.mubr.bf16.gmra.mrb[0].mxu0 %v613
        %v857 = vpop.f32.mrb[0].mxu0
        %v858 = vadd.f32 %v469, %v857
        %v859 = vpop.f32.mrb[0].mxu0
        %v860 = vpop.f32.mrb[0].mxu0
        %v861 = vadd.f32 %v469, %v860
        %v862 = vpop.f32.mrb[0].mxu0
        %863 = vmatprep.mubr.bf16.mxu0 0
        %864 = vmatmul.mubr.bf16.gmra.mrb[0].mxu0 %v614
        %v865 = vpop.f32.mrb[0].mxu0
        %v866 = vadd.f32 %v469, %v865
        %v867 = vpop.f32.mrb[0].mxu0
        %v868 = vpop.f32.mrb[0].mxu0
        %v869 = vadd.f32 %v469, %v868
        %v870 = vpop.f32.mrb[0].mxu0
        %871 = vmatprep.mubr.bf16.mxu0 0
        %872 = vmatmul.mubr.bf16.gmra.mrb[0].mxu0 %v615
        %v873 = vpop.f32.mrb[0].mxu0
        %v874 = vadd.f32 %v469, %v873
        %v875 = vpop.f32.mrb[0].mxu0
        %v876 = vpop.f32.mrb[0].mxu0
        %v877 = vadd.f32 %v469, %v876
        %v878 = vpop.f32.mrb[0].mxu0
        %879 = vmatprep.mubr.bf16.mxu0 0
        %880 = vmatmul.mubr.bf16.gmra.mrb[0].mxu0 %v616
        %v881 = vpop.f32.mrb[0].mxu0
        %v882 = vadd.f32 %v469, %v881
        %v883 = vpop.f32.mrb[0].mxu0
        %v884 = vpop.f32.mrb[0].mxu0
        %v885 = vadd.f32 %v469, %v884
        %v886 = vpop.f32.mrb[0].mxu0
        %887 = vmatprep.mubr.bf16.mxu0 0
        %888 = vmatmul.mubr.bf16.gmra.mrb[0].mxu0 %v617
        %v889 = vpop.f32.mrb[0].mxu0
        %v890 = vadd.f32 %v469, %v889
        %v891 = vpop.f32.mrb[0].mxu0
        %v892 = vpop.f32.mrb[0].mxu0
        %v893 = vadd.f32 %v469, %v892
        %v894 = vpop.f32.mrb[0].mxu0
        %895 = vmatprep.mubr.bf16.mxu0 0
        %896 = vmatmul.mubr.bf16.gmra.mrb[0].mxu0 %v618
        %v897 = vpop.f32.mrb[0].mxu0
        %v898 = vadd.f32 %v469, %v897
        %v899 = vpop.f32.mrb[0].mxu0
        %v900 = vpop.f32.mrb[0].mxu0
        %v901 = vadd.f32 %v469, %v900
        %v902 = vpop.f32.mrb[0].mxu0
        %903 = vmatprep.mubr.bf16.mxu0 0
        %904 = vmatmul.mubr.bf16.gmra.mrb[0].mxu0 %v619
        %v905 = vpop.f32.mrb[0].mxu0
        %v906 = vadd.f32 %v469, %v905
        %v907 = vpop.f32.mrb[0].mxu0
        %v908 = vpop.f32.mrb[0].mxu0
        %v909 = vadd.f32 %v469, %v908
        %v910 = vpop.f32.mrb[0].mxu0
        %911 = vmatprep.mubr.bf16.mxu0 0
        %912 = vmatmul.mubr.bf16.gmra.mrb[0].mxu0 %v620
        %v913 = vpop.f32.mrb[0].mxu0
        %v914 = vadd.f32 %v469, %v913
        %v915 = vpop.f32.mrb[0].mxu0
        %v916 = vpop.f32.mrb[0].mxu0
        %v917 = vadd.f32 %v469, %v916
        %v918 = vpop.f32.mrb[0].mxu0
        %919 = vmatprep.mubr.bf16.mxu0 0
        %920 = vmatmul.mubr.bf16.gmra.mrb[0].mxu0 %v621
        %v921 = vpop.f32.mrb[0].mxu0
        %v922 = vadd.f32 %v469, %v921
        %v923 = vpop.f32.mrb[0].mxu0
        %v924 = vpop.f32.mrb[0].mxu0
        %v925 = vadd.f32 %v469, %v924
        %v926 = vpop.f32.mrb[0].mxu0
        %927 = vmatprep.mubr.bf16.mxu0 0
        %928 = vmatmul.mubr.bf16.gmra.mrb[0].mxu0 %v622
        %v929 = vpop.f32.mrb[0].mxu0
        %v930 = vadd.f32 %v469, %v929
        %v931 = vpop.f32.mrb[0].mxu0
        %v932 = vpop.f32.mrb[0].mxu0
        %v933 = vadd.f32 %v469, %v932
        %v934 = vpop.f32.mrb[0].mxu0
        %935 = vmatprep.mubr.bf16.mxu0 0
        %936 = vmatmul.mubr.bf16.gmra.mrb[0].mxu0 %v623
        %v937 = vpop.f32.mrb[0].mxu0
        %v938 = vadd.f32 %v469, %v937
        %v939 = vpop.f32.mrb[0].mxu0
        %v940 = vpop.f32.mrb[0].mxu0
        %v941 = vadd.f32 %v469, %v940
        %v942 = vpop.f32.mrb[0].mxu0
        %943 = vmatprep.mubr.bf16.mxu0 0
        %944 = vmatmul.mubr.bf16.gmra.mrb[0].mxu0 %v624
        %v945 = vpop.f32.mrb[0].mxu0
        %v946 = vadd.f32 %v469, %v945
        %v947 = vpop.f32.mrb[0].mxu0
        %v948 = vpop.f32.mrb[0].mxu0
        %v949 = vadd.f32 %v469, %v948
        %v950 = vpop.f32.mrb[0].mxu0
        %951 = vmatprep.mubr.bf16.mxu0 0
        %952 = vmatmul.mubr.bf16.gmra.mrb[0].mxu0 %v625
        %v953 = vpop.f32.mrb[0].mxu0
        %v954 = vadd.f32 %v469, %v953
        %v955 = vpop.f32.mrb[0].mxu0
        %v956 = vpop.f32.mrb[0].mxu0
        %v957 = vadd.f32 %v469, %v956
        %v958 = vpop.f32.mrb[0].mxu0
        %959 = vmatprep.mubr.bf16.mxu0 0
        %960 = vmatmul.mubr.bf16.gmra.mrb[0].mxu0 %v626
        %v961 = vpop.f32.mrb[0].mxu0
        %v962 = vadd.f32 %v469, %v961
        %v963 = vpop.f32.mrb[0].mxu0
        %v964 = vpop.f32.mrb[0].mxu0
        %v965 = vadd.f32 %v469, %v964
        %v966 = vpop.f32.mrb[0].mxu0
        %967 = vmatprep.mubr.bf16.mxu0 0
        %968 = vmatmul.mubr.bf16.gmra.mrb[0].mxu0 %v627
        %v969 = vpop.f32.mrb[0].mxu0
        %v970 = vadd.f32 %v469, %v969
        %v971 = vpop.f32.mrb[0].mxu0
        %v972 = vpop.f32.mrb[0].mxu0
        %v973 = vadd.f32 %v469, %v972
        %v974 = vpop.f32.mrb[0].mxu0
        %975 = vmatprep.mubr.bf16.mxu0 0
        %976 = vmatmul.mubr.bf16.gmra.mrb[0].mxu0 %v628
        %v977 = vpop.f32.mrb[0].mxu0
        %v978 = vadd.f32 %v469, %v977
        %v979 = vpop.f32.mrb[0].mxu0
        %v980 = vpop.f32.mrb[0].mxu0
        %v981 = vadd.f32 %v469, %v980
        %v982 = vpop.f32.mrb[0].mxu0
        %983 = vmatprep.mubr.bf16.mxu0 0
        %984 = vmatmul.mubr.bf16.gmra.mrb[0].mxu0 %v629
        %v985 = vpop.f32.mrb[0].mxu0
        %v986 = vadd.f32 %v469, %v985
        %v987 = vpop.f32.mrb[0].mxu0
        %v988 = vpop.f32.mrb[0].mxu0
        %v989 = vadd.f32 %v469, %v988
        %v990 = vpop.f32.mrb[0].mxu0
        %991 = vmatprep.mubr.bf16.mxu0 0
        %992 = vmatmul.mubr.bf16.gmra.mrb[0].mxu0 %v630
        %v993 = vpop.f32.mrb[0].mxu0
        %v994 = vadd.f32 %v469, %v993
        %v995 = vpop.f32.mrb[0].mxu0
        %v996 = vpop.f32.mrb[0].mxu0
        %v997 = vadd.f32 %v469, %v996
        %v998 = vpop.f32.mrb[0].mxu0
        %999 = vdwg.mxu0
        %v1000 = vmax.f32 %v746, 0.0
        %v1001 = vmax.f32 %v749, 0.0
        %v1002 = vmax.f32 %v754, 0.0
        %v1003 = vmax.f32 %v757, 0.0
        %v1004 = vmax.f32 %v762, 0.0
        %v1005 = vmax.f32 %v765, 0.0
        %v1006 = vmax.f32 %v770, 0.0
        %v1007 = vmax.f32 %v773, 0.0
        %v1008 = vmax.f32 %v778, 0.0
        %v1009 = vmax.f32 %v781, 0.0
        %v1010 = vmax.f32 %v786, 0.0
        %v1011 = vmax.f32 %v789, 0.0
        %v1012 = vmax.f32 %v794, 0.0
        %v1013 = vmax.f32 %v797, 0.0
        %v1014 = vmax.f32 %v802, 0.0
        %v1015 = vmax.f32 %v805, 0.0
        %v1016 = vmax.f32 %v810, 0.0
        %v1017 = vmax.f32 %v813, 0.0
        %v1018 = vmax.f32 %v818, 0.0
        %v1019 = vmax.f32 %v821, 0.0
        %v1020 = vmax.f32 %v826, 0.0
        %v1021 = vmax.f32 %v829, 0.0
        %v1022 = vmax.f32 %v834, 0.0
        %v1023 = vmax.f32 %v837, 0.0
        %v1024 = vmax.f32 %v842, 0.0
        %v1025 = vmax.f32 %v845, 0.0
        %v1026 = vmax.f32 %v850, 0.0
        %v1027 = vmax.f32 %v853, 0.0
        %v1028 = vmax.f32 %v858, 0.0
        %v1029 = vmax.f32 %v861, 0.0
        %v1030 = vmax.f32 %v866, 0.0
        %v1031 = vmax.f32 %v869, 0.0
        %v1032 = vmax.f32 %v874, 0.0
        %v1033 = vmax.f32 %v877, 0.0
        %v1034 = vmax.f32 %v882, 0.0
        %v1035 = vmax.f32 %v885, 0.0
        %v1036 = vmax.f32 %v890, 0.0
        %v1037 = vmax.f32 %v893, 0.0
        %v1038 = vmax.f32 %v898, 0.0
        %v1039 = vmax.f32 %v901, 0.0
        %v1040 = vmax.f32 %v906, 0.0
        %v1041 = vmax.f32 %v909, 0.0
        %v1042 = vmax.f32 %v914, 0.0
        %v1043 = vmax.f32 %v917, 0.0
        %v1044 = vmax.f32 %v922, 0.0
        %v1045 = vmax.f32 %v925, 0.0
        %v1046 = vmax.f32 %v930, 0.0
        %v1047 = vmax.f32 %v933, 0.0
        %v1048 = vmax.f32 %v938, 0.0
        %v1049 = vmax.f32 %v941, 0.0
        %v1050 = vmax.f32 %v946, 0.0
        %v1051 = vmax.f32 %v949, 0.0
        %v1052 = vmax.f32 %v954, 0.0
        %v1053 = vmax.f32 %v957, 0.0
        %v1054 = vmax.f32 %v962, 0.0
        %v1055 = vmax.f32 %v965, 0.0
        %v1056 = vmax.f32 %v970, 0.0
        %v1057 = vmax.f32 %v973, 0.0
        %v1058 = vmax.f32 %v978, 0.0
        %v1059 = vmax.f32 %v981, 0.0
        %v1060 = vmax.f32 %v986, 0.0
        %v1061 = vmax.f32 %v989, 0.0
        %v1062 = vmax.f32 %v994, 0.0
        %v1063 = vmax.f32 %v997, 0.0
        %v1064 = vlaneseq
        %v1065 = vshrl.u32 %v1064, 7
        %v1066 = vadd.s32 %v1065, 8
        %v1067 = vadd.s32 %v1065, 16
        %v1068 = vadd.s32 %v1065, 24
        %v1069 = vadd.s32 %v1065, 32
        %v1070 = vadd.s32 %v1065, 40
        %v1071 = vadd.s32 %v1065, 48
        %v1072 = vadd.s32 %v1065, 56
        %v1073 = vadd.s32 %v1065, 64
        %v1074 = vadd.s32 %v1065, 72
        %v1075 = vadd.s32 %v1065, 80
        %v1076 = vadd.s32 %v1065, 88
        %v1077 = vadd.s32 %v1065, 96
        %v1078 = vadd.s32 %v1065, 104
        %v1079 = vadd.s32 %v1065, 112
        %v1080 = vadd.s32 %v1065, 120
        %v1081 = vadd.s32 %v1065, 128
        %v1082 = vadd.s32 %v1065, 136
        %v1083 = vadd.s32 %v1065, 144
        %v1084 = vadd.s32 %v1065, 152
        %v1085 = vadd.s32 %v1065, 160
        %v1086 = vadd.s32 %v1065, 168
        %v1087 = vadd.s32 %v1065, 176
        %v1088 = vadd.s32 %v1065, 184
        %v1089 = vadd.s32 %v1065, 192
        %v1090 = vadd.s32 %v1065, 200
        %v1091 = vadd.s32 %v1065, 208
        %v1092 = vadd.s32 %v1065, 216
        %v1093 = vadd.s32 %v1065, 224
        %v1094 = vadd.s32 %v1065, 232
        %v1095 = vadd.s32 %v1065, 240
        %v1096 = vadd.s32 %v1065, 248
        %v1097 = vadd.s32 %v1065, 256
        %v1098 = vadd.s32 %v1065, 264
        %v1099 = vadd.s32 %v1065, 272
        %v1100 = vadd.s32 %v1065, 280
        %v1101 = vadd.s32 %v1065, 288
        %v1102 = vadd.s32 %v1065, 296
        %v1103 = vadd.s32 %v1065, 304
        %v1104 = vadd.s32 %v1065, 312
        %v1105 = vadd.s32 %v1065, 320
        %v1106 = vadd.s32 %v1065, 328
        %v1107 = vadd.s32 %v1065, 336
        %v1108 = vadd.s32 %v1065, 344
        %v1109 = vadd.s32 %v1065, 352
        %v1110 = vadd.s32 %v1065, 360
        %v1111 = vadd.s32 %v1065, 368
        %v1112 = vadd.s32 %v1065, 376
        %v1113 = vadd.s32 %v1065, 384
        %v1114 = vadd.s32 %v1065, 392
        %v1115 = vadd.s32 %v1065, 400
        %v1116 = vadd.s32 %v1065, 408
        %v1117 = vadd.s32 %v1065, 416
        %v1118 = vadd.s32 %v1065, 424
        %v1119 = vadd.s32 %v1065, 432
        %v1120 = vadd.s32 %v1065, 440
        %v1121 = vadd.s32 %v1065, 448
        %v1122 = vadd.s32 %v1065, 456
        %v1123 = vadd.s32 %v1065, 464
        %v1124 = vadd.s32 %v1065, 472
        %v1125 = vadd.s32 %v1065, 480
        %v1126 = vadd.s32 %v1065, 488
        %v1127 = vadd.s32 %v1065, 496
        %v1128 = vadd.s32 %v1065, 504
        %vm1129 = vcmp.lt.s32.totalorder %v1065, 0
        %v1130 = vsub.s32 0, %v1065
        %v1131 = vsel %vm1129, %v1130, %v1065
        %v1132 = vshrl.u32 %v1131, 7
        %v1133 = vand.u32 %v1131, 127
        %v1134 = vsub.s32 0, %v1133
        %v1135 = vsel %vm1129, %v1134, %v1133
        %vm1136 = vcmp.lt.s32.totalorder %v1066, 0
        %v1137 = vsub.s32 0, %v1066
        %v1138 = vsel %vm1136, %v1137, %v1066
        %v1139 = vshrl.u32 %v1138, 7
        %v1140 = vand.u32 %v1138, 127
        %v1141 = vsub.s32 0, %v1140
        %v1142 = vsel %vm1136, %v1141, %v1140
        %vm1143 = vcmp.lt.s32.totalorder %v1067, 0
        %v1144 = vsub.s32 0, %v1067
        %v1145 = vsel %vm1143, %v1144, %v1067
        %v1146 = vshrl.u32 %v1145, 7
        %v1147 = vand.u32 %v1145, 127
        %v1148 = vsub.s32 0, %v1147
        %v1149 = vsel %vm1143, %v1148, %v1147
        %vm1150 = vcmp.lt.s32.totalorder %v1068, 0
        %v1151 = vsub.s32 0, %v1068
        %v1152 = vsel %vm1150, %v1151, %v1068
        %v1153 = vshrl.u32 %v1152, 7
        %v1154 = vand.u32 %v1152, 127
        %v1155 = vsub.s32 0, %v1154
        %v1156 = vsel %vm1150, %v1155, %v1154
        %vm1157 = vcmp.lt.s32.totalorder %v1069, 0
        %v1158 = vsub.s32 0, %v1069
        %v1159 = vsel %vm1157, %v1158, %v1069
        %v1160 = vshrl.u32 %v1159, 7
        %v1161 = vand.u32 %v1159, 127
        %v1162 = vsub.s32 0, %v1161
        %v1163 = vsel %vm1157, %v1162, %v1161
        %vm1164 = vcmp.lt.s32.totalorder %v1070, 0
        %v1165 = vsub.s32 0, %v1070
        %v1166 = vsel %vm1164, %v1165, %v1070
        %v1167 = vshrl.u32 %v1166, 7
        %v1168 = vand.u32 %v1166, 127
        %v1169 = vsub.s32 0, %v1168
        %v1170 = vsel %vm1164, %v1169, %v1168
        %vm1171 = vcmp.lt.s32.totalorder %v1071, 0
        %v1172 = vsub.s32 0, %v1071
        %v1173 = vsel %vm1171, %v1172, %v1071
        %v1174 = vshrl.u32 %v1173, 7
        %v1175 = vand.u32 %v1173, 127
        %v1176 = vsub.s32 0, %v1175
        %v1177 = vsel %vm1171, %v1176, %v1175
        %vm1178 = vcmp.lt.s32.totalorder %v1072, 0
        %v1179 = vsub.s32 0, %v1072
        %v1180 = vsel %vm1178, %v1179, %v1072
        %v1181 = vshrl.u32 %v1180, 7
        %v1182 = vand.u32 %v1180, 127
        %v1183 = vsub.s32 0, %v1182
        %v1184 = vsel %vm1178, %v1183, %v1182
        %vm1185 = vcmp.lt.s32.totalorder %v1073, 0
        %v1186 = vsub.s32 0, %v1073
        %v1187 = vsel %vm1185, %v1186, %v1073
        %v1188 = vshrl.u32 %v1187, 7
        %v1189 = vand.u32 %v1187, 127
        %v1190 = vsub.s32 0, %v1189
        %v1191 = vsel %vm1185, %v1190, %v1189
        %vm1192 = vcmp.lt.s32.totalorder %v1074, 0
        %v1193 = vsub.s32 0, %v1074
        %v1194 = vsel %vm1192, %v1193, %v1074
        %v1195 = vshrl.u32 %v1194, 7
        %v1196 = vand.u32 %v1194, 127
        %v1197 = vsub.s32 0, %v1196
        %v1198 = vsel %vm1192, %v1197, %v1196
        %vm1199 = vcmp.lt.s32.totalorder %v1075, 0
        %v1200 = vsub.s32 0, %v1075
        %v1201 = vsel %vm1199, %v1200, %v1075
        %v1202 = vshrl.u32 %v1201, 7
        %v1203 = vand.u32 %v1201, 127
        %v1204 = vsub.s32 0, %v1203
        %v1205 = vsel %vm1199, %v1204, %v1203
        %vm1206 = vcmp.lt.s32.totalorder %v1076, 0
        %v1207 = vsub.s32 0, %v1076
        %v1208 = vsel %vm1206, %v1207, %v1076
        %v1209 = vshrl.u32 %v1208, 7
        %v1210 = vand.u32 %v1208, 127
        %v1211 = vsub.s32 0, %v1210
        %v1212 = vsel %vm1206, %v1211, %v1210
        %vm1213 = vcmp.lt.s32.totalorder %v1077, 0
        %v1214 = vsub.s32 0, %v1077
        %v1215 = vsel %vm1213, %v1214, %v1077
        %v1216 = vshrl.u32 %v1215, 7
        %v1217 = vand.u32 %v1215, 127
        %v1218 = vsub.s32 0, %v1217
        %v1219 = vsel %vm1213, %v1218, %v1217
        %vm1220 = vcmp.lt.s32.totalorder %v1078, 0
        %v1221 = vsub.s32 0, %v1078
        %v1222 = vsel %vm1220, %v1221, %v1078
        %v1223 = vshrl.u32 %v1222, 7
        %v1224 = vand.u32 %v1222, 127
        %v1225 = vsub.s32 0, %v1224
        %v1226 = vsel %vm1220, %v1225, %v1224
        %vm1227 = vcmp.lt.s32.totalorder %v1079, 0
        %v1228 = vsub.s32 0, %v1079
        %v1229 = vsel %vm1227, %v1228, %v1079
        %v1230 = vshrl.u32 %v1229, 7
        %v1231 = vand.u32 %v1229, 127
        %v1232 = vsub.s32 0, %v1231
        %v1233 = vsel %vm1227, %v1232, %v1231
        %vm1234 = vcmp.lt.s32.totalorder %v1080, 0
        %v1235 = vsub.s32 0, %v1080
        %v1236 = vsel %vm1234, %v1235, %v1080
        %v1237 = vshrl.u32 %v1236, 7
        %v1238 = vand.u32 %v1236, 127
        %v1239 = vsub.s32 0, %v1238
        %v1240 = vsel %vm1234, %v1239, %v1238
        %vm1241 = vcmp.lt.s32.totalorder %v1081, 0
        %v1242 = vsub.s32 0, %v1081
        %v1243 = vsel %vm1241, %v1242, %v1081
        %v1244 = vshrl.u32 %v1243, 7
        %v1245 = vand.u32 %v1243, 127
        %v1246 = vsub.s32 0, %v1245
        %v1247 = vsel %vm1241, %v1246, %v1245
        %vm1248 = vcmp.lt.s32.totalorder %v1082, 0
        %v1249 = vsub.s32 0, %v1082
        %v1250 = vsel %vm1248, %v1249, %v1082
        %v1251 = vshrl.u32 %v1250, 7
        %v1252 = vand.u32 %v1250, 127
        %v1253 = vsub.s32 0, %v1252
        %v1254 = vsel %vm1248, %v1253, %v1252
        %vm1255 = vcmp.lt.s32.totalorder %v1083, 0
        %v1256 = vsub.s32 0, %v1083
        %v1257 = vsel %vm1255, %v1256, %v1083
        %v1258 = vshrl.u32 %v1257, 7
        %v1259 = vand.u32 %v1257, 127
        %v1260 = vsub.s32 0, %v1259
        %v1261 = vsel %vm1255, %v1260, %v1259
        %vm1262 = vcmp.lt.s32.totalorder %v1084, 0
        %v1263 = vsub.s32 0, %v1084
        %v1264 = vsel %vm1262, %v1263, %v1084
        %v1265 = vshrl.u32 %v1264, 7
        %v1266 = vand.u32 %v1264, 127
        %v1267 = vsub.s32 0, %v1266
        %v1268 = vsel %vm1262, %v1267, %v1266
        %vm1269 = vcmp.lt.s32.totalorder %v1085, 0
        %v1270 = vsub.s32 0, %v1085
        %v1271 = vsel %vm1269, %v1270, %v1085
        %v1272 = vshrl.u32 %v1271, 7
        %v1273 = vand.u32 %v1271, 127
        %v1274 = vsub.s32 0, %v1273
        %v1275 = vsel %vm1269, %v1274, %v1273
        %vm1276 = vcmp.lt.s32.totalorder %v1086, 0
        %v1277 = vsub.s32 0, %v1086
        %v1278 = vsel %vm1276, %v1277, %v1086
        %v1279 = vshrl.u32 %v1278, 7
        %v1280 = vand.u32 %v1278, 127
        %v1281 = vsub.s32 0, %v1280
        %v1282 = vsel %vm1276, %v1281, %v1280
        %vm1283 = vcmp.lt.s32.totalorder %v1087, 0
        %v1284 = vsub.s32 0, %v1087
        %v1285 = vsel %vm1283, %v1284, %v1087
        %v1286 = vshrl.u32 %v1285, 7
        %v1287 = vand.u32 %v1285, 127
        %v1288 = vsub.s32 0, %v1287
        %v1289 = vsel %vm1283, %v1288, %v1287
        %vm1290 = vcmp.lt.s32.totalorder %v1088, 0
        %v1291 = vsub.s32 0, %v1088
        %v1292 = vsel %vm1290, %v1291, %v1088
        %v1293 = vshrl.u32 %v1292, 7
        %v1294 = vand.u32 %v1292, 127
        %v1295 = vsub.s32 0, %v1294
        %v1296 = vsel %vm1290, %v1295, %v1294
        %vm1297 = vcmp.lt.s32.totalorder %v1089, 0
        %v1298 = vsub.s32 0, %v1089
        %v1299 = vsel %vm1297, %v1298, %v1089
        %v1300 = vshrl.u32 %v1299, 7
        %v1301 = vand.u32 %v1299, 127
        %v1302 = vsub.s32 0, %v1301
        %v1303 = vsel %vm1297, %v1302, %v1301
        %vm1304 = vcmp.lt.s32.totalorder %v1090, 0
        %v1305 = vsub.s32 0, %v1090
        %v1306 = vsel %vm1304, %v1305, %v1090
        %v1307 = vshrl.u32 %v1306, 7
        %v1308 = vand.u32 %v1306, 127
        %v1309 = vsub.s32 0, %v1308
        %v1310 = vsel %vm1304, %v1309, %v1308
        %vm1311 = vcmp.lt.s32.totalorder %v1091, 0
        %v1312 = vsub.s32 0, %v1091
        %v1313 = vsel %vm1311, %v1312, %v1091
        %v1314 = vshrl.u32 %v1313, 7
        %v1315 = vand.u32 %v1313, 127
        %v1316 = vsub.s32 0, %v1315
        %v1317 = vsel %vm1311, %v1316, %v1315
        %vm1318 = vcmp.lt.s32.totalorder %v1092, 0
        %v1319 = vsub.s32 0, %v1092
        %v1320 = vsel %vm1318, %v1319, %v1092
        %v1321 = vshrl.u32 %v1320, 7
        %v1322 = vand.u32 %v1320, 127
        %v1323 = vsub.s32 0, %v1322
        %v1324 = vsel %vm1318, %v1323, %v1322
        %vm1325 = vcmp.lt.s32.totalorder %v1093, 0
        %v1326 = vsub.s32 0, %v1093
        %v1327 = vsel %vm1325, %v1326, %v1093
        %v1328 = vshrl.u32 %v1327, 7
        %v1329 = vand.u32 %v1327, 127
        %v1330 = vsub.s32 0, %v1329
        %v1331 = vsel %vm1325, %v1330, %v1329
        %vm1332 = vcmp.lt.s32.totalorder %v1094, 0
        %v1333 = vsub.s32 0, %v1094
        %v1334 = vsel %vm1332, %v1333, %v1094
        %v1335 = vshrl.u32 %v1334, 7
        %v1336 = vand.u32 %v1334, 127
        %v1337 = vsub.s32 0, %v1336
        %v1338 = vsel %vm1332, %v1337, %v1336
        %vm1339 = vcmp.lt.s32.totalorder %v1095, 0
        %v1340 = vsub.s32 0, %v1095
        %v1341 = vsel %vm1339, %v1340, %v1095
        %v1342 = vshrl.u32 %v1341, 7
        %v1343 = vand.u32 %v1341, 127
        %v1344 = vsub.s32 0, %v1343
        %v1345 = vsel %vm1339, %v1344, %v1343
        %vm1346 = vcmp.lt.s32.totalorder %v1096, 0
        %v1347 = vsub.s32 0, %v1096
        %v1348 = vsel %vm1346, %v1347, %v1096
        %v1349 = vshrl.u32 %v1348, 7
        %v1350 = vand.u32 %v1348, 127
        %v1351 = vsub.s32 0, %v1350
        %v1352 = vsel %vm1346, %v1351, %v1350
        %vm1353 = vcmp.lt.s32.totalorder %v1097, 0
        %v1354 = vsub.s32 0, %v1097
        %v1355 = vsel %vm1353, %v1354, %v1097
        %v1356 = vshrl.u32 %v1355, 7
        %v1357 = vand.u32 %v1355, 127
        %v1358 = vsub.s32 0, %v1357
        %v1359 = vsel %vm1353, %v1358, %v1357
        %vm1360 = vcmp.lt.s32.totalorder %v1098, 0
        %v1361 = vsub.s32 0, %v1098
        %v1362 = vsel %vm1360, %v1361, %v1098
        %v1363 = vshrl.u32 %v1362, 7
        %v1364 = vand.u32 %v1362, 127
        %v1365 = vsub.s32 0, %v1364
        %v1366 = vsel %vm1360, %v1365, %v1364
        %vm1367 = vcmp.lt.s32.totalorder %v1099, 0
        %v1368 = vsub.s32 0, %v1099
        %v1369 = vsel %vm1367, %v1368, %v1099
        %v1370 = vshrl.u32 %v1369, 7
        %v1371 = vand.u32 %v1369, 127
        %v1372 = vsub.s32 0, %v1371
        %v1373 = vsel %vm1367, %v1372, %v1371
        %vm1374 = vcmp.lt.s32.totalorder %v1100, 0
        %v1375 = vsub.s32 0, %v1100
        %v1376 = vsel %vm1374, %v1375, %v1100
        %v1377 = vshrl.u32 %v1376, 7
        %v1378 = vand.u32 %v1376, 127
        %v1379 = vsub.s32 0, %v1378
        %v1380 = vsel %vm1374, %v1379, %v1378
        %vm1381 = vcmp.lt.s32.totalorder %v1101, 0
        %v1382 = vsub.s32 0, %v1101
        %v1383 = vsel %vm1381, %v1382, %v1101
        %v1384 = vshrl.u32 %v1383, 7
        %v1385 = vand.u32 %v1383, 127
        %v1386 = vsub.s32 0, %v1385
        %v1387 = vsel %vm1381, %v1386, %v1385
        %vm1388 = vcmp.lt.s32.totalorder %v1102, 0
        %v1389 = vsub.s32 0, %v1102
        %v1390 = vsel %vm1388, %v1389, %v1102
        %v1391 = vshrl.u32 %v1390, 7
        %v1392 = vand.u32 %v1390, 127
        %v1393 = vsub.s32 0, %v1392
        %v1394 = vsel %vm1388, %v1393, %v1392
        %vm1395 = vcmp.lt.s32.totalorder %v1103, 0
        %v1396 = vsub.s32 0, %v1103
        %v1397 = vsel %vm1395, %v1396, %v1103
        %v1398 = vshrl.u32 %v1397, 7
        %v1399 = vand.u32 %v1397, 127
        %v1400 = vsub.s32 0, %v1399
        %v1401 = vsel %vm1395, %v1400, %v1399
        %vm1402 = vcmp.lt.s32.totalorder %v1104, 0
        %v1403 = vsub.s32 0, %v1104
        %v1404 = vsel %vm1402, %v1403, %v1104
        %v1405 = vshrl.u32 %v1404, 7
        %v1406 = vand.u32 %v1404, 127
        %v1407 = vsub.s32 0, %v1406
        %v1408 = vsel %vm1402, %v1407, %v1406
        %vm1409 = vcmp.lt.s32.totalorder %v1105, 0
        %v1410 = vsub.s32 0, %v1105
        %v1411 = vsel %vm1409, %v1410, %v1105
        %v1412 = vshrl.u32 %v1411, 7
        %v1413 = vand.u32 %v1411, 127
        %v1414 = vsub.s32 0, %v1413
        %v1415 = vsel %vm1409, %v1414, %v1413
        %vm1416 = vcmp.lt.s32.totalorder %v1106, 0
        %v1417 = vsub.s32 0, %v1106
        %v1418 = vsel %vm1416, %v1417, %v1106
        %v1419 = vshrl.u32 %v1418, 7
        %v1420 = vand.u32 %v1418, 127
        %v1421 = vsub.s32 0, %v1420
        %v1422 = vsel %vm1416, %v1421, %v1420
        %vm1423 = vcmp.lt.s32.totalorder %v1107, 0
        %v1424 = vsub.s32 0, %v1107
        %v1425 = vsel %vm1423, %v1424, %v1107
        %v1426 = vshrl.u32 %v1425, 7
        %v1427 = vand.u32 %v1425, 127
        %v1428 = vsub.s32 0, %v1427
        %v1429 = vsel %vm1423, %v1428, %v1427
        %vm1430 = vcmp.lt.s32.totalorder %v1108, 0
        %v1431 = vsub.s32 0, %v1108
        %v1432 = vsel %vm1430, %v1431, %v1108
        %v1433 = vshrl.u32 %v1432, 7
        %v1434 = vand.u32 %v1432, 127
        %v1435 = vsub.s32 0, %v1434
        %v1436 = vsel %vm1430, %v1435, %v1434
        %vm1437 = vcmp.lt.s32.totalorder %v1109, 0
        %v1438 = vsub.s32 0, %v1109
        %v1439 = vsel %vm1437, %v1438, %v1109
        %v1440 = vshrl.u32 %v1439, 7
        %v1441 = vand.u32 %v1439, 127
        %v1442 = vsub.s32 0, %v1441
        %v1443 = vsel %vm1437, %v1442, %v1441
        %vm1444 = vcmp.lt.s32.totalorder %v1110, 0
        %v1445 = vsub.s32 0, %v1110
        %v1446 = vsel %vm1444, %v1445, %v1110
        %v1447 = vshrl.u32 %v1446, 7
        %v1448 = vand.u32 %v1446, 127
        %v1449 = vsub.s32 0, %v1448
        %v1450 = vsel %vm1444, %v1449, %v1448
        %vm1451 = vcmp.lt.s32.totalorder %v1111, 0
        %v1452 = vsub.s32 0, %v1111
        %v1453 = vsel %vm1451, %v1452, %v1111
        %v1454 = vshrl.u32 %v1453, 7
        %v1455 = vand.u32 %v1453, 127
        %v1456 = vsub.s32 0, %v1455
        %v1457 = vsel %vm1451, %v1456, %v1455
        %vm1458 = vcmp.lt.s32.totalorder %v1112, 0
        %v1459 = vsub.s32 0, %v1112
        %v1460 = vsel %vm1458, %v1459, %v1112
        %v1461 = vshrl.u32 %v1460, 7
        %v1462 = vand.u32 %v1460, 127
        %v1463 = vsub.s32 0, %v1462
        %v1464 = vsel %vm1458, %v1463, %v1462
        %vm1465 = vcmp.lt.s32.totalorder %v1113, 0
        %v1466 = vsub.s32 0, %v1113
        %v1467 = vsel %vm1465, %v1466, %v1113
        %v1468 = vshrl.u32 %v1467, 7
        %v1469 = vand.u32 %v1467, 127
        %v1470 = vsub.s32 0, %v1469
        %v1471 = vsel %vm1465, %v1470, %v1469
        %vm1472 = vcmp.lt.s32.totalorder %v1114, 0
        %v1473 = vsub.s32 0, %v1114
        %v1474 = vsel %vm1472, %v1473, %v1114
        %v1475 = vshrl.u32 %v1474, 7
        %v1476 = vand.u32 %v1474, 127
        %v1477 = vsub.s32 0, %v1476
        %v1478 = vsel %vm1472, %v1477, %v1476
        %vm1479 = vcmp.lt.s32.totalorder %v1115, 0
        %v1480 = vsub.s32 0, %v1115
        %v1481 = vsel %vm1479, %v1480, %v1115
        %v1482 = vshrl.u32 %v1481, 7
        %v1483 = vand.u32 %v1481, 127
        %v1484 = vsub.s32 0, %v1483
        %v1485 = vsel %vm1479, %v1484, %v1483
        %vm1486 = vcmp.lt.s32.totalorder %v1116, 0
        %v1487 = vsub.s32 0, %v1116
        %v1488 = vsel %vm1486, %v1487, %v1116
        %v1489 = vshrl.u32 %v1488, 7
        %v1490 = vand.u32 %v1488, 127
        %v1491 = vsub.s32 0, %v1490
        %v1492 = vsel %vm1486, %v1491, %v1490
        %vm1493 = vcmp.lt.s32.totalorder %v1117, 0
        %v1494 = vsub.s32 0, %v1117
        %v1495 = vsel %vm1493, %v1494, %v1117
        %v1496 = vshrl.u32 %v1495, 7
        %v1497 = vand.u32 %v1495, 127
        %v1498 = vsub.s32 0, %v1497
        %v1499 = vsel %vm1493, %v1498, %v1497
        %vm1500 = vcmp.lt.s32.totalorder %v1118, 0
        %v1501 = vsub.s32 0, %v1118
        %v1502 = vsel %vm1500, %v1501, %v1118
        %v1503 = vshrl.u32 %v1502, 7
        %v1504 = vand.u32 %v1502, 127
        %v1505 = vsub.s32 0, %v1504
        %v1506 = vsel %vm1500, %v1505, %v1504
        %vm1507 = vcmp.lt.s32.totalorder %v1119, 0
        %v1508 = vsub.s32 0, %v1119
        %v1509 = vsel %vm1507, %v1508, %v1119
        %v1510 = vshrl.u32 %v1509, 7
        %v1511 = vand.u32 %v1509, 127
        %v1512 = vsub.s32 0, %v1511
        %v1513 = vsel %vm1507, %v1512, %v1511
        %vm1514 = vcmp.lt.s32.totalorder %v1120, 0
        %v1515 = vsub.s32 0, %v1120
        %v1516 = vsel %vm1514, %v1515, %v1120
        %v1517 = vshrl.u32 %v1516, 7
        %v1518 = vand.u32 %v1516, 127
        %v1519 = vsub.s32 0, %v1518
        %v1520 = vsel %vm1514, %v1519, %v1518
        %vm1521 = vcmp.lt.s32.totalorder %v1121, 0
        %v1522 = vsub.s32 0, %v1121
        %v1523 = vsel %vm1521, %v1522, %v1121
        %v1524 = vshrl.u32 %v1523, 7
        %v1525 = vand.u32 %v1523, 127
        %v1526 = vsub.s32 0, %v1525
        %v1527 = vsel %vm1521, %v1526, %v1525
        %vm1528 = vcmp.lt.s32.totalorder %v1122, 0
        %v1529 = vsub.s32 0, %v1122
        %v1530 = vsel %vm1528, %v1529, %v1122
        %v1531 = vshrl.u32 %v1530, 7
        %v1532 = vand.u32 %v1530, 127
        %v1533 = vsub.s32 0, %v1532
        %v1534 = vsel %vm1528, %v1533, %v1532
        %vm1535 = vcmp.lt.s32.totalorder %v1123, 0
        %v1536 = vsub.s32 0, %v1123
        %v1537 = vsel %vm1535, %v1536, %v1123
        %v1538 = vshrl.u32 %v1537, 7
        %v1539 = vand.u32 %v1537, 127
        %v1540 = vsub.s32 0, %v1539
        %v1541 = vsel %vm1535, %v1540, %v1539
        %vm1542 = vcmp.lt.s32.totalorder %v1124, 0
        %v1543 = vsub.s32 0, %v1124
        %v1544 = vsel %vm1542, %v1543, %v1124
        %v1545 = vshrl.u32 %v1544, 7
        %v1546 = vand.u32 %v1544, 127
        %v1547 = vsub.s32 0, %v1546
        %v1548 = vsel %vm1542, %v1547, %v1546
        %vm1549 = vcmp.lt.s32.totalorder %v1125, 0
        %v1550 = vsub.s32 0, %v1125
        %v1551 = vsel %vm1549, %v1550, %v1125
        %v1552 = vshrl.u32 %v1551, 7
        %v1553 = vand.u32 %v1551, 127
        %v1554 = vsub.s32 0, %v1553
        %v1555 = vsel %vm1549, %v1554, %v1553
        %vm1556 = vcmp.lt.s32.totalorder %v1126, 0
        %v1557 = vsub.s32 0, %v1126
        %v1558 = vsel %vm1556, %v1557, %v1126
        %v1559 = vshrl.u32 %v1558, 7
        %v1560 = vand.u32 %v1558, 127
        %v1561 = vsub.s32 0, %v1560
        %v1562 = vsel %vm1556, %v1561, %v1560
        %vm1563 = vcmp.lt.s32.totalorder %v1127, 0
        %v1564 = vsub.s32 0, %v1127
        %v1565 = vsel %vm1563, %v1564, %v1127
        %v1566 = vshrl.u32 %v1565, 7
        %v1567 = vand.u32 %v1565, 127
        %v1568 = vsub.s32 0, %v1567
        %v1569 = vsel %vm1563, %v1568, %v1567
        %vm1570 = vcmp.lt.s32.totalorder %v1128, 0
        %v1571 = vsub.s32 0, %v1128
        %v1572 = vsel %vm1570, %v1571, %v1128
        %v1573 = vshrl.u32 %v1572, 7
        %v1574 = vand.u32 %v1572, 127
        %v1575 = vsub.s32 0, %v1574
        %v1576 = vsel %vm1570, %v1575, %v1574
        %vm1577 = vcmp.ne.s32.totalorder %v1135, 0
        %vm1578 = vcmp.ne.s32.totalorder %v1142, 0
        %vm1579 = vcmp.ne.s32.totalorder %v1149, 0
        %vm1580 = vcmp.ne.s32.totalorder %v1156, 0
        %vm1581 = vcmp.ne.s32.totalorder %v1163, 0
        %vm1582 = vcmp.ne.s32.totalorder %v1170, 0
        %vm1583 = vcmp.ne.s32.totalorder %v1177, 0
        %vm1584 = vcmp.ne.s32.totalorder %v1184, 0
        %vm1585 = vcmp.ne.s32.totalorder %v1191, 0
        %vm1586 = vcmp.ne.s32.totalorder %v1198, 0
        %vm1587 = vcmp.ne.s32.totalorder %v1205, 0
        %vm1588 = vcmp.ne.s32.totalorder %v1212, 0
        %vm1589 = vcmp.ne.s32.totalorder %v1219, 0
        %vm1590 = vcmp.ne.s32.totalorder %v1226, 0
        %vm1591 = vcmp.ne.s32.totalorder %v1233, 0
        %vm1592 = vcmp.ne.s32.totalorder %v1240, 0
        %vm1593 = vcmp.ne.s32.totalorder %v1247, 0
        %vm1594 = vcmp.ne.s32.totalorder %v1254, 0
        %vm1595 = vcmp.ne.s32.totalorder %v1261, 0
        %vm1596 = vcmp.ne.s32.totalorder %v1268, 0
        %vm1597 = vcmp.ne.s32.totalorder %v1275, 0
        %vm1598 = vcmp.ne.s32.totalorder %v1282, 0
        %vm1599 = vcmp.ne.s32.totalorder %v1289, 0
        %vm1600 = vcmp.ne.s32.totalorder %v1296, 0
        %vm1601 = vcmp.ne.s32.totalorder %v1303, 0
        %vm1602 = vcmp.ne.s32.totalorder %v1310, 0
        %vm1603 = vcmp.ne.s32.totalorder %v1317, 0
        %vm1604 = vcmp.ne.s32.totalorder %v1324, 0
        %vm1605 = vcmp.ne.s32.totalorder %v1331, 0
        %vm1606 = vcmp.ne.s32.totalorder %v1338, 0
        %vm1607 = vcmp.ne.s32.totalorder %v1345, 0
        %vm1608 = vcmp.ne.s32.totalorder %v1352, 0
        %vm1609 = vcmp.ne.s32.totalorder %v1359, 0
        %vm1610 = vcmp.ne.s32.totalorder %v1366, 0
        %vm1611 = vcmp.ne.s32.totalorder %v1373, 0
        %vm1612 = vcmp.ne.s32.totalorder %v1380, 0
        %vm1613 = vcmp.ne.s32.totalorder %v1387, 0
        %vm1614 = vcmp.ne.s32.totalorder %v1394, 0
        %vm1615 = vcmp.ne.s32.totalorder %v1401, 0
        %vm1616 = vcmp.ne.s32.totalorder %v1408, 0
        %vm1617 = vcmp.ne.s32.totalorder %v1415, 0
        %vm1618 = vcmp.ne.s32.totalorder %v1422, 0
        %vm1619 = vcmp.ne.s32.totalorder %v1429, 0
        %vm1620 = vcmp.ne.s32.totalorder %v1436, 0
        %vm1621 = vcmp.ne.s32.totalorder %v1443, 0
        %vm1622 = vcmp.ne.s32.totalorder %v1450, 0
        %vm1623 = vcmp.ne.s32.totalorder %v1457, 0
        %vm1624 = vcmp.ne.s32.totalorder %v1464, 0
        %vm1625 = vcmp.ne.s32.totalorder %v1471, 0
        %vm1626 = vcmp.ne.s32.totalorder %v1478, 0
        %vm1627 = vcmp.ne.s32.totalorder %v1485, 0
        %vm1628 = vcmp.ne.s32.totalorder %v1492, 0
        %vm1629 = vcmp.ne.s32.totalorder %v1499, 0
        %vm1630 = vcmp.ne.s32.totalorder %v1506, 0
        %vm1631 = vcmp.ne.s32.totalorder %v1513, 0
        %vm1632 = vcmp.ne.s32.totalorder %v1520, 0
        %vm1633 = vcmp.ne.s32.totalorder %v1527, 0
        %vm1634 = vcmp.ne.s32.totalorder %v1534, 0
        %vm1635 = vcmp.ne.s32.totalorder %v1541, 0
        %vm1636 = vcmp.ne.s32.totalorder %v1548, 0
        %vm1637 = vcmp.ne.s32.totalorder %v1555, 0
        %vm1638 = vcmp.ne.s32.totalorder %v1562, 0
        %vm1639 = vcmp.ne.s32.totalorder %v1569, 0
        %vm1640 = vcmp.ne.s32.totalorder %v1576, 0
        %vm1641 = vcmp.lt.s32.totalorder %v1135, 0
        %vm1642 = vcmp.lt.s32.totalorder %v1142, 0
        %vm1643 = vcmp.lt.s32.totalorder %v1149, 0
        %vm1644 = vcmp.lt.s32.totalorder %v1156, 0
        %vm1645 = vcmp.lt.s32.totalorder %v1163, 0
        %vm1646 = vcmp.lt.s32.totalorder %v1170, 0
        %vm1647 = vcmp.lt.s32.totalorder %v1177, 0
        %vm1648 = vcmp.lt.s32.totalorder %v1184, 0
        %vm1649 = vcmp.lt.s32.totalorder %v1191, 0
        %vm1650 = vcmp.lt.s32.totalorder %v1198, 0
        %vm1651 = vcmp.lt.s32.totalorder %v1205, 0
        %vm1652 = vcmp.lt.s32.totalorder %v1212, 0
        %vm1653 = vcmp.lt.s32.totalorder %v1219, 0
        %vm1654 = vcmp.lt.s32.totalorder %v1226, 0
        %vm1655 = vcmp.lt.s32.totalorder %v1233, 0
        %vm1656 = vcmp.lt.s32.totalorder %v1240, 0
        %vm1657 = vcmp.lt.s32.totalorder %v1247, 0
        %vm1658 = vcmp.lt.s32.totalorder %v1254, 0
        %vm1659 = vcmp.lt.s32.totalorder %v1261, 0
        %vm1660 = vcmp.lt.s32.totalorder %v1268, 0
        %vm1661 = vcmp.lt.s32.totalorder %v1275, 0
        %vm1662 = vcmp.lt.s32.totalorder %v1282, 0
        %vm1663 = vcmp.lt.s32.totalorder %v1289, 0
        %vm1664 = vcmp.lt.s32.totalorder %v1296, 0
        %vm1665 = vcmp.lt.s32.totalorder %v1303, 0
        %vm1666 = vcmp.lt.s32.totalorder %v1310, 0
        %vm1667 = vcmp.lt.s32.totalorder %v1317, 0
        %vm1668 = vcmp.lt.s32.totalorder %v1324, 0
        %vm1669 = vcmp.lt.s32.totalorder %v1331, 0
        %vm1670 = vcmp.lt.s32.totalorder %v1338, 0
        %vm1671 = vcmp.lt.s32.totalorder %v1345, 0
        %vm1672 = vcmp.lt.s32.totalorder %v1352, 0
        %vm1673 = vcmp.lt.s32.totalorder %v1359, 0
        %vm1674 = vcmp.lt.s32.totalorder %v1366, 0
        %vm1675 = vcmp.lt.s32.totalorder %v1373, 0
        %vm1676 = vcmp.lt.s32.totalorder %v1380, 0
        %vm1677 = vcmp.lt.s32.totalorder %v1387, 0
        %vm1678 = vcmp.lt.s32.totalorder %v1394, 0
        %vm1679 = vcmp.lt.s32.totalorder %v1401, 0
        %vm1680 = vcmp.lt.s32.totalorder %v1408, 0
        %vm1681 = vcmp.lt.s32.totalorder %v1415, 0
        %vm1682 = vcmp.lt.s32.totalorder %v1422, 0
        %vm1683 = vcmp.lt.s32.totalorder %v1429, 0
        %vm1684 = vcmp.lt.s32.totalorder %v1436, 0
        %vm1685 = vcmp.lt.s32.totalorder %v1443, 0
        %vm1686 = vcmp.lt.s32.totalorder %v1450, 0
        %vm1687 = vcmp.lt.s32.totalorder %v1457, 0
        %vm1688 = vcmp.lt.s32.totalorder %v1464, 0
        %vm1689 = vcmp.lt.s32.totalorder %v1471, 0
        %vm1690 = vcmp.lt.s32.totalorder %v1478, 0
        %vm1691 = vcmp.lt.s32.totalorder %v1485, 0
        %vm1692 = vcmp.lt.s32.totalorder %v1492, 0
        %vm1693 = vcmp.lt.s32.totalorder %v1499, 0
        %vm1694 = vcmp.lt.s32.totalorder %v1506, 0
        %vm1695 = vcmp.lt.s32.totalorder %v1513, 0
        %vm1696 = vcmp.lt.s32.totalorder %v1520, 0
        %vm1697 = vcmp.lt.s32.totalorder %v1527, 0
        %vm1698 = vcmp.lt.s32.totalorder %v1534, 0
        %vm1699 = vcmp.lt.s32.totalorder %v1541, 0
        %vm1700 = vcmp.lt.s32.totalorder %v1548, 0
        %vm1701 = vcmp.lt.s32.totalorder %v1555, 0
        %vm1702 = vcmp.lt.s32.totalorder %v1562, 0
        %vm1703 = vcmp.lt.s32.totalorder %v1569, 0
        %vm1704 = vcmp.lt.s32.totalorder %v1576, 0
        %vm1705 = vmand %vm1641, %vm1577
        %vm1706 = vmand %vm1642, %vm1578
        %vm1707 = vmand %vm1643, %vm1579
        %vm1708 = vmand %vm1644, %vm1580
        %vm1709 = vmand %vm1645, %vm1581
        %vm1710 = vmand %vm1646, %vm1582
        %vm1711 = vmand %vm1647, %vm1583
        %vm1712 = vmand %vm1648, %vm1584
        %vm1713 = vmand %vm1649, %vm1585
        %vm1714 = vmand %vm1650, %vm1586
        %vm1715 = vmand %vm1651, %vm1587
        %vm1716 = vmand %vm1652, %vm1588
        %vm1717 = vmand %vm1653, %vm1589
        %vm1718 = vmand %vm1654, %vm1590
        %vm1719 = vmand %vm1655, %vm1591
        %vm1720 = vmand %vm1656, %vm1592
        %vm1721 = vmand %vm1657, %vm1593
        %vm1722 = vmand %vm1658, %vm1594
        %vm1723 = vmand %vm1659, %vm1595
        %vm1724 = vmand %vm1660, %vm1596
        %vm1725 = vmand %vm1661, %vm1597
        %vm1726 = vmand %vm1662, %vm1598
        %vm1727 = vmand %vm1663, %vm1599
        %vm1728 = vmand %vm1664, %vm1600
        %vm1729 = vmand %vm1665, %vm1601
        %vm1730 = vmand %vm1666, %vm1602
        %vm1731 = vmand %vm1667, %vm1603
        %vm1732 = vmand %vm1668, %vm1604
        %vm1733 = vmand %vm1669, %vm1605
        %vm1734 = vmand %vm1670, %vm1606
        %vm1735 = vmand %vm1671, %vm1607
        %vm1736 = vmand %vm1672, %vm1608
        %vm1737 = vmand %vm1673, %vm1609
        %vm1738 = vmand %vm1674, %vm1610
        %vm1739 = vmand %vm1675, %vm1611
        %vm1740 = vmand %vm1676, %vm1612
        %vm1741 = vmand %vm1677, %vm1613
        %vm1742 = vmand %vm1678, %vm1614
        %vm1743 = vmand %vm1679, %vm1615
        %vm1744 = vmand %vm1680, %vm1616
        %vm1745 = vmand %vm1681, %vm1617
        %vm1746 = vmand %vm1682, %vm1618
        %vm1747 = vmand %vm1683, %vm1619
        %vm1748 = vmand %vm1684, %vm1620
        %vm1749 = vmand %vm1685, %vm1621
        %vm1750 = vmand %vm1686, %vm1622
        %vm1751 = vmand %vm1687, %vm1623
        %vm1752 = vmand %vm1688, %vm1624
        %vm1753 = vmand %vm1689, %vm1625
        %vm1754 = vmand %vm1690, %vm1626
        %vm1755 = vmand %vm1691, %vm1627
        %vm1756 = vmand %vm1692, %vm1628
        %vm1757 = vmand %vm1693, %vm1629
        %vm1758 = vmand %vm1694, %vm1630
        %vm1759 = vmand %vm1695, %vm1631
        %vm1760 = vmand %vm1696, %vm1632
        %vm1761 = vmand %vm1697, %vm1633
        %vm1762 = vmand %vm1698, %vm1634
        %vm1763 = vmand %vm1699, %vm1635
        %vm1764 = vmand %vm1700, %vm1636
        %vm1765 = vmand %vm1701, %vm1637
        %vm1766 = vmand %vm1702, %vm1638
        %vm1767 = vmand %vm1703, %vm1639
        %vm1768 = vmand %vm1704, %vm1640
        %v1769 = vadd.s32 %v1135, 128
        %v1770 = vadd.s32 %v1142, 128
        %v1771 = vadd.s32 %v1149, 128
        %v1772 = vadd.s32 %v1156, 128
        %v1773 = vadd.s32 %v1163, 128
        %v1774 = vadd.s32 %v1170, 128
        %v1775 = vadd.s32 %v1177, 128
        %v1776 = vadd.s32 %v1184, 128
        %v1777 = vadd.s32 %v1191, 128
        %v1778 = vadd.s32 %v1198, 128
        %v1779 = vadd.s32 %v1205, 128
        %v1780 = vadd.s32 %v1212, 128
        %v1781 = vadd.s32 %v1219, 128
        %v1782 = vadd.s32 %v1226, 128
        %v1783 = vadd.s32 %v1233, 128
        %v1784 = vadd.s32 %v1240, 128
        %v1785 = vadd.s32 %v1247, 128
        %v1786 = vadd.s32 %v1254, 128
        %v1787 = vadd.s32 %v1261, 128
        %v1788 = vadd.s32 %v1268, 128
        %v1789 = vadd.s32 %v1275, 128
        %v1790 = vadd.s32 %v1282, 128
        %v1791 = vadd.s32 %v1289, 128
        %v1792 = vadd.s32 %v1296, 128
        %v1793 = vadd.s32 %v1303, 128
        %v1794 = vadd.s32 %v1310, 128
        %v1795 = vadd.s32 %v1317, 128
        %v1796 = vadd.s32 %v1324, 128
        %v1797 = vadd.s32 %v1331, 128
        %v1798 = vadd.s32 %v1338, 128
        %v1799 = vadd.s32 %v1345, 128
        %v1800 = vadd.s32 %v1352, 128
        %v1801 = vadd.s32 %v1359, 128
        %v1802 = vadd.s32 %v1366, 128
        %v1803 = vadd.s32 %v1373, 128
        %v1804 = vadd.s32 %v1380, 128
        %v1805 = vadd.s32 %v1387, 128
        %v1806 = vadd.s32 %v1394, 128
        %v1807 = vadd.s32 %v1401, 128
        %v1808 = vadd.s32 %v1408, 128
        %v1809 = vadd.s32 %v1415, 128
        %v1810 = vadd.s32 %v1422, 128
        %v1811 = vadd.s32 %v1429, 128
        %v1812 = vadd.s32 %v1436, 128
        %v1813 = vadd.s32 %v1443, 128
        %v1814 = vadd.s32 %v1450, 128
        %v1815 = vadd.s32 %v1457, 128
        %v1816 = vadd.s32 %v1464, 128
        %v1817 = vadd.s32 %v1471, 128
        %v1818 = vadd.s32 %v1478, 128
        %v1819 = vadd.s32 %v1485, 128
        %v1820 = vadd.s32 %v1492, 128
        %v1821 = vadd.s32 %v1499, 128
        %v1822 = vadd.s32 %v1506, 128
        %v1823 = vadd.s32 %v1513, 128
        %v1824 = vadd.s32 %v1520, 128
        %v1825 = vadd.s32 %v1527, 128
        %v1826 = vadd.s32 %v1534, 128
        %v1827 = vadd.s32 %v1541, 128
        %v1828 = vadd.s32 %v1548, 128
        %v1829 = vadd.s32 %v1555, 128
        %v1830 = vadd.s32 %v1562, 128
        %v1831 = vadd.s32 %v1569, 128
        %v1832 = vadd.s32 %v1576, 128
        %v1833 = vsel %vm1705, %v1769, %v1135
        %v1834 = vsel %vm1706, %v1770, %v1142
        %v1835 = vsel %vm1707, %v1771, %v1149
        %v1836 = vsel %vm1708, %v1772, %v1156
        %v1837 = vsel %vm1709, %v1773, %v1163
        %v1838 = vsel %vm1710, %v1774, %v1170
        %v1839 = vsel %vm1711, %v1775, %v1177
        %v1840 = vsel %vm1712, %v1776, %v1184
        %v1841 = vsel %vm1713, %v1777, %v1191
        %v1842 = vsel %vm1714, %v1778, %v1198
        %v1843 = vsel %vm1715, %v1779, %v1205
        %v1844 = vsel %vm1716, %v1780, %v1212
        %v1845 = vsel %vm1717, %v1781, %v1219
        %v1846 = vsel %vm1718, %v1782, %v1226
        %v1847 = vsel %vm1719, %v1783, %v1233
        %v1848 = vsel %vm1720, %v1784, %v1240
        %v1849 = vsel %vm1721, %v1785, %v1247
        %v1850 = vsel %vm1722, %v1786, %v1254
        %v1851 = vsel %vm1723, %v1787, %v1261
        %v1852 = vsel %vm1724, %v1788, %v1268
        %v1853 = vsel %vm1725, %v1789, %v1275
        %v1854 = vsel %vm1726, %v1790, %v1282
        %v1855 = vsel %vm1727, %v1791, %v1289
        %v1856 = vsel %vm1728, %v1792, %v1296
        %v1857 = vsel %vm1729, %v1793, %v1303
        %v1858 = vsel %vm1730, %v1794, %v1310
        %v1859 = vsel %vm1731, %v1795, %v1317
        %v1860 = vsel %vm1732, %v1796, %v1324
        %v1861 = vsel %vm1733, %v1797, %v1331
        %v1862 = vsel %vm1734, %v1798, %v1338
        %v1863 = vsel %vm1735, %v1799, %v1345
        %v1864 = vsel %vm1736, %v1800, %v1352
        %v1865 = vsel %vm1737, %v1801, %v1359
        %v1866 = vsel %vm1738, %v1802, %v1366
        %v1867 = vsel %vm1739, %v1803, %v1373
        %v1868 = vsel %vm1740, %v1804, %v1380
        %v1869 = vsel %vm1741, %v1805, %v1387
        %v1870 = vsel %vm1742, %v1806, %v1394
        %v1871 = vsel %vm1743, %v1807, %v1401
        %v1872 = vsel %vm1744, %v1808, %v1408
        %v1873 = vsel %vm1745, %v1809, %v1415
        %v1874 = vsel %vm1746, %v1810, %v1422
        %v1875 = vsel %vm1747, %v1811, %v1429
        %v1876 = vsel %vm1748, %v1812, %v1436
        %v1877 = vsel %vm1749, %v1813, %v1443
        %v1878 = vsel %vm1750, %v1814, %v1450
        %v1879 = vsel %vm1751, %v1815, %v1457
        %v1880 = vsel %vm1752, %v1816, %v1464
        %v1881 = vsel %vm1753, %v1817, %v1471
        %v1882 = vsel %vm1754, %v1818, %v1478
        %v1883 = vsel %vm1755, %v1819, %v1485
        %v1884 = vsel %vm1756, %v1820, %v1492
        %v1885 = vsel %vm1757, %v1821, %v1499
        %v1886 = vsel %vm1758, %v1822, %v1506
        %v1887 = vsel %vm1759, %v1823, %v1513
        %v1888 = vsel %vm1760, %v1824, %v1520
        %v1889 = vsel %vm1761, %v1825, %v1527
        %v1890 = vsel %vm1762, %v1826, %v1534
        %v1891 = vsel %vm1763, %v1827, %v1541
        %v1892 = vsel %vm1764, %v1828, %v1548
        %v1893 = vsel %vm1765, %v1829, %v1555
        %v1894 = vsel %vm1766, %v1830, %v1562
        %v1895 = vsel %vm1767, %v1831, %v1569
        %v1896 = vsel %vm1768, %v1832, %v1576
        %vm1897 = vcmp.eq.s32.totalorder %v1833, 0
        %vm1898 = vcmp.eq.s32.totalorder %v1834, 0
        %vm1899 = vcmp.eq.s32.totalorder %v1835, 0
        %vm1900 = vcmp.eq.s32.totalorder %v1836, 0
        %vm1901 = vcmp.eq.s32.totalorder %v1837, 0
        %vm1902 = vcmp.eq.s32.totalorder %v1838, 0
        %vm1903 = vcmp.eq.s32.totalorder %v1839, 0
        %vm1904 = vcmp.eq.s32.totalorder %v1840, 0
        %vm1905 = vcmp.eq.s32.totalorder %v1841, 0
        %vm1906 = vcmp.eq.s32.totalorder %v1842, 0
        %vm1907 = vcmp.eq.s32.totalorder %v1843, 0
        %vm1908 = vcmp.eq.s32.totalorder %v1844, 0
        %vm1909 = vcmp.eq.s32.totalorder %v1845, 0
        %vm1910 = vcmp.eq.s32.totalorder %v1846, 0
        %vm1911 = vcmp.eq.s32.totalorder %v1847, 0
        %vm1912 = vcmp.eq.s32.totalorder %v1848, 0
        %vm1913 = vcmp.eq.s32.totalorder %v1849, 0
        %vm1914 = vcmp.eq.s32.totalorder %v1850, 0
        %vm1915 = vcmp.eq.s32.totalorder %v1851, 0
        %vm1916 = vcmp.eq.s32.totalorder %v1852, 0
        %vm1917 = vcmp.eq.s32.totalorder %v1853, 0
        %vm1918 = vcmp.eq.s32.totalorder %v1854, 0
        %vm1919 = vcmp.eq.s32.totalorder %v1855, 0
        %vm1920 = vcmp.eq.s32.totalorder %v1856, 0
        %vm1921 = vcmp.eq.s32.totalorder %v1857, 0
        %vm1922 = vcmp.eq.s32.totalorder %v1858, 0
        %vm1923 = vcmp.eq.s32.totalorder %v1859, 0
        %vm1924 = vcmp.eq.s32.totalorder %v1860, 0
        %vm1925 = vcmp.eq.s32.totalorder %v1861, 0
        %vm1926 = vcmp.eq.s32.totalorder %v1862, 0
        %vm1927 = vcmp.eq.s32.totalorder %v1863, 0
        %vm1928 = vcmp.eq.s32.totalorder %v1864, 0
        %vm1929 = vcmp.eq.s32.totalorder %v1865, 0
        %vm1930 = vcmp.eq.s32.totalorder %v1866, 0
        %vm1931 = vcmp.eq.s32.totalorder %v1867, 0
        %vm1932 = vcmp.eq.s32.totalorder %v1868, 0
        %vm1933 = vcmp.eq.s32.totalorder %v1869, 0
        %vm1934 = vcmp.eq.s32.totalorder %v1870, 0
        %vm1935 = vcmp.eq.s32.totalorder %v1871, 0
        %vm1936 = vcmp.eq.s32.totalorder %v1872, 0
        %vm1937 = vcmp.eq.s32.totalorder %v1873, 0
        %vm1938 = vcmp.eq.s32.totalorder %v1874, 0
        %vm1939 = vcmp.eq.s32.totalorder %v1875, 0
        %vm1940 = vcmp.eq.s32.totalorder %v1876, 0
        %vm1941 = vcmp.eq.s32.totalorder %v1877, 0
        %vm1942 = vcmp.eq.s32.totalorder %v1878, 0
        %vm1943 = vcmp.eq.s32.totalorder %v1879, 0
        %vm1944 = vcmp.eq.s32.totalorder %v1880, 0
        %vm1945 = vcmp.eq.s32.totalorder %v1881, 0
        %vm1946 = vcmp.eq.s32.totalorder %v1882, 0
        %vm1947 = vcmp.eq.s32.totalorder %v1883, 0
        %vm1948 = vcmp.eq.s32.totalorder %v1884, 0
        %vm1949 = vcmp.eq.s32.totalorder %v1885, 0
        %vm1950 = vcmp.eq.s32.totalorder %v1886, 0
        %vm1951 = vcmp.eq.s32.totalorder %v1887, 0
        %vm1952 = vcmp.eq.s32.totalorder %v1888, 0
        %vm1953 = vcmp.eq.s32.totalorder %v1889, 0
        %vm1954 = vcmp.eq.s32.totalorder %v1890, 0
        %vm1955 = vcmp.eq.s32.totalorder %v1891, 0
        %vm1956 = vcmp.eq.s32.totalorder %v1892, 0
        %vm1957 = vcmp.eq.s32.totalorder %v1893, 0
        %vm1958 = vcmp.eq.s32.totalorder %v1894, 0
        %vm1959 = vcmp.eq.s32.totalorder %v1895, 0
        %vm1960 = vcmp.eq.s32.totalorder %v1896, 0
        %v1961 = vrot.slane %v1000, 7
        %v1962 = vrot.slane %v1001, 7
        %v1963 = vrot.slane %v1002, 7
        %v1964 = vrot.slane %v1003, 7
        %v1965 = vrot.slane %v1004, 7
        %v1966 = vrot.slane %v1005, 7
        %v1967 = vrot.slane %v1006, 7
        %v1968 = vrot.slane %v1007, 7
        %v1969 = vrot.slane %v1008, 7
        %v1970 = vrot.slane %v1009, 7
        %v1971 = vrot.slane %v1010, 7
        %v1972 = vrot.slane %v1011, 7
        %v1973 = vrot.slane %v1012, 7
        %v1974 = vrot.slane %v1013, 7
        %v1975 = vrot.slane %v1014, 7
        %v1976 = vrot.slane %v1015, 7
        %v1977 = vrot.slane %v1016, 7
        %v1978 = vrot.slane %v1017, 7
        %v1979 = vrot.slane %v1018, 7
        %v1980 = vrot.slane %v1019, 7
        %v1981 = vrot.slane %v1020, 7
        %v1982 = vrot.slane %v1021, 7
        %v1983 = vrot.slane %v1022, 7
        %v1984 = vrot.slane %v1023, 7
        %v1985 = vrot.slane %v1024, 7
        %v1986 = vrot.slane %v1025, 7
        %v1987 = vrot.slane %v1026, 7
        %v1988 = vrot.slane %v1027, 7
        %v1989 = vrot.slane %v1028, 7
        %v1990 = vrot.slane %v1029, 7
        %v1991 = vrot.slane %v1030, 7
        %v1992 = vrot.slane %v1031, 7
        %v1993 = vrot.slane %v1032, 7
        %v1994 = vrot.slane %v1033, 7
        %v1995 = vrot.slane %v1034, 7
        %v1996 = vrot.slane %v1035, 7
        %v1997 = vrot.slane %v1036, 7
        %v1998 = vrot.slane %v1037, 7
        %v1999 = vrot.slane %v1038, 7
        %v2000 = vrot.slane %v1039, 7
        %v2001 = vrot.slane %v1040, 7
        %v2002 = vrot.slane %v1041, 7
        %v2003 = vrot.slane %v1042, 7
        %v2004 = vrot.slane %v1043, 7
        %v2005 = vrot.slane %v1044, 7
        %v2006 = vrot.slane %v1045, 7
        %v2007 = vrot.slane %v1046, 7
        %v2008 = vrot.slane %v1047, 7
        %v2009 = vrot.slane %v1048, 7
        %v2010 = vrot.slane %v1049, 7
        %v2011 = vrot.slane %v1050, 7
        %v2012 = vrot.slane %v1051, 7
        %v2013 = vrot.slane %v1052, 7
        %v2014 = vrot.slane %v1053, 7
        %v2015 = vrot.slane %v1054, 7
        %v2016 = vrot.slane %v1055, 7
        %v2017 = vrot.slane %v1056, 7
        %v2018 = vrot.slane %v1057, 7
        %v2019 = vrot.slane %v1058, 7
        %v2020 = vrot.slane %v1059, 7
        %v2021 = vrot.slane %v1060, 7
        %v2022 = vrot.slane %v1061, 7
        %v2023 = vrot.slane %v1062, 7
        %v2024 = vrot.slane %v1063, 7
        %vm2025 = vcmp.lt.s32.totalorder %v1065, 1
        %v2026 = vsel %vm2025, %v2023, %v2024
        %v2027 = vsel %vm2025, %v2022, %v2023
        %v2028 = vsel %vm2025, %v2021, %v2022
        %v2029 = vsel %vm2025, %v2020, %v2021
        %v2030 = vsel %vm2025, %v2019, %v2020
        %v2031 = vsel %vm2025, %v2018, %v2019
        %v2032 = vsel %vm2025, %v2017, %v2018
        %v2033 = vsel %vm2025, %v2016, %v2017
        %v2034 = vsel %vm2025, %v2015, %v2016
        %v2035 = vsel %vm2025, %v2014, %v2015
        %v2036 = vsel %vm2025, %v2013, %v2014
        %v2037 = vsel %vm2025, %v2012, %v2013
        %v2038 = vsel %vm2025, %v2011, %v2012
        %v2039 = vsel %vm2025, %v2010, %v2011
        %v2040 = vsel %vm2025, %v2009, %v2010
        %v2041 = vsel %vm2025, %v2008, %v2009
        %v2042 = vsel %vm2025, %v2007, %v2008
        %v2043 = vsel %vm2025, %v2006, %v2007
        %v2044 = vsel %vm2025, %v2005, %v2006
        %v2045 = vsel %vm2025, %v2004, %v2005
        %v2046 = vsel %vm2025, %v2003, %v2004
        %v2047 = vsel %vm2025, %v2002, %v2003
        %v2048 = vsel %vm2025, %v2001, %v2002
        %v2049 = vsel %vm2025, %v2000, %v2001
        %v2050 = vsel %vm2025, %v1999, %v2000
        %v2051 = vsel %vm2025, %v1998, %v1999
        %v2052 = vsel %vm2025, %v1997, %v1998
        %v2053 = vsel %vm2025, %v1996, %v1997
        %v2054 = vsel %vm2025, %v1995, %v1996
        %v2055 = vsel %vm2025, %v1994, %v1995
        %v2056 = vsel %vm2025, %v1993, %v1994
        %v2057 = vsel %vm2025, %v1992, %v1993
        %v2058 = vsel %vm2025, %v1991, %v1992
        %v2059 = vsel %vm2025, %v1990, %v1991
        %v2060 = vsel %vm2025, %v1989, %v1990
        %v2061 = vsel %vm2025, %v1988, %v1989
        %v2062 = vsel %vm2025, %v1987, %v1988
        %v2063 = vsel %vm2025, %v1986, %v1987
        %v2064 = vsel %vm2025, %v1985, %v1986
        %v2065 = vsel %vm2025, %v1984, %v1985
        %v2066 = vsel %vm2025, %v1983, %v1984
        %v2067 = vsel %vm2025, %v1982, %v1983
        %v2068 = vsel %vm2025, %v1981, %v1982
        %v2069 = vsel %vm2025, %v1980, %v1981
        %v2070 = vsel %vm2025, %v1979, %v1980
        %v2071 = vsel %vm2025, %v1978, %v1979
        %v2072 = vsel %vm2025, %v1977, %v1978
        %v2073 = vsel %vm2025, %v1976, %v1977
        %v2074 = vsel %vm2025, %v1975, %v1976
        %v2075 = vsel %vm2025, %v1974, %v1975
        %v2076 = vsel %vm2025, %v1973, %v1974
        %v2077 = vsel %vm2025, %v1972, %v1973
        %v2078 = vsel %vm2025, %v1971, %v1972
        %v2079 = vsel %vm2025, %v1970, %v1971
        %v2080 = vsel %vm2025, %v1969, %v1970
        %v2081 = vsel %vm2025, %v1968, %v1969
        %v2082 = vsel %vm2025, %v1967, %v1968
        %v2083 = vsel %vm2025, %v1966, %v1967
        %v2084 = vsel %vm2025, %v1965, %v1966
        %v2085 = vsel %vm2025, %v1964, %v1965
        %v2086 = vsel %vm2025, %v1963, %v1964
        %v2087 = vsel %vm2025, %v1962, %v1963
        %v2088 = vsel %vm2025, %v1961, %v1962
        %v2089 = vsel %vm2025, %v2024, %v1961
        %v2090 = vsel %vm1897, 0.0, %v2089
        %v2091 = vsel %vm1898, 0.0, %v2088
        %v2092 = vsel %vm1899, 0.0, %v2087
        %v2093 = vsel %vm1900, 0.0, %v2086
        %v2094 = vsel %vm1901, 0.0, %v2085
        %v2095 = vsel %vm1902, 0.0, %v2084
        %v2096 = vsel %vm1903, 0.0, %v2083
        %v2097 = vsel %vm1904, 0.0, %v2082
        %v2098 = vsel %vm1905, 0.0, %v2081
        %v2099 = vsel %vm1906, 0.0, %v2080
        %v2100 = vsel %vm1907, 0.0, %v2079
        %v2101 = vsel %vm1908, 0.0, %v2078
        %v2102 = vsel %vm1909, 0.0, %v2077
        %v2103 = vsel %vm1910, 0.0, %v2076
        %v2104 = vsel %vm1911, 0.0, %v2075
        %v2105 = vsel %vm1912, 0.0, %v2074
        %v2106 = vsel %vm1913, 0.0, %v2073
        %v2107 = vsel %vm1914, 0.0, %v2072
        %v2108 = vsel %vm1915, 0.0, %v2071
        %v2109 = vsel %vm1916, 0.0, %v2070
        %v2110 = vsel %vm1917, 0.0, %v2069
        %v2111 = vsel %vm1918, 0.0, %v2068
        %v2112 = vsel %vm1919, 0.0, %v2067
        %v2113 = vsel %vm1920, 0.0, %v2066
        %v2114 = vsel %vm1921, 0.0, %v2065
        %v2115 = vsel %vm1922, 0.0, %v2064
        %v2116 = vsel %vm1923, 0.0, %v2063
        %v2117 = vsel %vm1924, 0.0, %v2062
        %v2118 = vsel %vm1925, 0.0, %v2061
        %v2119 = vsel %vm1926, 0.0, %v2060
        %v2120 = vsel %vm1927, 0.0, %v2059
        %v2121 = vsel %vm1928, 0.0, %v2058
        %v2122 = vsel %vm1929, 0.0, %v2057
        %v2123 = vsel %vm1930, 0.0, %v2056
        %v2124 = vsel %vm1931, 0.0, %v2055
        %v2125 = vsel %vm1932, 0.0, %v2054
        %v2126 = vsel %vm1933, 0.0, %v2053
        %v2127 = vsel %vm1934, 0.0, %v2052
        %v2128 = vsel %vm1935, 0.0, %v2051
        %v2129 = vsel %vm1936, 0.0, %v2050
        %v2130 = vsel %vm1937, 0.0, %v2049
        %v2131 = vsel %vm1938, 0.0, %v2048
        %v2132 = vsel %vm1939, 0.0, %v2047
        %v2133 = vsel %vm1940, 0.0, %v2046
        %v2134 = vsel %vm1941, 0.0, %v2045
        %v2135 = vsel %vm1942, 0.0, %v2044
        %v2136 = vsel %vm1943, 0.0, %v2043
        %v2137 = vsel %vm1944, 0.0, %v2042
        %v2138 = vsel %vm1945, 0.0, %v2041
        %v2139 = vsel %vm1946, 0.0, %v2040
        %v2140 = vsel %vm1947, 0.0, %v2039
        %v2141 = vsel %vm1948, 0.0, %v2038
        %v2142 = vsel %vm1949, 0.0, %v2037
        %v2143 = vsel %vm1950, 0.0, %v2036
        %v2144 = vsel %vm1951, 0.0, %v2035
        %v2145 = vsel %vm1952, 0.0, %v2034
        %v2146 = vsel %vm1953, 0.0, %v2033
        %v2147 = vsel %vm1954, 0.0, %v2032
        %v2148 = vsel %vm1955, 0.0, %v2031
        %v2149 = vsel %vm1956, 0.0, %v2030
        %v2150 = vsel %vm1957, 0.0, %v2029
        %v2151 = vsel %vm1958, 0.0, %v2028
        %v2152 = vsel %vm1959, 0.0, %v2027
        %v2153 = vsel %vm1960, 0.0, %v2026
        %v2154 = vpack.c.bf16 %v2091, %v2090
        %v2155 = vpack.c.bf16 %v2093, %v2092
        %v2156 = vpack.c.bf16 %v2095, %v2094
        %v2157 = vpack.c.bf16 %v2097, %v2096
        %v2158 = vpack.c.bf16 %v2099, %v2098
        %v2159 = vpack.c.bf16 %v2101, %v2100
        %v2160 = vpack.c.bf16 %v2103, %v2102
        %v2161 = vpack.c.bf16 %v2105, %v2104
        %v2162 = vpack.c.bf16 %v2107, %v2106
        %v2163 = vpack.c.bf16 %v2109, %v2108
        %v2164 = vpack.c.bf16 %v2111, %v2110
        %v2165 = vpack.c.bf16 %v2113, %v2112
        %v2166 = vpack.c.bf16 %v2115, %v2114
        %v2167 = vpack.c.bf16 %v2117, %v2116
        %v2168 = vpack.c.bf16 %v2119, %v2118
        %v2169 = vpack.c.bf16 %v2121, %v2120
        %v2170 = vpack.c.bf16 %v2123, %v2122
        %v2171 = vpack.c.bf16 %v2125, %v2124
        %v2172 = vpack.c.bf16 %v2127, %v2126
        %v2173 = vpack.c.bf16 %v2129, %v2128
        %v2174 = vpack.c.bf16 %v2131, %v2130
        %v2175 = vpack.c.bf16 %v2133, %v2132
        %v2176 = vpack.c.bf16 %v2135, %v2134
        %v2177 = vpack.c.bf16 %v2137, %v2136
        %v2178 = vpack.c.bf16 %v2139, %v2138
        %v2179 = vpack.c.bf16 %v2141, %v2140
        %v2180 = vpack.c.bf16 %v2143, %v2142
        %v2181 = vpack.c.bf16 %v2145, %v2144
        %v2182 = vpack.c.bf16 %v2147, %v2146
        %v2183 = vpack.c.bf16 %v2149, %v2148
        %v2184 = vpack.c.bf16 %v2151, %v2150
        %v2185 = vpack.c.bf16 %v2153, %v2152
        %vm2186 = vcmp.eq.s32.totalorder %v1833, 127
        %vm2187 = vcmp.eq.s32.totalorder %v1834, 127
        %vm2188 = vcmp.eq.s32.totalorder %v1835, 127
        %vm2189 = vcmp.eq.s32.totalorder %v1836, 127
        %vm2190 = vcmp.eq.s32.totalorder %v1837, 127
        %vm2191 = vcmp.eq.s32.totalorder %v1838, 127
        %vm2192 = vcmp.eq.s32.totalorder %v1839, 127
        %vm2193 = vcmp.eq.s32.totalorder %v1840, 127
        %vm2194 = vcmp.eq.s32.totalorder %v1841, 127
        %vm2195 = vcmp.eq.s32.totalorder %v1842, 127
        %vm2196 = vcmp.eq.s32.totalorder %v1843, 127
        %vm2197 = vcmp.eq.s32.totalorder %v1844, 127
        %vm2198 = vcmp.eq.s32.totalorder %v1845, 127
        %vm2199 = vcmp.eq.s32.totalorder %v1846, 127
        %vm2200 = vcmp.eq.s32.totalorder %v1847, 127
        %vm2201 = vcmp.eq.s32.totalorder %v1848, 127
        %vm2202 = vcmp.eq.s32.totalorder %v1849, 127
        %vm2203 = vcmp.eq.s32.totalorder %v1850, 127
        %vm2204 = vcmp.eq.s32.totalorder %v1851, 127
        %vm2205 = vcmp.eq.s32.totalorder %v1852, 127
        %vm2206 = vcmp.eq.s32.totalorder %v1853, 127
        %vm2207 = vcmp.eq.s32.totalorder %v1854, 127
        %vm2208 = vcmp.eq.s32.totalorder %v1855, 127
        %vm2209 = vcmp.eq.s32.totalorder %v1856, 127
        %vm2210 = vcmp.eq.s32.totalorder %v1857, 127
        %vm2211 = vcmp.eq.s32.totalorder %v1858, 127
        %vm2212 = vcmp.eq.s32.totalorder %v1859, 127
        %vm2213 = vcmp.eq.s32.totalorder %v1860, 127
        %vm2214 = vcmp.eq.s32.totalorder %v1861, 127
        %vm2215 = vcmp.eq.s32.totalorder %v1862, 127
        %vm2216 = vcmp.eq.s32.totalorder %v1863, 127
        %vm2217 = vcmp.eq.s32.totalorder %v1864, 127
        %vm2218 = vcmp.eq.s32.totalorder %v1865, 127
        %vm2219 = vcmp.eq.s32.totalorder %v1866, 127
        %vm2220 = vcmp.eq.s32.totalorder %v1867, 127
        %vm2221 = vcmp.eq.s32.totalorder %v1868, 127
        %vm2222 = vcmp.eq.s32.totalorder %v1869, 127
        %vm2223 = vcmp.eq.s32.totalorder %v1870, 127
        %vm2224 = vcmp.eq.s32.totalorder %v1871, 127
        %vm2225 = vcmp.eq.s32.totalorder %v1872, 127
        %vm2226 = vcmp.eq.s32.totalorder %v1873, 127
        %vm2227 = vcmp.eq.s32.totalorder %v1874, 127
        %vm2228 = vcmp.eq.s32.totalorder %v1875, 127
        %vm2229 = vcmp.eq.s32.totalorder %v1876, 127
        %vm2230 = vcmp.eq.s32.totalorder %v1877, 127
        %vm2231 = vcmp.eq.s32.totalorder %v1878, 127
        %vm2232 = vcmp.eq.s32.totalorder %v1879, 127
        %vm2233 = vcmp.eq.s32.totalorder %v1880, 127
        %vm2234 = vcmp.eq.s32.totalorder %v1881, 127
        %vm2235 = vcmp.eq.s32.totalorder %v1882, 127
        %vm2236 = vcmp.eq.s32.totalorder %v1883, 127
        %vm2237 = vcmp.eq.s32.totalorder %v1884, 127
        %vm2238 = vcmp.eq.s32.totalorder %v1885, 127
        %vm2239 = vcmp.eq.s32.totalorder %v1886, 127
        %vm2240 = vcmp.eq.s32.totalorder %v1887, 127
        %vm2241 = vcmp.eq.s32.totalorder %v1888, 127
        %vm2242 = vcmp.eq.s32.totalorder %v1889, 127
        %vm2243 = vcmp.eq.s32.totalorder %v1890, 127
        %vm2244 = vcmp.eq.s32.totalorder %v1891, 127
        %vm2245 = vcmp.eq.s32.totalorder %v1892, 127
        %vm2246 = vcmp.eq.s32.totalorder %v1893, 127
        %vm2247 = vcmp.eq.s32.totalorder %v1894, 127
        %vm2248 = vcmp.eq.s32.totalorder %v1895, 127
        %vm2249 = vcmp.eq.s32.totalorder %v1896, 127
        %v2250 = vrot.slane %v1000, 1
        %v2251 = vrot.slane %v1001, 1
        %v2252 = vrot.slane %v1002, 1
        %v2253 = vrot.slane %v1003, 1
        %v2254 = vrot.slane %v1004, 1
        %v2255 = vrot.slane %v1005, 1
        %v2256 = vrot.slane %v1006, 1
        %v2257 = vrot.slane %v1007, 1
        %v2258 = vrot.slane %v1008, 1
        %v2259 = vrot.slane %v1009, 1
        %v2260 = vrot.slane %v1010, 1
        %v2261 = vrot.slane %v1011, 1
        %v2262 = vrot.slane %v1012, 1
        %v2263 = vrot.slane %v1013, 1
        %v2264 = vrot.slane %v1014, 1
        %v2265 = vrot.slane %v1015, 1
        %v2266 = vrot.slane %v1016, 1
        %v2267 = vrot.slane %v1017, 1
        %v2268 = vrot.slane %v1018, 1
        %v2269 = vrot.slane %v1019, 1
        %v2270 = vrot.slane %v1020, 1
        %v2271 = vrot.slane %v1021, 1
        %v2272 = vrot.slane %v1022, 1
        %v2273 = vrot.slane %v1023, 1
        %v2274 = vrot.slane %v1024, 1
        %v2275 = vrot.slane %v1025, 1
        %v2276 = vrot.slane %v1026, 1
        %v2277 = vrot.slane %v1027, 1
        %v2278 = vrot.slane %v1028, 1
        %v2279 = vrot.slane %v1029, 1
        %v2280 = vrot.slane %v1030, 1
        %v2281 = vrot.slane %v1031, 1
        %v2282 = vrot.slane %v1032, 1
        %v2283 = vrot.slane %v1033, 1
        %v2284 = vrot.slane %v1034, 1
        %v2285 = vrot.slane %v1035, 1
        %v2286 = vrot.slane %v1036, 1
        %v2287 = vrot.slane %v1037, 1
        %v2288 = vrot.slane %v1038, 1
        %v2289 = vrot.slane %v1039, 1
        %v2290 = vrot.slane %v1040, 1
        %v2291 = vrot.slane %v1041, 1
        %v2292 = vrot.slane %v1042, 1
        %v2293 = vrot.slane %v1043, 1
        %v2294 = vrot.slane %v1044, 1
        %v2295 = vrot.slane %v1045, 1
        %v2296 = vrot.slane %v1046, 1
        %v2297 = vrot.slane %v1047, 1
        %v2298 = vrot.slane %v1048, 1
        %v2299 = vrot.slane %v1049, 1
        %v2300 = vrot.slane %v1050, 1
        %v2301 = vrot.slane %v1051, 1
        %v2302 = vrot.slane %v1052, 1
        %v2303 = vrot.slane %v1053, 1
        %v2304 = vrot.slane %v1054, 1
        %v2305 = vrot.slane %v1055, 1
        %v2306 = vrot.slane %v1056, 1
        %v2307 = vrot.slane %v1057, 1
        %v2308 = vrot.slane %v1058, 1
        %v2309 = vrot.slane %v1059, 1
        %v2310 = vrot.slane %v1060, 1
        %v2311 = vrot.slane %v1061, 1
        %v2312 = vrot.slane %v1062, 1
        %v2313 = vrot.slane %v1063, 1
        %vm2314 = vcmp.lt.s32.totalorder %v1065, 7
        %v2315 = vsel %vm2314, %v2312, %v2313
        %v2316 = vsel %vm2314, %v2311, %v2312
        %v2317 = vsel %vm2314, %v2310, %v2311
        %v2318 = vsel %vm2314, %v2309, %v2310
        %v2319 = vsel %vm2314, %v2308, %v2309
        %v2320 = vsel %vm2314, %v2307, %v2308
        %v2321 = vsel %vm2314, %v2306, %v2307
        %v2322 = vsel %vm2314, %v2305, %v2306
        %v2323 = vsel %vm2314, %v2304, %v2305
        %v2324 = vsel %vm2314, %v2303, %v2304
        %v2325 = vsel %vm2314, %v2302, %v2303
        %v2326 = vsel %vm2314, %v2301, %v2302
        %v2327 = vsel %vm2314, %v2300, %v2301
        %v2328 = vsel %vm2314, %v2299, %v2300
        %v2329 = vsel %vm2314, %v2298, %v2299
        %v2330 = vsel %vm2314, %v2297, %v2298
        %v2331 = vsel %vm2314, %v2296, %v2297
        %v2332 = vsel %vm2314, %v2295, %v2296
        %v2333 = vsel %vm2314, %v2294, %v2295
        %v2334 = vsel %vm2314, %v2293, %v2294
        %v2335 = vsel %vm2314, %v2292, %v2293
        %v2336 = vsel %vm2314, %v2291, %v2292
        %v2337 = vsel %vm2314, %v2290, %v2291
        %v2338 = vsel %vm2314, %v2289, %v2290
        %v2339 = vsel %vm2314, %v2288, %v2289
        %v2340 = vsel %vm2314, %v2287, %v2288
        %v2341 = vsel %vm2314, %v2286, %v2287
        %v2342 = vsel %vm2314, %v2285, %v2286
        %v2343 = vsel %vm2314, %v2284, %v2285
        %v2344 = vsel %vm2314, %v2283, %v2284
        %v2345 = vsel %vm2314, %v2282, %v2283
        %v2346 = vsel %vm2314, %v2281, %v2282
        %v2347 = vsel %vm2314, %v2280, %v2281
        %v2348 = vsel %vm2314, %v2279, %v2280
        %v2349 = vsel %vm2314, %v2278, %v2279
        %v2350 = vsel %vm2314, %v2277, %v2278
        %v2351 = vsel %vm2314, %v2276, %v2277
        %v2352 = vsel %vm2314, %v2275, %v2276
        %v2353 = vsel %vm2314, %v2274, %v2275
        %v2354 = vsel %vm2314, %v2273, %v2274
        %v2355 = vsel %vm2314, %v2272, %v2273
        %v2356 = vsel %vm2314, %v2271, %v2272
        %v2357 = vsel %vm2314, %v2270, %v2271
        %v2358 = vsel %vm2314, %v2269, %v2270
        %v2359 = vsel %vm2314, %v2268, %v2269
        %v2360 = vsel %vm2314, %v2267, %v2268
        %v2361 = vsel %vm2314, %v2266, %v2267
        %v2362 = vsel %vm2314, %v2265, %v2266
        %v2363 = vsel %vm2314, %v2264, %v2265
        %v2364 = vsel %vm2314, %v2263, %v2264
        %v2365 = vsel %vm2314, %v2262, %v2263
        %v2366 = vsel %vm2314, %v2261, %v2262
        %v2367 = vsel %vm2314, %v2260, %v2261
        %v2368 = vsel %vm2314, %v2259, %v2260
        %v2369 = vsel %vm2314, %v2258, %v2259
        %v2370 = vsel %vm2314, %v2257, %v2258
        %v2371 = vsel %vm2314, %v2256, %v2257
        %v2372 = vsel %vm2314, %v2255, %v2256
        %v2373 = vsel %vm2314, %v2254, %v2255
        %v2374 = vsel %vm2314, %v2253, %v2254
        %v2375 = vsel %vm2314, %v2252, %v2253
        %v2376 = vsel %vm2314, %v2251, %v2252
        %v2377 = vsel %vm2314, %v2250, %v2251
        %v2378 = vsel %vm2314, %v2313, %v2250
        %v2379 = vsel %vm2186, 0.0, %v2377
        %v2380 = vsel %vm2187, 0.0, %v2376
        %v2381 = vsel %vm2188, 0.0, %v2375
        %v2382 = vsel %vm2189, 0.0, %v2374
        %v2383 = vsel %vm2190, 0.0, %v2373
        %v2384 = vsel %vm2191, 0.0, %v2372
        %v2385 = vsel %vm2192, 0.0, %v2371
        %v2386 = vsel %vm2193, 0.0, %v2370
        %v2387 = vsel %vm2194, 0.0, %v2369
        %v2388 = vsel %vm2195, 0.0, %v2368
        %v2389 = vsel %vm2196, 0.0, %v2367
        %v2390 = vsel %vm2197, 0.0, %v2366
        %v2391 = vsel %vm2198, 0.0, %v2365
        %v2392 = vsel %vm2199, 0.0, %v2364
        %v2393 = vsel %vm2200, 0.0, %v2363
        %v2394 = vsel %vm2201, 0.0, %v2362
        %v2395 = vsel %vm2202, 0.0, %v2361
        %v2396 = vsel %vm2203, 0.0, %v2360
        %v2397 = vsel %vm2204, 0.0, %v2359
        %v2398 = vsel %vm2205, 0.0, %v2358
        %v2399 = vsel %vm2206, 0.0, %v2357
        %v2400 = vsel %vm2207, 0.0, %v2356
        %v2401 = vsel %vm2208, 0.0, %v2355
        %v2402 = vsel %vm2209, 0.0, %v2354
        %v2403 = vsel %vm2210, 0.0, %v2353
        %v2404 = vsel %vm2211, 0.0, %v2352
        %v2405 = vsel %vm2212, 0.0, %v2351
        %v2406 = vsel %vm2213, 0.0, %v2350
        %v2407 = vsel %vm2214, 0.0, %v2349
        %v2408 = vsel %vm2215, 0.0, %v2348
        %v2409 = vsel %vm2216, 0.0, %v2347
        %v2410 = vsel %vm2217, 0.0, %v2346
        %v2411 = vsel %vm2218, 0.0, %v2345
        %v2412 = vsel %vm2219, 0.0, %v2344
        %v2413 = vsel %vm2220, 0.0, %v2343
        %v2414 = vsel %vm2221, 0.0, %v2342
        %v2415 = vsel %vm2222, 0.0, %v2341
        %v2416 = vsel %vm2223, 0.0, %v2340
        %v2417 = vsel %vm2224, 0.0, %v2339
        %v2418 = vsel %vm2225, 0.0, %v2338
        %v2419 = vsel %vm2226, 0.0, %v2337
        %v2420 = vsel %vm2227, 0.0, %v2336
        %v2421 = vsel %vm2228, 0.0, %v2335
        %v2422 = vsel %vm2229, 0.0, %v2334
        %v2423 = vsel %vm2230, 0.0, %v2333
        %v2424 = vsel %vm2231, 0.0, %v2332
        %v2425 = vsel %vm2232, 0.0, %v2331
        %v2426 = vsel %vm2233, 0.0, %v2330
        %v2427 = vsel %vm2234, 0.0, %v2329
        %v2428 = vsel %vm2235, 0.0, %v2328
        %v2429 = vsel %vm2236, 0.0, %v2327
        %v2430 = vsel %vm2237, 0.0, %v2326
        %v2431 = vsel %vm2238, 0.0, %v2325
        %v2432 = vsel %vm2239, 0.0, %v2324
        %v2433 = vsel %vm2240, 0.0, %v2323
        %v2434 = vsel %vm2241, 0.0, %v2322
        %v2435 = vsel %vm2242, 0.0, %v2321
        %v2436 = vsel %vm2243, 0.0, %v2320
        %v2437 = vsel %vm2244, 0.0, %v2319
        %v2438 = vsel %vm2245, 0.0, %v2318
        %v2439 = vsel %vm2246, 0.0, %v2317
        %v2440 = vsel %vm2247, 0.0, %v2316
        %v2441 = vsel %vm2248, 0.0, %v2315
        %v2442 = vsel %vm2249, 0.0, %v2378
        %v2443 = vpack.c.bf16 %v2380, %v2379
        %v2444 = vpack.c.bf16 %v2382, %v2381
        %v2445 = vpack.c.bf16 %v2384, %v2383
        %v2446 = vpack.c.bf16 %v2386, %v2385
        %v2447 = vpack.c.bf16 %v2388, %v2387
        %v2448 = vpack.c.bf16 %v2390, %v2389
        %v2449 = vpack.c.bf16 %v2392, %v2391
        %v2450 = vpack.c.bf16 %v2394, %v2393
        %v2451 = vpack.c.bf16 %v2396, %v2395
        %v2452 = vpack.c.bf16 %v2398, %v2397
        %v2453 = vpack.c.bf16 %v2400, %v2399
        %v2454 = vpack.c.bf16 %v2402, %v2401
        %v2455 = vpack.c.bf16 %v2404, %v2403
        %v2456 = vpack.c.bf16 %v2406, %v2405
        %v2457 = vpack.c.bf16 %v2408, %v2407
        %v2458 = vpack.c.bf16 %v2410, %v2409
        %v2459 = vpack.c.bf16 %v2412, %v2411
        %v2460 = vpack.c.bf16 %v2414, %v2413
        %v2461 = vpack.c.bf16 %v2416, %v2415
        %v2462 = vpack.c.bf16 %v2418, %v2417
        %v2463 = vpack.c.bf16 %v2420, %v2419
        %v2464 = vpack.c.bf16 %v2422, %v2421
        %v2465 = vpack.c.bf16 %v2424, %v2423
        %v2466 = vpack.c.bf16 %v2426, %v2425
        %v2467 = vpack.c.bf16 %v2428, %v2427
        %v2468 = vpack.c.bf16 %v2430, %v2429
        %v2469 = vpack.c.bf16 %v2432, %v2431
        %v2470 = vpack.c.bf16 %v2434, %v2433
        %v2471 = vpack.c.bf16 %v2436, %v2435
        %v2472 = vpack.c.bf16 %v2438, %v2437
        %v2473 = vpack.c.bf16 %v2440, %v2439
        %v2474 = vpack.c.bf16 %v2442, %v2441
        %v2475 = vpack.c.bf16 %v1001, %v1000
        %v2476 = vpack.c.bf16 %v1003, %v1002
        %v2477 = vpack.c.bf16 %v1005, %v1004
        %v2478 = vpack.c.bf16 %v1007, %v1006
        %v2479 = vpack.c.bf16 %v1009, %v1008
        %v2480 = vpack.c.bf16 %v1011, %v1010
        %v2481 = vpack.c.bf16 %v1013, %v1012
        %v2482 = vpack.c.bf16 %v1015, %v1014
        %v2483 = vpack.c.bf16 %v1017, %v1016
        %v2484 = vpack.c.bf16 %v1019, %v1018
        %v2485 = vpack.c.bf16 %v1021, %v1020
        %v2486 = vpack.c.bf16 %v1023, %v1022
        %v2487 = vpack.c.bf16 %v1025, %v1024
        %v2488 = vpack.c.bf16 %v1027, %v1026
        %v2489 = vpack.c.bf16 %v1029, %v1028
        %v2490 = vpack.c.bf16 %v1031, %v1030
        %v2491 = vpack.c.bf16 %v1033, %v1032
        %v2492 = vpack.c.bf16 %v1035, %v1034
        %v2493 = vpack.c.bf16 %v1037, %v1036
        %v2494 = vpack.c.bf16 %v1039, %v1038
        %v2495 = vpack.c.bf16 %v1041, %v1040
        %v2496 = vpack.c.bf16 %v1043, %v1042
        %v2497 = vpack.c.bf16 %v1045, %v1044
        %v2498 = vpack.c.bf16 %v1047, %v1046
        %v2499 = vpack.c.bf16 %v1049, %v1048
        %v2500 = vpack.c.bf16 %v1051, %v1050
        %v2501 = vpack.c.bf16 %v1053, %v1052
        %v2502 = vpack.c.bf16 %v1055, %v1054
        %v2503 = vpack.c.bf16 %v1057, %v1056
        %v2504 = vpack.c.bf16 %v1059, %v1058
        %v2505 = vpack.c.bf16 %v1061, %v1060
        %v2506 = vpack.c.bf16 %v1063, %v1062
        %v2507 = vld [vmem:[#allocation5] sm:$0xf]
        %v2508 = vld [vmem:[#allocation5 + $0x4] sm:$0xf]
        %v2509 = vld [vmem:[#allocation5 + $0x8] sm:$0xf]
        %v2510 = vld [vmem:[#allocation5 + $0xc] sm:$0xf]
        %v2511 = vld [vmem:[#allocation5 + $0x10] sm:$0xf]
        %v2512 = vld [vmem:[#allocation5 + $0x14] sm:$0xf]
        %v2513 = vld [vmem:[#allocation5 + $0x18] sm:$0xf]
        %v2514 = vld [vmem:[#allocation5 + $0x1c] sm:$0xf]
        %v2515 = vld [vmem:[#allocation5 + $0x20] sm:$0xf]
        %v2516 = vld [vmem:[#allocation5 + $0x24] sm:$0xf]
        %v2517 = vld [vmem:[#allocation5 + $0x28] sm:$0xf]
        %v2518 = vld [vmem:[#allocation5 + $0x2c] sm:$0xf]
        %v2519 = vld [vmem:[#allocation5 + $0x30] sm:$0xf]
        %v2520 = vld [vmem:[#allocation5 + $0x34] sm:$0xf]
        %v2521 = vld [vmem:[#allocation5 + $0x38] sm:$0xf]
        %v2522 = vld [vmem:[#allocation5 + $0x3c] sm:$0xf]
        %v2523 = vld [vmem:[#allocation5 + $0x40] sm:$0xf]
        %v2524 = vld [vmem:[#allocation5 + $0x44] sm:$0xf]
        %v2525 = vld [vmem:[#allocation5 + $0x48] sm:$0xf]
        %v2526 = vld [vmem:[#allocation5 + $0x4c] sm:$0xf]
        %v2527 = vld [vmem:[#allocation5 + $0x50] sm:$0xf]
        %v2528 = vld [vmem:[#allocation5 + $0x54] sm:$0xf]
        %v2529 = vld [vmem:[#allocation5 + $0x58] sm:$0xf]
        %v2530 = vld [vmem:[#allocation5 + $0x5c] sm:$0xf]
        %v2531 = vld [vmem:[#allocation5 + $0x60] sm:$0xf]
        %v2532 = vld [vmem:[#allocation5 + $0x64] sm:$0xf]
        %v2533 = vld [vmem:[#allocation5 + $0x68] sm:$0xf]
        %v2534 = vld [vmem:[#allocation5 + $0x6c] sm:$0xf]
        %v2535 = vld [vmem:[#allocation5 + $0x70] sm:$0xf]
        %v2536 = vld [vmem:[#allocation5 + $0x74] sm:$0xf]
        %v2537 = vld [vmem:[#allocation5 + $0x78] sm:$0xf]
        %v2538 = vld [vmem:[#allocation5 + $0x7c] sm:$0xf]
        %v2539 = vld [vmem:[#allocation5 + $0x80] sm:$0xf]
        %v2540 = vld [vmem:[#allocation5 + $0x84] sm:$0xf]
        %v2541 = vld [vmem:[#allocation5 + $0x88] sm:$0xf]
        %v2542 = vld [vmem:[#allocation5 + $0x8c] sm:$0xf]
        %v2543 = vld [vmem:[#allocation5 + $0x90] sm:$0xf]
        %v2544 = vld [vmem:[#allocation5 + $0x94] sm:$0xf]
        %v2545 = vld [vmem:[#allocation5 + $0x98] sm:$0xf]
        %v2546 = vld [vmem:[#allocation5 + $0x9c] sm:$0xf]
        %v2547 = vld [vmem:[#allocation5 + $0xa0] sm:$0xf]
        %v2548 = vld [vmem:[#allocation5 + $0xa4] sm:$0xf]
        %v2549 = vld [vmem:[#allocation5 + $0xa8] sm:$0xf]
        %v2550 = vld [vmem:[#allocation5 + $0xac] sm:$0xf]
        %v2551 = vld [vmem:[#allocation5 + $0xb0] sm:$0xf]
        %v2552 = vld [vmem:[#allocation5 + $0xb4] sm:$0xf]
        %v2553 = vld [vmem:[#allocation5 + $0xb8] sm:$0xf]
        %v2554 = vld [vmem:[#allocation5 + $0xbc] sm:$0xf]
        %v2555 = vld [vmem:[%s4] sm:$0x1]
        %v2557 = vlaneseq
        %v2558 = vshrl.u32 %v2557, 7
        %v2559 = vsub.s32 0, %v2558
        %v2560 = vrot.slane %v2555, %v2559
        %v2610 = vunpack.c.l.b16 %v2507
        %v2611 = vunpack.c.l.b16 %v2508
        %v2612 = vunpack.c.l.b16 %v2509
        %v2613 = vunpack.c.l.b16 %v2510
        %v2614 = vunpack.c.l.b16 %v2511
        %v2615 = vunpack.c.l.b16 %v2512
        %v2616 = vunpack.c.l.b16 %v2513
        %v2617 = vunpack.c.l.b16 %v2514
        %v2618 = vunpack.c.l.b16 %v2515
        %v2619 = vunpack.c.l.b16 %v2516
        %v2620 = vunpack.c.l.b16 %v2517
        %v2621 = vunpack.c.l.b16 %v2518
        %v2622 = vunpack.c.l.b16 %v2519
        %v2623 = vunpack.c.l.b16 %v2520
        %v2624 = vunpack.c.l.b16 %v2521
        %v2625 = vunpack.c.l.b16 %v2522
        %v2626 = vunpack.c.l.b16 %v2523
        %v2627 = vunpack.c.l.b16 %v2524
        %v2628 = vunpack.c.l.b16 %v2525
        %v2629 = vunpack.c.l.b16 %v2526
        %v2630 = vunpack.c.l.b16 %v2527
        %v2631 = vunpack.c.l.b16 %v2528
        %v2632 = vunpack.c.l.b16 %v2529
        %v2633 = vunpack.c.l.b16 %v2530
        %v2634 = vunpack.c.l.b16 %v2531
        %v2635 = vunpack.c.l.b16 %v2532
        %v2636 = vunpack.c.l.b16 %v2533
        %v2637 = vunpack.c.l.b16 %v2534
        %v2638 = vunpack.c.l.b16 %v2535
        %v2639 = vunpack.c.l.b16 %v2536
        %v2640 = vunpack.c.l.b16 %v2537
        %v2641 = vunpack.c.l.b16 %v2538
        %v2642 = vunpack.c.l.b16 %v2539
        %v2643 = vunpack.c.l.b16 %v2540
        %v2644 = vunpack.c.l.b16 %v2541
        %v2645 = vunpack.c.l.b16 %v2542
        %v2646 = vunpack.c.l.b16 %v2543
        %v2647 = vunpack.c.l.b16 %v2544
        %v2648 = vunpack.c.l.b16 %v2545
        %v2649 = vunpack.c.l.b16 %v2546
        %v2650 = vunpack.c.l.b16 %v2547
        %v2651 = vunpack.c.l.b16 %v2548
        %v2652 = vunpack.c.l.b16 %v2549
        %v2653 = vunpack.c.l.b16 %v2550
        %v2654 = vunpack.c.l.b16 %v2551
        %v2655 = vunpack.c.l.b16 %v2552
        %v2656 = vunpack.c.l.b16 %v2553
        %v2657 = vunpack.c.l.b16 %v2554
        %v2658 = vpack.c.b16 %v2611, %v2610
        %v2659 = vpack.c.b16 %v2613, %v2612
        %v2660 = vpack.c.b16 %v2615, %v2614
        %v2661 = vpack.c.b16 %v2617, %v2616
        %v2662 = vpack.c.b16 %v2619, %v2618
        %v2663 = vpack.c.b16 %v2621, %v2620
        %v2664 = vpack.c.b16 %v2623, %v2622
        %v2665 = vpack.c.b16 %v2625, %v2624
        %v2666 = vpack.c.b16 %v2627, %v2626
        %v2667 = vpack.c.b16 %v2629, %v2628
        %v2668 = vpack.c.b16 %v2631, %v2630
        %v2669 = vpack.c.b16 %v2633, %v2632
        %v2670 = vpack.c.b16 %v2635, %v2634
        %v2671 = vpack.c.b16 %v2637, %v2636
        %v2672 = vpack.c.b16 %v2639, %v2638
        %v2673 = vpack.c.b16 %v2641, %v2640
        %v2674 = vpack.c.b16 %v2643, %v2642
        %v2675 = vpack.c.b16 %v2645, %v2644
        %v2676 = vpack.c.b16 %v2647, %v2646
        %v2677 = vpack.c.b16 %v2649, %v2648
        %v2678 = vpack.c.b16 %v2651, %v2650
        %v2679 = vpack.c.b16 %v2653, %v2652
        %v2680 = vpack.c.b16 %v2655, %v2654
        %v2681 = vpack.c.b16 %v2657, %v2656
        %2706 = vmatprep.subr.bf16.mxu0 0
        %2707 = vmatpush1.bf16.msra.mxu0 %v2658
        %2708 = vmatprep.subr.bf16.mxu0 0
        %2709 = vmatpush1.bf16.msra.mxu0 %v2659
        %2710 = vmatprep.subr.bf16.mxu0 0
        %2711 = vmatpush1.bf16.msra.mxu0 %v2660
        %2712 = vmatprep.subr.bf16.mxu0 0
        %2713 = vmatpush1.bf16.msra.mxu0 %v2661
        %2714 = vmatprep.subr.bf16.mxu0 0
        %2715 = vmatpush1.bf16.msra.mxu0 %v2662
        %2716 = vmatprep.subr.bf16.mxu0 0
        %2717 = vmatpush1.bf16.msra.mxu0 %v2663
        %2718 = vmatprep.subr.bf16.mxu0 0
        %2719 = vmatpush1.bf16.msra.mxu0 %v2664
        %2720 = vmatprep.subr.bf16.mxu0 0
        %2721 = vmatpush1.bf16.msra.mxu0 %v2665
        %2722 = vmatprep.subr.bf16.mxu0 0
        %2723 = vmatpush1.bf16.msra.mxu0 %v2666
        %2724 = vmatprep.subr.bf16.mxu0 0
        %2725 = vmatpush1.bf16.msra.mxu0 %v2667
        %2726 = vmatprep.subr.bf16.mxu0 0
        %2727 = vmatpush1.bf16.msra.mxu0 %v2668
        %2728 = vmatprep.subr.bf16.mxu0 0
        %2729 = vmatpush1.bf16.msra.mxu0 %v2669
        %2730 = vmatprep.subr.bf16.mxu0 0
        %2731 = vmatpush1.bf16.msra.mxu0 %v2670
        %2732 = vmatprep.subr.bf16.mxu0 0
        %2733 = vmatpush1.bf16.msra.mxu0 %v2671
        %2734 = vmatprep.subr.bf16.mxu0 0
        %2735 = vmatpush1.bf16.msra.mxu0 %v2672
        %2736 = vmatprep.subr.bf16.mxu0 0
        %2737 = vmatpush1.bf16.msra.mxu0 %v2673
        %2738 = vmatprep.mubr.bf16.mxu0 %v2475
        %2739 = vmatmul.mubr.bf16.gmra.mrb[0].mxu0 %v2154
        %v2740 = vpop.f32.mrb[0].mxu0
        %v2741 = vadd.f32 %v2560, %v2740
        %v2742 = vpop.f32.mrb[0].mxu0
        %v2743 = vpop.f32.mrb[0].mxu0
        %v2744 = vadd.f32 %v2560, %v2743
        %v2745 = vpop.f32.mrb[0].mxu0
        %2746 = vmatprep.mubr.bf16.mxu0 %v2476
        %2747 = vmatmul.mubr.bf16.gmra.mrb[0].mxu0 %v2155
        %v2748 = vpop.f32.mrb[0].mxu0
        %v2749 = vadd.f32 %v2560, %v2748
        %v2750 = vpop.f32.mrb[0].mxu0
        %v2751 = vpop.f32.mrb[0].mxu0
        %v2752 = vadd.f32 %v2560, %v2751
        %v2753 = vpop.f32.mrb[0].mxu0
        %2754 = vmatprep.mubr.bf16.mxu0 %v2477
        %2755 = vmatmul.mubr.bf16.gmra.mrb[0].mxu0 %v2156
        %v2756 = vpop.f32.mrb[0].mxu0
        %v2757 = vadd.f32 %v2560, %v2756
        %v2758 = vpop.f32.mrb[0].mxu0
        %v2759 = vpop.f32.mrb[0].mxu0
        %v2760 = vadd.f32 %v2560, %v2759
        %v2761 = vpop.f32.mrb[0].mxu0
        %2762 = vmatprep.mubr.bf16.mxu0 %v2478
        %2763 = vmatmul.mubr.bf16.gmra.mrb[0].mxu0 %v2157
        %v2764 = vpop.f32.mrb[0].mxu0
        %v2765 = vadd.f32 %v2560, %v2764
        %v2766 = vpop.f32.mrb[0].mxu0
        %v2767 = vpop.f32.mrb[0].mxu0
        %v2768 = vadd.f32 %v2560, %v2767
        %v2769 = vpop.f32.mrb[0].mxu0
        %2770 = vmatprep.mubr.bf16.mxu0 %v2479
        %2771 = vmatmul.mubr.bf16.gmra.mrb[0].mxu0 %v2158
        %v2772 = vpop.f32.mrb[0].mxu0
        %v2773 = vadd.f32 %v2560, %v2772
        %v2774 = vpop.f32.mrb[0].mxu0
        %v2775 = vpop.f32.mrb[0].mxu0
        %v2776 = vadd.f32 %v2560, %v2775
        %v2777 = vpop.f32.mrb[0].mxu0
        %2778 = vmatprep.mubr.bf16.mxu0 %v2480
        %2779 = vmatmul.mubr.bf16.gmra.mrb[0].mxu0 %v2159
        %v2780 = vpop.f32.mrb[0].mxu0
        %v2781 = vadd.f32 %v2560, %v2780
        %v2782 = vpop.f32.mrb[0].mxu0
        %v2783 = vpop.f32.mrb[0].mxu0
        %v2784 = vadd.f32 %v2560, %v2783
        %v2785 = vpop.f32.mrb[0].mxu0
        %2786 = vmatprep.mubr.bf16.mxu0 %v2481
        %2787 = vmatmul.mubr.bf16.gmra.mrb[0].mxu0 %v2160
        %v2788 = vpop.f32.mrb[0].mxu0
        %v2789 = vadd.f32 %v2560, %v2788
        %v2790 = vpop.f32.mrb[0].mxu0
        %v2791 = vpop.f32.mrb[0].mxu0
        %v2792 = vadd.f32 %v2560, %v2791
        %v2793 = vpop.f32.mrb[0].mxu0
        %2794 = vmatprep.mubr.bf16.mxu0 %v2482
        %2795 = vmatmul.mubr.bf16.gmra.mrb[0].mxu0 %v2161
        %v2796 = vpop.f32.mrb[0].mxu0
        %v2797 = vadd.f32 %v2560, %v2796
        %v2798 = vpop.f32.mrb[0].mxu0
        %v2799 = vpop.f32.mrb[0].mxu0
        %v2800 = vadd.f32 %v2560, %v2799
        %v2801 = vpop.f32.mrb[0].mxu0
        %2802 = vmatprep.mubr.bf16.mxu0 %v2483
        %2803 = vmatmul.mubr.bf16.gmra.mrb[0].mxu0 %v2162
        %v2804 = vpop.f32.mrb[0].mxu0
        %v2805 = vadd.f32 %v2560, %v2804
        %v2806 = vpop.f32.mrb[0].mxu0
        %v2807 = vpop.f32.mrb[0].mxu0
        %v2808 = vadd.f32 %v2560, %v2807
        %v2809 = vpop.f32.mrb[0].mxu0
        %2810 = vmatprep.mubr.bf16.mxu0 %v2484
        %2811 = vmatmul.mubr.bf16.gmra.mrb[0].mxu0 %v2163
        %v2812 = vpop.f32.mrb[0].mxu0
        %v2813 = vadd.f32 %v2560, %v2812
        %v2814 = vpop.f32.mrb[0].mxu0
        %v2815 = vpop.f32.mrb[0].mxu0
        %v2816 = vadd.f32 %v2560, %v2815
        %v2817 = vpop.f32.mrb[0].mxu0
        %2818 = vmatprep.mubr.bf16.mxu0 %v2485
        %2819 = vmatmul.mubr.bf16.gmra.mrb[0].mxu0 %v2164
        %v2820 = vpop.f32.mrb[0].mxu0
        %v2821 = vadd.f32 %v2560, %v2820
        %v2822 = vpop.f32.mrb[0].mxu0
        %v2823 = vpop.f32.mrb[0].mxu0
        %v2824 = vadd.f32 %v2560, %v2823
        %v2825 = vpop.f32.mrb[0].mxu0
        %2826 = vmatprep.mubr.bf16.mxu0 %v2486
        %2827 = vmatmul.mubr.bf16.gmra.mrb[0].mxu0 %v2165
        %v2828 = vpop.f32.mrb[0].mxu0
        %v2829 = vadd.f32 %v2560, %v2828
        %v2830 = vpop.f32.mrb[0].mxu0
        %v2831 = vpop.f32.mrb[0].mxu0
        %v2832 = vadd.f32 %v2560, %v2831
        %v2833 = vpop.f32.mrb[0].mxu0
        %2834 = vmatprep.mubr.bf16.mxu0 %v2487
        %2835 = vmatmul.mubr.bf16.gmra.mrb[0].mxu0 %v2166
        %v2836 = vpop.f32.mrb[0].mxu0
        %v2837 = vadd.f32 %v2560, %v2836
        %v2838 = vpop.f32.mrb[0].mxu0
        %v2839 = vpop.f32.mrb[0].mxu0
        %v2840 = vadd.f32 %v2560, %v2839
        %v2841 = vpop.f32.mrb[0].mxu0
        %2842 = vmatprep.mubr.bf16.mxu0 %v2488
        %2843 = vmatmul.mubr.bf16.gmra.mrb[0].mxu0 %v2167
        %v2844 = vpop.f32.mrb[0].mxu0
        %v2845 = vadd.f32 %v2560, %v2844
        %v2846 = vpop.f32.mrb[0].mxu0
        %v2847 = vpop.f32.mrb[0].mxu0
        %v2848 = vadd.f32 %v2560, %v2847
        %v2849 = vpop.f32.mrb[0].mxu0
        %2850 = vmatprep.mubr.bf16.mxu0 %v2489
        %2851 = vmatmul.mubr.bf16.gmra.mrb[0].mxu0 %v2168
        %v2852 = vpop.f32.mrb[0].mxu0
        %v2853 = vadd.f32 %v2560, %v2852
        %v2854 = vpop.f32.mrb[0].mxu0
        %v2855 = vpop.f32.mrb[0].mxu0
        %v2856 = vadd.f32 %v2560, %v2855
        %v2857 = vpop.f32.mrb[0].mxu0
        %2858 = vmatprep.mubr.bf16.mxu0 %v2490
        %2859 = vmatmul.mubr.bf16.gmra.mrb[0].mxu0 %v2169
        %v2860 = vpop.f32.mrb[0].mxu0
        %v2861 = vadd.f32 %v2560, %v2860
        %v2862 = vpop.f32.mrb[0].mxu0
        %v2863 = vpop.f32.mrb[0].mxu0
        %v2864 = vadd.f32 %v2560, %v2863
        %v2865 = vpop.f32.mrb[0].mxu0
        %2866 = vmatprep.mubr.bf16.mxu0 %v2491
        %2867 = vmatmul.mubr.bf16.gmra.mrb[0].mxu0 %v2170
        %v2868 = vpop.f32.mrb[0].mxu0
        %v2869 = vadd.f32 %v2560, %v2868
        %v2870 = vpop.f32.mrb[0].mxu0
        %v2871 = vpop.f32.mrb[0].mxu0
        %v2872 = vadd.f32 %v2560, %v2871
        %v2873 = vpop.f32.mrb[0].mxu0
        %2874 = vmatprep.mubr.bf16.mxu0 %v2492
        %2875 = vmatmul.mubr.bf16.gmra.mrb[0].mxu0 %v2171
        %v2876 = vpop.f32.mrb[0].mxu0
        %v2877 = vadd.f32 %v2560, %v2876
        %v2878 = vpop.f32.mrb[0].mxu0
        %v2879 = vpop.f32.mrb[0].mxu0
        %v2880 = vadd.f32 %v2560, %v2879
        %v2881 = vpop.f32.mrb[0].mxu0
        %2882 = vmatprep.mubr.bf16.mxu0 %v2493
        %2883 = vmatmul.mubr.bf16.gmra.mrb[0].mxu0 %v2172
        %v2884 = vpop.f32.mrb[0].mxu0
        %v2885 = vadd.f32 %v2560, %v2884
        %v2886 = vpop.f32.mrb[0].mxu0
        %v2887 = vpop.f32.mrb[0].mxu0
        %v2888 = vadd.f32 %v2560, %v2887
        %v2889 = vpop.f32.mrb[0].mxu0
        %2890 = vmatprep.mubr.bf16.mxu0 %v2494
        %2891 = vmatmul.mubr.bf16.gmra.mrb[0].mxu0 %v2173
        %v2892 = vpop.f32.mrb[0].mxu0
        %v2893 = vadd.f32 %v2560, %v2892
        %v2894 = vpop.f32.mrb[0].mxu0
        %v2895 = vpop.f32.mrb[0].mxu0
        %v2896 = vadd.f32 %v2560, %v2895
        %v2897 = vpop.f32.mrb[0].mxu0
        %2898 = vmatprep.mubr.bf16.mxu0 %v2495
        %2899 = vmatmul.mubr.bf16.gmra.mrb[0].mxu0 %v2174
        %v2900 = vpop.f32.mrb[0].mxu0
        %v2901 = vadd.f32 %v2560, %v2900
        %v2902 = vpop.f32.mrb[0].mxu0
        %v2903 = vpop.f32.mrb[0].mxu0
        %v2904 = vadd.f32 %v2560, %v2903
        %v2905 = vpop.f32.mrb[0].mxu0
        %2906 = vmatprep.mubr.bf16.mxu0 %v2496
        %2907 = vmatmul.mubr.bf16.gmra.mrb[0].mxu0 %v2175
        %v2908 = vpop.f32.mrb[0].mxu0
        %v2909 = vadd.f32 %v2560, %v2908
        %v2910 = vpop.f32.mrb[0].mxu0
        %v2911 = vpop.f32.mrb[0].mxu0
        %v2912 = vadd.f32 %v2560, %v2911
        %v2913 = vpop.f32.mrb[0].mxu0
        %2914 = vmatprep.mubr.bf16.mxu0 %v2497
        %2915 = vmatmul.mubr.bf16.gmra.mrb[0].mxu0 %v2176
        %v2916 = vpop.f32.mrb[0].mxu0
        %v2917 = vadd.f32 %v2560, %v2916
        %v2918 = vpop.f32.mrb[0].mxu0
        %v2919 = vpop.f32.mrb[0].mxu0
        %v2920 = vadd.f32 %v2560, %v2919
        %v2921 = vpop.f32.mrb[0].mxu0
        %2922 = vmatprep.mubr.bf16.mxu0 %v2498
        %2923 = vmatmul.mubr.bf16.gmra.mrb[0].mxu0 %v2177
        %v2924 = vpop.f32.mrb[0].mxu0
        %v2925 = vadd.f32 %v2560, %v2924
        %v2926 = vpop.f32.mrb[0].mxu0
        %v2927 = vpop.f32.mrb[0].mxu0
        %v2928 = vadd.f32 %v2560, %v2927
        %v2929 = vpop.f32.mrb[0].mxu0
        %2930 = vmatprep.mubr.bf16.mxu0 %v2499
        %2931 = vmatmul.mubr.bf16.gmra.mrb[0].mxu0 %v2178
        %v2932 = vpop.f32.mrb[0].mxu0
        %v2933 = vadd.f32 %v2560, %v2932
        %v2934 = vpop.f32.mrb[0].mxu0
        %v2935 = vpop.f32.mrb[0].mxu0
        %v2936 = vadd.f32 %v2560, %v2935
        %v2937 = vpop.f32.mrb[0].mxu0
        %2938 = vmatprep.mubr.bf16.mxu0 %v2500
        %2939 = vmatmul.mubr.bf16.gmra.mrb[0].mxu0 %v2179
        %v2940 = vpop.f32.mrb[0].mxu0
        %v2941 = vadd.f32 %v2560, %v2940
        %v2942 = vpop.f32.mrb[0].mxu0
        %v2943 = vpop.f32.mrb[0].mxu0
        %v2944 = vadd.f32 %v2560, %v2943
        %v2945 = vpop.f32.mrb[0].mxu0
        %2946 = vmatprep.mubr.bf16.mxu0 %v2501
        %2947 = vmatmul.mubr.bf16.gmra.mrb[0].mxu0 %v2180
        %v2948 = vpop.f32.mrb[0].mxu0
        %v2949 = vadd.f32 %v2560, %v2948
        %v2950 = vpop.f32.mrb[0].mxu0
        %v2951 = vpop.f32.mrb[0].mxu0
        %v2952 = vadd.f32 %v2560, %v2951
        %v2953 = vpop.f32.mrb[0].mxu0
        %2954 = vmatprep.mubr.bf16.mxu0 %v2502
        %2955 = vmatmul.mubr.bf16.gmra.mrb[0].mxu0 %v2181
        %v2956 = vpop.f32.mrb[0].mxu0
        %v2957 = vadd.f32 %v2560, %v2956
        %v2958 = vpop.f32.mrb[0].mxu0
        %v2959 = vpop.f32.mrb[0].mxu0
        %v2960 = vadd.f32 %v2560, %v2959
        %v2961 = vpop.f32.mrb[0].mxu0
        %2962 = vmatprep.mubr.bf16.mxu0 %v2503
        %2963 = vmatmul.mubr.bf16.gmra.mrb[0].mxu0 %v2182
        %v2964 = vpop.f32.mrb[0].mxu0
        %v2965 = vadd.f32 %v2560, %v2964
        %v2966 = vpop.f32.mrb[0].mxu0
        %v2967 = vpop.f32.mrb[0].mxu0
        %v2968 = vadd.f32 %v2560, %v2967
        %v2969 = vpop.f32.mrb[0].mxu0
        %2970 = vmatprep.mubr.bf16.mxu0 %v2504
        %2971 = vmatmul.mubr.bf16.gmra.mrb[0].mxu0 %v2183
        %v2972 = vpop.f32.mrb[0].mxu0
        %v2973 = vadd.f32 %v2560, %v2972
        %v2974 = vpop.f32.mrb[0].mxu0
        %v2975 = vpop.f32.mrb[0].mxu0
        %v2976 = vadd.f32 %v2560, %v2975
        %v2977 = vpop.f32.mrb[0].mxu0
        %2978 = vmatprep.mubr.bf16.mxu0 %v2505
        %2979 = vmatmul.mubr.bf16.gmra.mrb[0].mxu0 %v2184
        %v2980 = vpop.f32.mrb[0].mxu0
        %v2981 = vadd.f32 %v2560, %v2980
        %v2982 = vpop.f32.mrb[0].mxu0
        %v2983 = vpop.f32.mrb[0].mxu0
        %v2984 = vadd.f32 %v2560, %v2983
        %v2985 = vpop.f32.mrb[0].mxu0
        %2986 = vmatprep.mubr.bf16.mxu0 %v2506
        %2987 = vmatmul.mubr.bf16.gmra.mrb[0].mxu0 %v2185
        %v2988 = vpop.f32.mrb[0].mxu0
        %v2989 = vadd.f32 %v2560, %v2988
        %v2990 = vpop.f32.mrb[0].mxu0
        %v2991 = vpop.f32.mrb[0].mxu0
        %v2992 = vadd.f32 %v2560, %v2991
        %v2993 = vpop.f32.mrb[0].mxu0
        %2994 = vdwg.mxu0
        %2995 = vmatprep.subr.bf16.mxu0 0
        %2996 = vmatpush1.bf16.msra.mxu0 %v2674
        %2997 = vmatprep.subr.bf16.mxu0 0
        %2998 = vmatpush1.bf16.msra.mxu0 %v2675
        %2999 = vmatprep.subr.bf16.mxu0 0
        %3000 = vmatpush1.bf16.msra.mxu0 %v2676
        %3001 = vmatprep.subr.bf16.mxu0 0
        %3002 = vmatpush1.bf16.msra.mxu0 %v2677
        %3003 = vmatprep.subr.bf16.mxu0 0
        %3004 = vmatpush1.bf16.msra.mxu0 %v2678
        %3005 = vmatprep.subr.bf16.mxu0 0
        %3006 = vmatpush1.bf16.msra.mxu0 %v2679
        %3007 = vmatprep.subr.bf16.mxu0 0
        %3008 = vmatpush1.bf16.msra.mxu0 %v2680
        %3009 = vmatprep.subr.bf16.mxu0 0
        %3010 = vmatpush1.bf16.msra.mxu0 %v2681
        %3011 = vmatprep.subr.bf16.mxu0 0
        %3012 = vmatpush1.bf16.msra.mxu0 0
        %3013 = vmatprep.subr.bf16.mxu0 0
        %3014 = vmatpush1.bf16.msra.mxu0 0
        %3015 = vmatprep.subr.bf16.mxu0 0
        %3016 = vmatpush1.bf16.msra.mxu0 0
        %3017 = vmatprep.subr.bf16.mxu0 0
        %3018 = vmatpush1.bf16.msra.mxu0 0
        %3019 = vmatprep.subr.bf16.mxu0 0
        %3020 = vmatpush1.bf16.msra.mxu0 0
        %3021 = vmatprep.subr.bf16.mxu0 0
        %3022 = vmatpush1.bf16.msra.mxu0 0
        %3023 = vmatprep.subr.bf16.mxu0 0
        %3024 = vmatpush1.bf16.msra.mxu0 0
        %3025 = vmatprep.subr.bf16.mxu0 0
        %3026 = vmatpush1.bf16.msra.mxu0 0
        %3027 = vmatprep.mubr.bf16.mxu0 0
        %3028 = vmatmul.mubr.bf16.gmra.mrb[0].mxu0 %v2443
        %v3029 = vpop.f32.mrb[0].mxu0
        %v3030 = vadd.f32 %v2741, %v3029
        %v3031 = vpop.f32.mrb[0].mxu0
        %v3032 = vpop.f32.mrb[0].mxu0
        %v3033 = vadd.f32 %v2744, %v3032
        %v3034 = vpop.f32.mrb[0].mxu0
        %3035 = vmatprep.mubr.bf16.mxu0 0
        %3036 = vmatmul.mubr.bf16.gmra.mrb[0].mxu0 %v2444
        %v3037 = vpop.f32.mrb[0].mxu0
        %v3038 = vadd.f32 %v2749, %v3037
        %v3039 = vpop.f32.mrb[0].mxu0
        %v3040 = vpop.f32.mrb[0].mxu0
        %v3041 = vadd.f32 %v2752, %v3040
        %v3042 = vpop.f32.mrb[0].mxu0
        %3043 = vmatprep.mubr.bf16.mxu0 0
        %3044 = vmatmul.mubr.bf16.gmra.mrb[0].mxu0 %v2445
        %v3045 = vpop.f32.mrb[0].mxu0
        %v3046 = vadd.f32 %v2757, %v3045
        %v3047 = vpop.f32.mrb[0].mxu0
        %v3048 = vpop.f32.mrb[0].mxu0
        %v3049 = vadd.f32 %v2760, %v3048
        %v3050 = vpop.f32.mrb[0].mxu0
        %3051 = vmatprep.mubr.bf16.mxu0 0
        %3052 = vmatmul.mubr.bf16.gmra.mrb[0].mxu0 %v2446
        %v3053 = vpop.f32.mrb[0].mxu0
        %v3054 = vadd.f32 %v2765, %v3053
        %v3055 = vpop.f32.mrb[0].mxu0
        %v3056 = vpop.f32.mrb[0].mxu0
        %v3057 = vadd.f32 %v2768, %v3056
        %v3058 = vpop.f32.mrb[0].mxu0
        %3059 = vmatprep.mubr.bf16.mxu0 0
        %3060 = vmatmul.mubr.bf16.gmra.mrb[0].mxu0 %v2447
        %v3061 = vpop.f32.mrb[0].mxu0
        %v3062 = vadd.f32 %v2773, %v3061
        %v3063 = vpop.f32.mrb[0].mxu0
        %v3064 = vpop.f32.mrb[0].mxu0
        %v3065 = vadd.f32 %v2776, %v3064
        %v3066 = vpop.f32.mrb[0].mxu0
        %3067 = vmatprep.mubr.bf16.mxu0 0
        %3068 = vmatmul.mubr.bf16.gmra.mrb[0].mxu0 %v2448
        %v3069 = vpop.f32.mrb[0].mxu0
        %v3070 = vadd.f32 %v2781, %v3069
        %v3071 = vpop.f32.mrb[0].mxu0
        %v3072 = vpop.f32.mrb[0].mxu0
        %v3073 = vadd.f32 %v2784, %v3072
        %v3074 = vpop.f32.mrb[0].mxu0
        %3075 = vmatprep.mubr.bf16.mxu0 0
        %3076 = vmatmul.mubr.bf16.gmra.mrb[0].mxu0 %v2449
        %v3077 = vpop.f32.mrb[0].mxu0
        %v3078 = vadd.f32 %v2789, %v3077
        %v3079 = vpop.f32.mrb[0].mxu0
        %v3080 = vpop.f32.mrb[0].mxu0
        %v3081 = vadd.f32 %v2792, %v3080
        %v3082 = vpop.f32.mrb[0].mxu0
        %3083 = vmatprep.mubr.bf16.mxu0 0
        %3084 = vmatmul.mubr.bf16.gmra.mrb[0].mxu0 %v2450
        %v3085 = vpop.f32.mrb[0].mxu0
        %v3086 = vadd.f32 %v2797, %v3085
        %v3087 = vpop.f32.mrb[0].mxu0
        %v3088 = vpop.f32.mrb[0].mxu0
        %v3089 = vadd.f32 %v2800, %v3088
        %v3090 = vpop.f32.mrb[0].mxu0
        %3091 = vmatprep.mubr.bf16.mxu0 0
        %3092 = vmatmul.mubr.bf16.gmra.mrb[0].mxu0 %v2451
        %v3093 = vpop.f32.mrb[0].mxu0
        %v3094 = vadd.f32 %v2805, %v3093
        %v3095 = vpop.f32.mrb[0].mxu0
        %v3096 = vpop.f32.mrb[0].mxu0
        %v3097 = vadd.f32 %v2808, %v3096
        %v3098 = vpop.f32.mrb[0].mxu0
        %3099 = vmatprep.mubr.bf16.mxu0 0
        %3100 = vmatmul.mubr.bf16.gmra.mrb[0].mxu0 %v2452
        %v3101 = vpop.f32.mrb[0].mxu0
        %v3102 = vadd.f32 %v2813, %v3101
        %v3103 = vpop.f32.mrb[0].mxu0
        %v3104 = vpop.f32.mrb[0].mxu0
        %v3105 = vadd.f32 %v2816, %v3104
        %v3106 = vpop.f32.mrb[0].mxu0
        %3107 = vmatprep.mubr.bf16.mxu0 0
        %3108 = vmatmul.mubr.bf16.gmra.mrb[0].mxu0 %v2453
        %v3109 = vpop.f32.mrb[0].mxu0
        %v3110 = vadd.f32 %v2821, %v3109
        %v3111 = vpop.f32.mrb[0].mxu0
        %v3112 = vpop.f32.mrb[0].mxu0
        %v3113 = vadd.f32 %v2824, %v3112
        %v3114 = vpop.f32.mrb[0].mxu0
        %3115 = vmatprep.mubr.bf16.mxu0 0
        %3116 = vmatmul.mubr.bf16.gmra.mrb[0].mxu0 %v2454
        %v3117 = vpop.f32.mrb[0].mxu0
        %v3118 = vadd.f32 %v2829, %v3117
        %v3119 = vpop.f32.mrb[0].mxu0
        %v3120 = vpop.f32.mrb[0].mxu0
        %v3121 = vadd.f32 %v2832, %v3120
        %v3122 = vpop.f32.mrb[0].mxu0
        %3123 = vmatprep.mubr.bf16.mxu0 0
        %3124 = vmatmul.mubr.bf16.gmra.mrb[0].mxu0 %v2455
        %v3125 = vpop.f32.mrb[0].mxu0
        %v3126 = vadd.f32 %v2837, %v3125
        %v3127 = vpop.f32.mrb[0].mxu0
        %v3128 = vpop.f32.mrb[0].mxu0
        %v3129 = vadd.f32 %v2840, %v3128
        %v3130 = vpop.f32.mrb[0].mxu0
        %3131 = vmatprep.mubr.bf16.mxu0 0
        %3132 = vmatmul.mubr.bf16.gmra.mrb[0].mxu0 %v2456
        %v3133 = vpop.f32.mrb[0].mxu0
        %v3134 = vadd.f32 %v2845, %v3133
        %v3135 = vpop.f32.mrb[0].mxu0
        %v3136 = vpop.f32.mrb[0].mxu0
        %v3137 = vadd.f32 %v2848, %v3136
        %v3138 = vpop.f32.mrb[0].mxu0
        %3139 = vmatprep.mubr.bf16.mxu0 0
        %3140 = vmatmul.mubr.bf16.gmra.mrb[0].mxu0 %v2457
        %v3141 = vpop.f32.mrb[0].mxu0
        %v3142 = vadd.f32 %v2853, %v3141
        %v3143 = vpop.f32.mrb[0].mxu0
        %v3144 = vpop.f32.mrb[0].mxu0
        %v3145 = vadd.f32 %v2856, %v3144
        %v3146 = vpop.f32.mrb[0].mxu0
        %3147 = vmatprep.mubr.bf16.mxu0 0
        %3148 = vmatmul.mubr.bf16.gmra.mrb[0].mxu0 %v2458
        %v3149 = vpop.f32.mrb[0].mxu0
        %v3150 = vadd.f32 %v2861, %v3149
        %v3151 = vpop.f32.mrb[0].mxu0
        %v3152 = vpop.f32.mrb[0].mxu0
        %v3153 = vadd.f32 %v2864, %v3152
        %v3154 = vpop.f32.mrb[0].mxu0
        %3155 = vmatprep.mubr.bf16.mxu0 0
        %3156 = vmatmul.mubr.bf16.gmra.mrb[0].mxu0 %v2459
        %v3157 = vpop.f32.mrb[0].mxu0
        %v3158 = vadd.f32 %v2869, %v3157
        %v3159 = vpop.f32.mrb[0].mxu0
        %v3160 = vpop.f32.mrb[0].mxu0
        %v3161 = vadd.f32 %v2872, %v3160
        %v3162 = vpop.f32.mrb[0].mxu0
        %3163 = vmatprep.mubr.bf16.mxu0 0
        %3164 = vmatmul.mubr.bf16.gmra.mrb[0].mxu0 %v2460
        %v3165 = vpop.f32.mrb[0].mxu0
        %v3166 = vadd.f32 %v2877, %v3165
        %v3167 = vpop.f32.mrb[0].mxu0
        %v3168 = vpop.f32.mrb[0].mxu0
        %v3169 = vadd.f32 %v2880, %v3168
        %v3170 = vpop.f32.mrb[0].mxu0
        %3171 = vmatprep.mubr.bf16.mxu0 0
        %3172 = vmatmul.mubr.bf16.gmra.mrb[0].mxu0 %v2461
        %v3173 = vpop.f32.mrb[0].mxu0
        %v3174 = vadd.f32 %v2885, %v3173
        %v3175 = vpop.f32.mrb[0].mxu0
        %v3176 = vpop.f32.mrb[0].mxu0
        %v3177 = vadd.f32 %v2888, %v3176
        %v3178 = vpop.f32.mrb[0].mxu0
        %3179 = vmatprep.mubr.bf16.mxu0 0
        %3180 = vmatmul.mubr.bf16.gmra.mrb[0].mxu0 %v2462
        %v3181 = vpop.f32.mrb[0].mxu0
        %v3182 = vadd.f32 %v2893, %v3181
        %v3183 = vpop.f32.mrb[0].mxu0
        %v3184 = vpop.f32.mrb[0].mxu0
        %v3185 = vadd.f32 %v2896, %v3184
        %v3186 = vpop.f32.mrb[0].mxu0
        %3187 = vmatprep.mubr.bf16.mxu0 0
        %3188 = vmatmul.mubr.bf16.gmra.mrb[0].mxu0 %v2463
        %v3189 = vpop.f32.mrb[0].mxu0
        %v3190 = vadd.f32 %v2901, %v3189
        %v3191 = vpop.f32.mrb[0].mxu0
        %v3192 = vpop.f32.mrb[0].mxu0
        %v3193 = vadd.f32 %v2904, %v3192
        %v3194 = vpop.f32.mrb[0].mxu0
        %3195 = vmatprep.mubr.bf16.mxu0 0
        %3196 = vmatmul.mubr.bf16.gmra.mrb[0].mxu0 %v2464
        %v3197 = vpop.f32.mrb[0].mxu0
        %v3198 = vadd.f32 %v2909, %v3197
        %v3199 = vpop.f32.mrb[0].mxu0
        %v3200 = vpop.f32.mrb[0].mxu0
        %v3201 = vadd.f32 %v2912, %v3200
        %v3202 = vpop.f32.mrb[0].mxu0
        %3203 = vmatprep.mubr.bf16.mxu0 0
        %3204 = vmatmul.mubr.bf16.gmra.mrb[0].mxu0 %v2465
        %v3205 = vpop.f32.mrb[0].mxu0
        %v3206 = vadd.f32 %v2917, %v3205
        %v3207 = vpop.f32.mrb[0].mxu0
        %v3208 = vpop.f32.mrb[0].mxu0
        %v3209 = vadd.f32 %v2920, %v3208
        %v3210 = vpop.f32.mrb[0].mxu0
        %3211 = vmatprep.mubr.bf16.mxu0 0
        %3212 = vmatmul.mubr.bf16.gmra.mrb[0].mxu0 %v2466
        %v3213 = vpop.f32.mrb[0].mxu0
        %v3214 = vadd.f32 %v2925, %v3213
        %v3215 = vpop.f32.mrb[0].mxu0
        %v3216 = vpop.f32.mrb[0].mxu0
        %v3217 = vadd.f32 %v2928, %v3216
        %v3218 = vpop.f32.mrb[0].mxu0
        %3219 = vmatprep.mubr.bf16.mxu0 0
        %3220 = vmatmul.mubr.bf16.gmra.mrb[0].mxu0 %v2467
        %v3221 = vpop.f32.mrb[0].mxu0
        %v3222 = vadd.f32 %v2933, %v3221
        %v3223 = vpop.f32.mrb[0].mxu0
        %v3224 = vpop.f32.mrb[0].mxu0
        %v3225 = vadd.f32 %v2936, %v3224
        %v3226 = vpop.f32.mrb[0].mxu0
        %3227 = vmatprep.mubr.bf16.mxu0 0
        %3228 = vmatmul.mubr.bf16.gmra.mrb[0].mxu0 %v2468
        %v3229 = vpop.f32.mrb[0].mxu0
        %v3230 = vadd.f32 %v2941, %v3229
        %v3231 = vpop.f32.mrb[0].mxu0
        %v3232 = vpop.f32.mrb[0].mxu0
        %v3233 = vadd.f32 %v2944, %v3232
        %v3234 = vpop.f32.mrb[0].mxu0
        %3235 = vmatprep.mubr.bf16.mxu0 0
        %3236 = vmatmul.mubr.bf16.gmra.mrb[0].mxu0 %v2469
        %v3237 = vpop.f32.mrb[0].mxu0
        %v3238 = vadd.f32 %v2949, %v3237
        %v3239 = vpop.f32.mrb[0].mxu0
        %v3240 = vpop.f32.mrb[0].mxu0
        %v3241 = vadd.f32 %v2952, %v3240
        %v3242 = vpop.f32.mrb[0].mxu0
        %3243 = vmatprep.mubr.bf16.mxu0 0
        %3244 = vmatmul.mubr.bf16.gmra.mrb[0].mxu0 %v2470
        %v3245 = vpop.f32.mrb[0].mxu0
        %v3246 = vadd.f32 %v2957, %v3245
        %v3247 = vpop.f32.mrb[0].mxu0
        %v3248 = vpop.f32.mrb[0].mxu0
        %v3249 = vadd.f32 %v2960, %v3248
        %v3250 = vpop.f32.mrb[0].mxu0
        %3251 = vmatprep.mubr.bf16.mxu0 0
        %3252 = vmatmul.mubr.bf16.gmra.mrb[0].mxu0 %v2471
        %v3253 = vpop.f32.mrb[0].mxu0
        %v3254 = vadd.f32 %v2965, %v3253
        %v3255 = vpop.f32.mrb[0].mxu0
        %v3256 = vpop.f32.mrb[0].mxu0
        %v3257 = vadd.f32 %v2968, %v3256
        %v3258 = vpop.f32.mrb[0].mxu0
        %3259 = vmatprep.mubr.bf16.mxu0 0
        %3260 = vmatmul.mubr.bf16.gmra.mrb[0].mxu0 %v2472
        %v3261 = vpop.f32.mrb[0].mxu0
        %v3262 = vadd.f32 %v2973, %v3261
        %v3263 = vpop.f32.mrb[0].mxu0
        %v3264 = vpop.f32.mrb[0].mxu0
        %v3265 = vadd.f32 %v2976, %v3264
        %v3266 = vpop.f32.mrb[0].mxu0
        %3267 = vmatprep.mubr.bf16.mxu0 0
        %3268 = vmatmul.mubr.bf16.gmra.mrb[0].mxu0 %v2473
        %v3269 = vpop.f32.mrb[0].mxu0
        %v3270 = vadd.f32 %v2981, %v3269
        %v3271 = vpop.f32.mrb[0].mxu0
        %v3272 = vpop.f32.mrb[0].mxu0
        %v3273 = vadd.f32 %v2984, %v3272
        %v3274 = vpop.f32.mrb[0].mxu0
        %3275 = vmatprep.mubr.bf16.mxu0 0
        %3276 = vmatmul.mubr.bf16.gmra.mrb[0].mxu0 %v2474
        %v3277 = vpop.f32.mrb[0].mxu0
        %v3278 = vadd.f32 %v2989, %v3277
        %v3279 = vpop.f32.mrb[0].mxu0
        %v3280 = vpop.f32.mrb[0].mxu0
        %v3281 = vadd.f32 %v2992, %v3280
        %v3282 = vpop.f32.mrb[0].mxu0
        %3283 = vdwg.mxu0
        %v3284 = vmax.f32 %v3030, 0.0
        %v3285 = vmax.f32 %v3033, 0.0
        %v3286 = vmax.f32 %v3038, 0.0
        %v3287 = vmax.f32 %v3041, 0.0
        %v3288 = vmax.f32 %v3046, 0.0
        %v3289 = vmax.f32 %v3049, 0.0
        %v3290 = vmax.f32 %v3054, 0.0
        %v3291 = vmax.f32 %v3057, 0.0
        %v3292 = vmax.f32 %v3062, 0.0
        %v3293 = vmax.f32 %v3065, 0.0
        %v3294 = vmax.f32 %v3070, 0.0
        %v3295 = vmax.f32 %v3073, 0.0
        %v3296 = vmax.f32 %v3078, 0.0
        %v3297 = vmax.f32 %v3081, 0.0
        %v3298 = vmax.f32 %v3086, 0.0
        %v3299 = vmax.f32 %v3089, 0.0
        %v3300 = vmax.f32 %v3094, 0.0
        %v3301 = vmax.f32 %v3097, 0.0
        %v3302 = vmax.f32 %v3102, 0.0
        %v3303 = vmax.f32 %v3105, 0.0
        %v3304 = vmax.f32 %v3110, 0.0
        %v3305 = vmax.f32 %v3113, 0.0
        %v3306 = vmax.f32 %v3118, 0.0
        %v3307 = vmax.f32 %v3121, 0.0
        %v3308 = vmax.f32 %v3126, 0.0
        %v3309 = vmax.f32 %v3129, 0.0
        %v3310 = vmax.f32 %v3134, 0.0
        %v3311 = vmax.f32 %v3137, 0.0
        %v3312 = vmax.f32 %v3142, 0.0
        %v3313 = vmax.f32 %v3145, 0.0
        %v3314 = vmax.f32 %v3150, 0.0
        %v3315 = vmax.f32 %v3153, 0.0
        %v3316 = vmax.f32 %v3158, 0.0
        %v3317 = vmax.f32 %v3161, 0.0
        %v3318 = vmax.f32 %v3166, 0.0
        %v3319 = vmax.f32 %v3169, 0.0
        %v3320 = vmax.f32 %v3174, 0.0
        %v3321 = vmax.f32 %v3177, 0.0
        %v3322 = vmax.f32 %v3182, 0.0
        %v3323 = vmax.f32 %v3185, 0.0
        %v3324 = vmax.f32 %v3190, 0.0
        %v3325 = vmax.f32 %v3193, 0.0
        %v3326 = vmax.f32 %v3198, 0.0
        %v3327 = vmax.f32 %v3201, 0.0
        %v3328 = vmax.f32 %v3206, 0.0
        %v3329 = vmax.f32 %v3209, 0.0
        %v3330 = vmax.f32 %v3214, 0.0
        %v3331 = vmax.f32 %v3217, 0.0
        %v3332 = vmax.f32 %v3222, 0.0
        %v3333 = vmax.f32 %v3225, 0.0
        %v3334 = vmax.f32 %v3230, 0.0
        %v3335 = vmax.f32 %v3233, 0.0
        %v3336 = vmax.f32 %v3238, 0.0
        %v3337 = vmax.f32 %v3241, 0.0
        %v3338 = vmax.f32 %v3246, 0.0
        %v3339 = vmax.f32 %v3249, 0.0
        %v3340 = vmax.f32 %v3254, 0.0
        %v3341 = vmax.f32 %v3257, 0.0
        %v3342 = vmax.f32 %v3262, 0.0
        %v3343 = vmax.f32 %v3265, 0.0
        %v3344 = vmax.f32 %v3270, 0.0
        %v3345 = vmax.f32 %v3273, 0.0
        %v3346 = vmax.f32 %v3278, 0.0
        %v3347 = vmax.f32 %v3281, 0.0
        %v3348 = vpack.c.bf16 %v3285, %v3284
        %v3349 = vpack.c.bf16 %v3287, %v3286
        %v3350 = vpack.c.bf16 %v3289, %v3288
        %v3351 = vpack.c.bf16 %v3291, %v3290
        %v3352 = vpack.c.bf16 %v3293, %v3292
        %v3353 = vpack.c.bf16 %v3295, %v3294
        %v3354 = vpack.c.bf16 %v3297, %v3296
        %v3355 = vpack.c.bf16 %v3299, %v3298
        %v3356 = vpack.c.bf16 %v3301, %v3300
        %v3357 = vpack.c.bf16 %v3303, %v3302
        %v3358 = vpack.c.bf16 %v3305, %v3304
        %v3359 = vpack.c.bf16 %v3307, %v3306
        %v3360 = vpack.c.bf16 %v3309, %v3308
        %v3361 = vpack.c.bf16 %v3311, %v3310
        %v3362 = vpack.c.bf16 %v3313, %v3312
        %v3363 = vpack.c.bf16 %v3315, %v3314
        %v3364 = vpack.c.bf16 %v3317, %v3316
        %v3365 = vpack.c.bf16 %v3319, %v3318
        %v3366 = vpack.c.bf16 %v3321, %v3320
        %v3367 = vpack.c.bf16 %v3323, %v3322
        %v3368 = vpack.c.bf16 %v3325, %v3324
        %v3369 = vpack.c.bf16 %v3327, %v3326
        %v3370 = vpack.c.bf16 %v3329, %v3328
        %v3371 = vpack.c.bf16 %v3331, %v3330
        %v3372 = vpack.c.bf16 %v3333, %v3332
        %v3373 = vpack.c.bf16 %v3335, %v3334
        %v3374 = vpack.c.bf16 %v3337, %v3336
        %v3375 = vpack.c.bf16 %v3339, %v3338
        %v3376 = vpack.c.bf16 %v3341, %v3340
        %v3377 = vpack.c.bf16 %v3343, %v3342
        %v3378 = vpack.c.bf16 %v3345, %v3344
        %v3379 = vpack.c.bf16 %v3347, %v3346
        %v3380 = vld [vmem:[%s5] sm:$0xff]
        %v3381 = vld [vmem:[%s5 + $0x8] sm:$0xff]
        %v3382 = vld [vmem:[%s5 + $0x10] sm:$0xff]
        %v3383 = vld [vmem:[%s5 + $0x18] sm:$0xff]
        %v3384 = vld [vmem:[%s5 + $0x20] sm:$0xff]
        %v3385 = vld [vmem:[%s5 + $0x28] sm:$0xff]
        %v3386 = vld [vmem:[%s5 + $0x30] sm:$0xff]
        %v3387 = vld [vmem:[%s5 + $0x38] sm:$0xff]
        %v3388 = vld [vmem:[%s5 + $0x40] sm:$0xff]
        %v3389 = vld [vmem:[%s5 + $0x48] sm:$0xff]
        %v3390 = vld [vmem:[%s5 + $0x50] sm:$0xff]
        %v3391 = vld [vmem:[%s5 + $0x58] sm:$0xff]
        %v3392 = vld [vmem:[%s5 + $0x60] sm:$0xff]
        %v3393 = vld [vmem:[%s5 + $0x68] sm:$0xff]
        %v3394 = vld [vmem:[%s5 + $0x70] sm:$0xff]
        %v3395 = vld [vmem:[%s5 + $0x78] sm:$0xff]
        %v3396 = vld [vmem:[%s5 + $0x80] sm:$0xff]
        %v3397 = vld [vmem:[%s5 + $0x88] sm:$0xff]
        %v3398 = vld [vmem:[%s5 + $0x90] sm:$0xff]
        %v3399 = vld [vmem:[%s5 + $0x98] sm:$0xff]
        %v3400 = vld [vmem:[%s5 + $0xa0] sm:$0xff]
        %v3401 = vld [vmem:[%s5 + $0xa8] sm:$0xff]
        %v3402 = vld [vmem:[%s5 + $0xb0] sm:$0xff]
        %v3403 = vld [vmem:[%s5 + $0xb8] sm:$0xff]
        %v3404 = vld [vmem:[%s5 + $0xc0] sm:$0xff]
        %v3405 = vld [vmem:[%s5 + $0xc8] sm:$0xff]
        %v3406 = vld [vmem:[%s5 + $0xd0] sm:$0xff]
        %v3407 = vld [vmem:[%s5 + $0xd8] sm:$0xff]
        %v3408 = vld [vmem:[%s5 + $0xe0] sm:$0xff]
        %v3409 = vld [vmem:[%s5 + $0xe8] sm:$0xff]
        %v3410 = vld [vmem:[%s5 + $0xf0] sm:$0xff]
        %v3411 = vld [vmem:[%s5 + $0xf8] sm:$0xff]
        %v3412 = vld [vmem:[%s6] sm:$0xf]
        %v3414 = vlaneseq
        %v3415 = vshrl.u32 %v3414, 7
        %v3416 = vsub.s32 0, %v3415
        %v3417 = vrot.slane %v3412, %v3416
        %v3418 = vlaneseq
        %v3419 = vshrl.u32 %v3418, 7
        %v3420 = vsub.s32 1, %v3419
        %v3421 = vrot.slane %v3412, %v3420
        %v3422 = vlaneseq
        %v3423 = vshrl.u32 %v3422, 7
        %v3424 = vsub.s32 2, %v3423
        %v3425 = vrot.slane %v3412, %v3424
        %v3426 = vlaneseq
        %v3427 = vshrl.u32 %v3426, 7
        %v3428 = vsub.s32 3, %v3427
        %v3429 = vrot.slane %v3412, %v3428
        %v3466 = vunpack.c.l.b16 %v3380
        %v3467 = vunpack.c.h.b16 %v3380
        %v3468 = vunpack.c.l.b16 %v3381
        %v3469 = vunpack.c.h.b16 %v3381
        %v3470 = vunpack.c.l.b16 %v3382
        %v3471 = vunpack.c.h.b16 %v3382
        %v3472 = vunpack.c.l.b16 %v3383
        %v3473 = vunpack.c.h.b16 %v3383
        %v3474 = vunpack.c.l.b16 %v3384
        %v3475 = vunpack.c.h.b16 %v3384
        %v3476 = vunpack.c.l.b16 %v3385
        %v3477 = vunpack.c.h.b16 %v3385
        %v3478 = vunpack.c.l.b16 %v3386
        %v3479 = vunpack.c.h.b16 %v3386
        %v3480 = vunpack.c.l.b16 %v3387
        %v3481 = vunpack.c.h.b16 %v3387
        %v3482 = vunpack.c.l.b16 %v3388
        %v3483 = vunpack.c.h.b16 %v3388
        %v3484 = vunpack.c.l.b16 %v3389
        %v3485 = vunpack.c.h.b16 %v3389
        %v3486 = vunpack.c.l.b16 %v3390
        %v3487 = vunpack.c.h.b16 %v3390
        %v3488 = vunpack.c.l.b16 %v3391
        %v3489 = vunpack.c.h.b16 %v3391
        %v3490 = vunpack.c.l.b16 %v3392
        %v3491 = vunpack.c.h.b16 %v3392
        %v3492 = vunpack.c.l.b16 %v3393
        %v3493 = vunpack.c.h.b16 %v3393
        %v3494 = vunpack.c.l.b16 %v3394
        %v3495 = vunpack.c.h.b16 %v3394
        %v3496 = vunpack.c.l.b16 %v3395
        %v3497 = vunpack.c.h.b16 %v3395
        %v3498 = vunpack.c.l.b16 %v3396
        %v3499 = vunpack.c.h.b16 %v3396
        %v3500 = vunpack.c.l.b16 %v3397
        %v3501 = vunpack.c.h.b16 %v3397
        %v3502 = vunpack.c.l.b16 %v3398
        %v3503 = vunpack.c.h.b16 %v3398
        %v3504 = vunpack.c.l.b16 %v3399
        %v3505 = vunpack.c.h.b16 %v3399
        %v3506 = vunpack.c.l.b16 %v3400
        %v3507 = vunpack.c.h.b16 %v3400
        %v3508 = vunpack.c.l.b16 %v3401
        %v3509 = vunpack.c.h.b16 %v3401
        %v3510 = vunpack.c.l.b16 %v3402
        %v3511 = vunpack.c.h.b16 %v3402
        %v3512 = vunpack.c.l.b16 %v3403
        %v3513 = vunpack.c.h.b16 %v3403
        %v3514 = vunpack.c.l.b16 %v3404
        %v3515 = vunpack.c.h.b16 %v3404
        %v3516 = vunpack.c.l.b16 %v3405
        %v3517 = vunpack.c.h.b16 %v3405
        %v3518 = vunpack.c.l.b16 %v3406
        %v3519 = vunpack.c.h.b16 %v3406
        %v3520 = vunpack.c.l.b16 %v3407
        %v3521 = vunpack.c.h.b16 %v3407
        %v3522 = vunpack.c.l.b16 %v3408
        %v3523 = vunpack.c.h.b16 %v3408
        %v3524 = vunpack.c.l.b16 %v3409
        %v3525 = vunpack.c.h.b16 %v3409
        %v3526 = vunpack.c.l.b16 %v3410
        %v3527 = vunpack.c.h.b16 %v3410
        %v3528 = vunpack.c.l.b16 %v3411
        %v3529 = vunpack.c.h.b16 %v3411
        %v3530 = vpack.c.b16 %v3470, %v3466
        %v3531 = vpack.c.b16 %v3471, %v3467
        %v3532 = vpack.c.b16 %v3472, %v3468
        %v3533 = vpack.c.b16 %v3473, %v3469
        %v3534 = vpack.c.b16 %v3478, %v3474
        %v3535 = vpack.c.b16 %v3479, %v3475
        %v3536 = vpack.c.b16 %v3480, %v3476
        %v3537 = vpack.c.b16 %v3481, %v3477
        %v3538 = vpack.c.b16 %v3486, %v3482
        %v3539 = vpack.c.b16 %v3487, %v3483
        %v3540 = vpack.c.b16 %v3488, %v3484
        %v3541 = vpack.c.b16 %v3489, %v3485
        %v3542 = vpack.c.b16 %v3494, %v3490
        %v3543 = vpack.c.b16 %v3495, %v3491
        %v3544 = vpack.c.b16 %v3496, %v3492
        %v3545 = vpack.c.b16 %v3497, %v3493
        %v3546 = vpack.c.b16 %v3502, %v3498
        %v3547 = vpack.c.b16 %v3503, %v3499
        %v3548 = vpack.c.b16 %v3504, %v3500
        %v3549 = vpack.c.b16 %v3505, %v3501
        %v3550 = vpack.c.b16 %v3510, %v3506
        %v3551 = vpack.c.b16 %v3511, %v3507
        %v3552 = vpack.c.b16 %v3512, %v3508
        %v3553 = vpack.c.b16 %v3513, %v3509
        %v3554 = vpack.c.b16 %v3518, %v3514
        %v3555 = vpack.c.b16 %v3519, %v3515
        %v3556 = vpack.c.b16 %v3520, %v3516
        %v3557 = vpack.c.b16 %v3521, %v3517
        %v3558 = vpack.c.b16 %v3526, %v3522
        %v3559 = vpack.c.b16 %v3527, %v3523
        %v3560 = vpack.c.b16 %v3528, %v3524
        %v3561 = vpack.c.b16 %v3529, %v3525
        %3594 = vmatprep.subr.bf16.mxu0 %v3531
        %3595 = vmatpush1.bf16.msra.mxu0 %v3530
        %3596 = vmatprep.subr.bf16.mxu0 %v3535
        %3597 = vmatpush1.bf16.msra.mxu0 %v3534
        %3598 = vmatprep.subr.bf16.mxu0 %v3539
        %3599 = vmatpush1.bf16.msra.mxu0 %v3538
        %3600 = vmatprep.subr.bf16.mxu0 %v3543
        %3601 = vmatpush1.bf16.msra.mxu0 %v3542
        %3602 = vmatprep.subr.bf16.mxu0 %v3547
        %3603 = vmatpush1.bf16.msra.mxu0 %v3546
        %3604 = vmatprep.subr.bf16.mxu0 %v3551
        %3605 = vmatpush1.bf16.msra.mxu0 %v3550
        %3606 = vmatprep.subr.bf16.mxu0 %v3555
        %3607 = vmatpush1.bf16.msra.mxu0 %v3554
        %3608 = vmatprep.subr.bf16.mxu0 %v3559
        %3609 = vmatpush1.bf16.msra.mxu0 %v3558
        %3610 = vmatprep.subr.bf16.mxu0 0
        %3611 = vmatpush1.bf16.msra.mxu0 0
        %3612 = vmatprep.subr.bf16.mxu0 0
        %3613 = vmatpush1.bf16.msra.mxu0 0
        %3614 = vmatprep.subr.bf16.mxu0 0
        %3615 = vmatpush1.bf16.msra.mxu0 0
        %3616 = vmatprep.subr.bf16.mxu0 0
        %3617 = vmatpush1.bf16.msra.mxu0 0
        %3618 = vmatprep.subr.bf16.mxu0 0
        %3619 = vmatpush1.bf16.msra.mxu0 0
        %3620 = vmatprep.subr.bf16.mxu0 0
        %3621 = vmatpush1.bf16.msra.mxu0 0
        %3622 = vmatprep.subr.bf16.mxu0 0
        %3623 = vmatpush1.bf16.msra.mxu0 0
        %3624 = vmatprep.subr.bf16.mxu0 0
        %3625 = vmatpush1.bf16.msra.mxu0 0
        %3626 = vmatprep.mubr.bf16.mxu0 0
        %3627 = vmatmul.mubr.bf16.gmra.mrb[0].mxu0 %v3348
        %v3628 = vpop.f32.mrb[0].mxu0
        %v3629 = vadd.f32 %v3417, %v3628
        %v3630 = vpop.f32.mrb[0].mxu0
        %v3631 = vadd.f32 %v3421, %v3630
        %v3632 = vpop.f32.mrb[0].mxu0
        %v3633 = vadd.f32 %v3417, %v3632
        %v3634 = vpop.f32.mrb[0].mxu0
        %v3635 = vadd.f32 %v3421, %v3634
        %3636 = vmatprep.mubr.bf16.mxu0 0
        %3637 = vmatmul.mubr.bf16.gmra.mrb[0].mxu0 %v3349
        %v3638 = vpop.f32.mrb[0].mxu0
        %v3639 = vadd.f32 %v3417, %v3638
        %v3640 = vpop.f32.mrb[0].mxu0
        %v3641 = vadd.f32 %v3421, %v3640
        %v3642 = vpop.f32.mrb[0].mxu0
        %v3643 = vadd.f32 %v3417, %v3642
        %v3644 = vpop.f32.mrb[0].mxu0
        %v3645 = vadd.f32 %v3421, %v3644
        %3646 = vmatprep.mubr.bf16.mxu0 0
        %3647 = vmatmul.mubr.bf16.gmra.mrb[0].mxu0 %v3350
        %v3648 = vpop.f32.mrb[0].mxu0
        %v3649 = vadd.f32 %v3417, %v3648
        %v3650 = vpop.f32.mrb[0].mxu0
        %v3651 = vadd.f32 %v3421, %v3650
        %v3652 = vpop.f32.mrb[0].mxu0
        %v3653 = vadd.f32 %v3417, %v3652
        %v3654 = vpop.f32.mrb[0].mxu0
        %v3655 = vadd.f32 %v3421, %v3654
        %3656 = vmatprep.mubr.bf16.mxu0 0
        %3657 = vmatmul.mubr.bf16.gmra.mrb[0].mxu0 %v3351
        %v3658 = vpop.f32.mrb[0].mxu0
        %v3659 = vadd.f32 %v3417, %v3658
        %v3660 = vpop.f32.mrb[0].mxu0
        %v3661 = vadd.f32 %v3421, %v3660
        %v3662 = vpop.f32.mrb[0].mxu0
        %v3663 = vadd.f32 %v3417, %v3662
        %v3664 = vpop.f32.mrb[0].mxu0
        %v3665 = vadd.f32 %v3421, %v3664
        %3666 = vmatprep.mubr.bf16.mxu0 0
        %3667 = vmatmul.mubr.bf16.gmra.mrb[0].mxu0 %v3352
        %v3668 = vpop.f32.mrb[0].mxu0
        %v3669 = vadd.f32 %v3417, %v3668
        %v3670 = vpop.f32.mrb[0].mxu0
        %v3671 = vadd.f32 %v3421, %v3670
        %v3672 = vpop.f32.mrb[0].mxu0
        %v3673 = vadd.f32 %v3417, %v3672
        %v3674 = vpop.f32.mrb[0].mxu0
        %v3675 = vadd.f32 %v3421, %v3674
        %3676 = vmatprep.mubr.bf16.mxu0 0
        %3677 = vmatmul.mubr.bf16.gmra.mrb[0].mxu0 %v3353
        %v3678 = vpop.f32.mrb[0].mxu0
        %v3679 = vadd.f32 %v3417, %v3678
        %v3680 = vpop.f32.mrb[0].mxu0
        %v3681 = vadd.f32 %v3421, %v3680
        %v3682 = vpop.f32.mrb[0].mxu0
        %v3683 = vadd.f32 %v3417, %v3682
        %v3684 = vpop.f32.mrb[0].mxu0
        %v3685 = vadd.f32 %v3421, %v3684
        %3686 = vmatprep.mubr.bf16.mxu0 0
        %3687 = vmatmul.mubr.bf16.gmra.mrb[0].mxu0 %v3354
        %v3688 = vpop.f32.mrb[0].mxu0
        %v3689 = vadd.f32 %v3417, %v3688
        %v3690 = vpop.f32.mrb[0].mxu0
        %v3691 = vadd.f32 %v3421, %v3690
        %v3692 = vpop.f32.mrb[0].mxu0
        %v3693 = vadd.f32 %v3417, %v3692
        %v3694 = vpop.f32.mrb[0].mxu0
        %v3695 = vadd.f32 %v3421, %v3694
        %3696 = vmatprep.mubr.bf16.mxu0 0
        %3697 = vmatmul.mubr.bf16.gmra.mrb[0].mxu0 %v3355
        %v3698 = vpop.f32.mrb[0].mxu0
        %v3699 = vadd.f32 %v3417, %v3698
        %v3700 = vpop.f32.mrb[0].mxu0
        %v3701 = vadd.f32 %v3421, %v3700
        %v3702 = vpop.f32.mrb[0].mxu0
        %v3703 = vadd.f32 %v3417, %v3702
        %v3704 = vpop.f32.mrb[0].mxu0
        %v3705 = vadd.f32 %v3421, %v3704
        %3706 = vmatprep.mubr.bf16.mxu0 0
        %3707 = vmatmul.mubr.bf16.gmra.mrb[0].mxu0 %v3356
        %v3708 = vpop.f32.mrb[0].mxu0
        %v3709 = vadd.f32 %v3417, %v3708
        %v3710 = vpop.f32.mrb[0].mxu0
        %v3711 = vadd.f32 %v3421, %v3710
        %v3712 = vpop.f32.mrb[0].mxu0
        %v3713 = vadd.f32 %v3417, %v3712
        %v3714 = vpop.f32.mrb[0].mxu0
        %v3715 = vadd.f32 %v3421, %v3714
        %3716 = vmatprep.mubr.bf16.mxu0 0
        %3717 = vmatmul.mubr.bf16.gmra.mrb[0].mxu0 %v3357
        %v3718 = vpop.f32.mrb[0].mxu0
        %v3719 = vadd.f32 %v3417, %v3718
        %v3720 = vpop.f32.mrb[0].mxu0
        %v3721 = vadd.f32 %v3421, %v3720
        %v3722 = vpop.f32.mrb[0].mxu0
        %v3723 = vadd.f32 %v3417, %v3722
        %v3724 = vpop.f32.mrb[0].mxu0
        %v3725 = vadd.f32 %v3421, %v3724
        %3726 = vmatprep.mubr.bf16.mxu0 0
        %3727 = vmatmul.mubr.bf16.gmra.mrb[0].mxu0 %v3358
        %v3728 = vpop.f32.mrb[0].mxu0
        %v3729 = vadd.f32 %v3417, %v3728
        %v3730 = vpop.f32.mrb[0].mxu0
        %v3731 = vadd.f32 %v3421, %v3730
        %v3732 = vpop.f32.mrb[0].mxu0
        %v3733 = vadd.f32 %v3417, %v3732
        %v3734 = vpop.f32.mrb[0].mxu0
        %v3735 = vadd.f32 %v3421, %v3734
        %3736 = vmatprep.mubr.bf16.mxu0 0
        %3737 = vmatmul.mubr.bf16.gmra.mrb[0].mxu0 %v3359
        %v3738 = vpop.f32.mrb[0].mxu0
        %v3739 = vadd.f32 %v3417, %v3738
        %v3740 = vpop.f32.mrb[0].mxu0
        %v3741 = vadd.f32 %v3421, %v3740
        %v3742 = vpop.f32.mrb[0].mxu0
        %v3743 = vadd.f32 %v3417, %v3742
        %v3744 = vpop.f32.mrb[0].mxu0
        %v3745 = vadd.f32 %v3421, %v3744
        %3746 = vmatprep.mubr.bf16.mxu0 0
        %3747 = vmatmul.mubr.bf16.gmra.mrb[0].mxu0 %v3360
        %v3748 = vpop.f32.mrb[0].mxu0
        %v3749 = vadd.f32 %v3417, %v3748
        %v3750 = vpop.f32.mrb[0].mxu0
        %v3751 = vadd.f32 %v3421, %v3750
        %v3752 = vpop.f32.mrb[0].mxu0
        %v3753 = vadd.f32 %v3417, %v3752
        %v3754 = vpop.f32.mrb[0].mxu0
        %v3755 = vadd.f32 %v3421, %v3754
        %3756 = vmatprep.mubr.bf16.mxu0 0
        %3757 = vmatmul.mubr.bf16.gmra.mrb[0].mxu0 %v3361
        %v3758 = vpop.f32.mrb[0].mxu0
        %v3759 = vadd.f32 %v3417, %v3758
        %v3760 = vpop.f32.mrb[0].mxu0
        %v3761 = vadd.f32 %v3421, %v3760
        %v3762 = vpop.f32.mrb[0].mxu0
        %v3763 = vadd.f32 %v3417, %v3762
        %v3764 = vpop.f32.mrb[0].mxu0
        %v3765 = vadd.f32 %v3421, %v3764
        %3766 = vmatprep.mubr.bf16.mxu0 0
        %3767 = vmatmul.mubr.bf16.gmra.mrb[0].mxu0 %v3362
        %v3768 = vpop.f32.mrb[0].mxu0
        %v3769 = vadd.f32 %v3417, %v3768
        %v3770 = vpop.f32.mrb[0].mxu0
        %v3771 = vadd.f32 %v3421, %v3770
        %v3772 = vpop.f32.mrb[0].mxu0
        %v3773 = vadd.f32 %v3417, %v3772
        %v3774 = vpop.f32.mrb[0].mxu0
        %v3775 = vadd.f32 %v3421, %v3774
        %3776 = vmatprep.mubr.bf16.mxu0 0
        %3777 = vmatmul.mubr.bf16.gmra.mrb[0].mxu0 %v3363
        %v3778 = vpop.f32.mrb[0].mxu0
        %v3779 = vadd.f32 %v3417, %v3778
        %v3780 = vpop.f32.mrb[0].mxu0
        %v3781 = vadd.f32 %v3421, %v3780
        %v3782 = vpop.f32.mrb[0].mxu0
        %v3783 = vadd.f32 %v3417, %v3782
        %v3784 = vpop.f32.mrb[0].mxu0
        %v3785 = vadd.f32 %v3421, %v3784
        %3786 = vmatprep.mubr.bf16.mxu0 0
        %3787 = vmatmul.mubr.bf16.gmra.mrb[0].mxu0 %v3364
        %v3788 = vpop.f32.mrb[0].mxu0
        %v3789 = vadd.f32 %v3417, %v3788
        %v3790 = vpop.f32.mrb[0].mxu0
        %v3791 = vadd.f32 %v3421, %v3790
        %v3792 = vpop.f32.mrb[0].mxu0
        %v3793 = vadd.f32 %v3417, %v3792
        %v3794 = vpop.f32.mrb[0].mxu0
        %v3795 = vadd.f32 %v3421, %v3794
        %3796 = vmatprep.mubr.bf16.mxu0 0
        %3797 = vmatmul.mubr.bf16.gmra.mrb[0].mxu0 %v3365
        %v3798 = vpop.f32.mrb[0].mxu0
        %v3799 = vadd.f32 %v3417, %v3798
        %v3800 = vpop.f32.mrb[0].mxu0
        %v3801 = vadd.f32 %v3421, %v3800
        %v3802 = vpop.f32.mrb[0].mxu0
        %v3803 = vadd.f32 %v3417, %v3802
        %v3804 = vpop.f32.mrb[0].mxu0
        %v3805 = vadd.f32 %v3421, %v3804
        %3806 = vmatprep.mubr.bf16.mxu0 0
        %3807 = vmatmul.mubr.bf16.gmra.mrb[0].mxu0 %v3366
        %v3808 = vpop.f32.mrb[0].mxu0
        %v3809 = vadd.f32 %v3417, %v3808
        %v3810 = vpop.f32.mrb[0].mxu0
        %v3811 = vadd.f32 %v3421, %v3810
        %v3812 = vpop.f32.mrb[0].mxu0
        %v3813 = vadd.f32 %v3417, %v3812
        %v3814 = vpop.f32.mrb[0].mxu0
        %v3815 = vadd.f32 %v3421, %v3814
        %3816 = vmatprep.mubr.bf16.mxu0 0
        %3817 = vmatmul.mubr.bf16.gmra.mrb[0].mxu0 %v3367
        %v3818 = vpop.f32.mrb[0].mxu0
        %v3819 = vadd.f32 %v3417, %v3818
        %v3820 = vpop.f32.mrb[0].mxu0
        %v3821 = vadd.f32 %v3421, %v3820
        %v3822 = vpop.f32.mrb[0].mxu0
        %v3823 = vadd.f32 %v3417, %v3822
        %v3824 = vpop.f32.mrb[0].mxu0
        %v3825 = vadd.f32 %v3421, %v3824
        %3826 = vmatprep.mubr.bf16.mxu0 0
        %3827 = vmatmul.mubr.bf16.gmra.mrb[0].mxu0 %v3368
        %v3828 = vpop.f32.mrb[0].mxu0
        %v3829 = vadd.f32 %v3417, %v3828
        %v3830 = vpop.f32.mrb[0].mxu0
        %v3831 = vadd.f32 %v3421, %v3830
        %v3832 = vpop.f32.mrb[0].mxu0
        %v3833 = vadd.f32 %v3417, %v3832
        %v3834 = vpop.f32.mrb[0].mxu0
        %v3835 = vadd.f32 %v3421, %v3834
        %3836 = vmatprep.mubr.bf16.mxu0 0
        %3837 = vmatmul.mubr.bf16.gmra.mrb[0].mxu0 %v3369
        %v3838 = vpop.f32.mrb[0].mxu0
        %v3839 = vadd.f32 %v3417, %v3838
        %v3840 = vpop.f32.mrb[0].mxu0
        %v3841 = vadd.f32 %v3421, %v3840
        %v3842 = vpop.f32.mrb[0].mxu0
        %v3843 = vadd.f32 %v3417, %v3842
        %v3844 = vpop.f32.mrb[0].mxu0
        %v3845 = vadd.f32 %v3421, %v3844
        %3846 = vmatprep.mubr.bf16.mxu0 0
        %3847 = vmatmul.mubr.bf16.gmra.mrb[0].mxu0 %v3370
        %v3848 = vpop.f32.mrb[0].mxu0
        %v3849 = vadd.f32 %v3417, %v3848
        %v3850 = vpop.f32.mrb[0].mxu0
        %v3851 = vadd.f32 %v3421, %v3850
        %v3852 = vpop.f32.mrb[0].mxu0
        %v3853 = vadd.f32 %v3417, %v3852
        %v3854 = vpop.f32.mrb[0].mxu0
        %v3855 = vadd.f32 %v3421, %v3854
        %3856 = vmatprep.mubr.bf16.mxu0 0
        %3857 = vmatmul.mubr.bf16.gmra.mrb[0].mxu0 %v3371
        %v3858 = vpop.f32.mrb[0].mxu0
        %v3859 = vadd.f32 %v3417, %v3858
        %v3860 = vpop.f32.mrb[0].mxu0
        %v3861 = vadd.f32 %v3421, %v3860
        %v3862 = vpop.f32.mrb[0].mxu0
        %v3863 = vadd.f32 %v3417, %v3862
        %v3864 = vpop.f32.mrb[0].mxu0
        %v3865 = vadd.f32 %v3421, %v3864
        %3866 = vmatprep.mubr.bf16.mxu0 0
        %3867 = vmatmul.mubr.bf16.gmra.mrb[0].mxu0 %v3372
        %v3868 = vpop.f32.mrb[0].mxu0
        %v3869 = vadd.f32 %v3417, %v3868
        %v3870 = vpop.f32.mrb[0].mxu0
        %v3871 = vadd.f32 %v3421, %v3870
        %v3872 = vpop.f32.mrb[0].mxu0
        %v3873 = vadd.f32 %v3417, %v3872
        %v3874 = vpop.f32.mrb[0].mxu0
        %v3875 = vadd.f32 %v3421, %v3874
        %3876 = vmatprep.mubr.bf16.mxu0 0
        %3877 = vmatmul.mubr.bf16.gmra.mrb[0].mxu0 %v3373
        %v3878 = vpop.f32.mrb[0].mxu0
        %v3879 = vadd.f32 %v3417, %v3878
        %v3880 = vpop.f32.mrb[0].mxu0
        %v3881 = vadd.f32 %v3421, %v3880
        %v3882 = vpop.f32.mrb[0].mxu0
        %v3883 = vadd.f32 %v3417, %v3882
        %v3884 = vpop.f32.mrb[0].mxu0
        %v3885 = vadd.f32 %v3421, %v3884
        %3886 = vmatprep.mubr.bf16.mxu0 0
        %3887 = vmatmul.mubr.bf16.gmra.mrb[0].mxu0 %v3374
        %v3888 = vpop.f32.mrb[0].mxu0
        %v3889 = vadd.f32 %v3417, %v3888
        %v3890 = vpop.f32.mrb[0].mxu0
        %v3891 = vadd.f32 %v3421, %v3890
        %v3892 = vpop.f32.mrb[0].mxu0
        %v3893 = vadd.f32 %v3417, %v3892
        %v3894 = vpop.f32.mrb[0].mxu0
        %v3895 = vadd.f32 %v3421, %v3894
        %3896 = vmatprep.mubr.bf16.mxu0 0
        %3897 = vmatmul.mubr.bf16.gmra.mrb[0].mxu0 %v3375
        %v3898 = vpop.f32.mrb[0].mxu0
        %v3899 = vadd.f32 %v3417, %v3898
        %v3900 = vpop.f32.mrb[0].mxu0
        %v3901 = vadd.f32 %v3421, %v3900
        %v3902 = vpop.f32.mrb[0].mxu0
        %v3903 = vadd.f32 %v3417, %v3902
        %v3904 = vpop.f32.mrb[0].mxu0
        %v3905 = vadd.f32 %v3421, %v3904
        %3906 = vmatprep.mubr.bf16.mxu0 0
        %3907 = vmatmul.mubr.bf16.gmra.mrb[0].mxu0 %v3376
        %v3908 = vpop.f32.mrb[0].mxu0
        %v3909 = vadd.f32 %v3417, %v3908
        %v3910 = vpop.f32.mrb[0].mxu0
        %v3911 = vadd.f32 %v3421, %v3910
        %v3912 = vpop.f32.mrb[0].mxu0
        %v3913 = vadd.f32 %v3417, %v3912
        %v3914 = vpop.f32.mrb[0].mxu0
        %v3915 = vadd.f32 %v3421, %v3914
        %3916 = vmatprep.mubr.bf16.mxu0 0
        %3917 = vmatmul.mubr.bf16.gmra.mrb[0].mxu0 %v3377
        %v3918 = vpop.f32.mrb[0].mxu0
        %v3919 = vadd.f32 %v3417, %v3918
        %v3920 = vpop.f32.mrb[0].mxu0
        %v3921 = vadd.f32 %v3421, %v3920
        %v3922 = vpop.f32.mrb[0].mxu0
        %v3923 = vadd.f32 %v3417, %v3922
        %v3924 = vpop.f32.mrb[0].mxu0
        %v3925 = vadd.f32 %v3421, %v3924
        %3926 = vmatprep.mubr.bf16.mxu0 0
        %3927 = vmatmul.mubr.bf16.gmra.mrb[0].mxu0 %v3378
        %v3928 = vpop.f32.mrb[0].mxu0
        %v3929 = vadd.f32 %v3417, %v3928
        %v3930 = vpop.f32.mrb[0].mxu0
        %v3931 = vadd.f32 %v3421, %v3930
        %v3932 = vpop.f32.mrb[0].mxu0
        %v3933 = vadd.f32 %v3417, %v3932
        %v3934 = vpop.f32.mrb[0].mxu0
        %v3935 = vadd.f32 %v3421, %v3934
        %3936 = vmatprep.mubr.bf16.mxu0 0
        %3937 = vmatmul.mubr.bf16.gmra.mrb[0].mxu0 %v3379
        %v3938 = vpop.f32.mrb[0].mxu0
        %v3939 = vadd.f32 %v3417, %v3938
        %v3940 = vpop.f32.mrb[0].mxu0
        %v3941 = vadd.f32 %v3421, %v3940
        %v3942 = vpop.f32.mrb[0].mxu0
        %v3943 = vadd.f32 %v3417, %v3942
        %v3944 = vpop.f32.mrb[0].mxu0
        %v3945 = vadd.f32 %v3421, %v3944
        %3946 = vdwg.mxu0
        %3947 = vmatprep.subr.bf16.mxu0 %v3533
        %3948 = vmatpush1.bf16.msra.mxu0 %v3532
        %3949 = vmatprep.subr.bf16.mxu0 %v3537
        %3950 = vmatpush1.bf16.msra.mxu0 %v3536
        %3951 = vmatprep.subr.bf16.mxu0 %v3541
        %3952 = vmatpush1.bf16.msra.mxu0 %v3540
        %3953 = vmatprep.subr.bf16.mxu0 %v3545
        %3954 = vmatpush1.bf16.msra.mxu0 %v3544
        %3955 = vmatprep.subr.bf16.mxu0 %v3549
        %3956 = vmatpush1.bf16.msra.mxu0 %v3548
        %3957 = vmatprep.subr.bf16.mxu0 %v3553
        %3958 = vmatpush1.bf16.msra.mxu0 %v3552
        %3959 = vmatprep.subr.bf16.mxu0 %v3557
        %3960 = vmatpush1.bf16.msra.mxu0 %v3556
        %3961 = vmatprep.subr.bf16.mxu0 %v3561
        %3962 = vmatpush1.bf16.msra.mxu0 %v3560
        %3963 = vmatprep.subr.bf16.mxu0 0
        %3964 = vmatpush1.bf16.msra.mxu0 0
        %3965 = vmatprep.subr.bf16.mxu0 0
        %3966 = vmatpush1.bf16.msra.mxu0 0
        %3967 = vmatprep.subr.bf16.mxu0 0
        %3968 = vmatpush1.bf16.msra.mxu0 0
        %3969 = vmatprep.subr.bf16.mxu0 0
        %3970 = vmatpush1.bf16.msra.mxu0 0
        %3971 = vmatprep.subr.bf16.mxu0 0
        %3972 = vmatpush1.bf16.msra.mxu0 0
        %3973 = vmatprep.subr.bf16.mxu0 0
        %3974 = vmatpush1.bf16.msra.mxu0 0
        %3975 = vmatprep.subr.bf16.mxu0 0
        %3976 = vmatpush1.bf16.msra.mxu0 0
        %3977 = vmatprep.subr.bf16.mxu0 0
        %3978 = vmatpush1.bf16.msra.mxu0 0
        %3979 = vmatprep.mubr.bf16.mxu0 0
        %3980 = vmatmul.mubr.bf16.gmra.mrb[0].mxu0 %v3348
        %v3981 = vpop.f32.mrb[0].mxu0
        %v3982 = vadd.f32 %v3425, %v3981
        %v3983 = vpop.f32.mrb[0].mxu0
        %v3984 = vadd.f32 %v3429, %v3983
        %v3985 = vpop.f32.mrb[0].mxu0
        %v3986 = vadd.f32 %v3425, %v3985
        %v3987 = vpop.f32.mrb[0].mxu0
        %v3988 = vadd.f32 %v3429, %v3987
        %3989 = vmatprep.mubr.bf16.mxu0 0
        %3990 = vmatmul.mubr.bf16.gmra.mrb[0].mxu0 %v3349
        %v3991 = vpop.f32.mrb[0].mxu0
        %v3992 = vadd.f32 %v3425, %v3991
        %v3993 = vpop.f32.mrb[0].mxu0
        %v3994 = vadd.f32 %v3429, %v3993
        %v3995 = vpop.f32.mrb[0].mxu0
        %v3996 = vadd.f32 %v3425, %v3995
        %v3997 = vpop.f32.mrb[0].mxu0
        %v3998 = vadd.f32 %v3429, %v3997
        %3999 = vmatprep.mubr.bf16.mxu0 0
        %4000 = vmatmul.mubr.bf16.gmra.mrb[0].mxu0 %v3350
        %v4001 = vpop.f32.mrb[0].mxu0
        %v4002 = vadd.f32 %v3425, %v4001
        %v4003 = vpop.f32.mrb[0].mxu0
        %v4004 = vadd.f32 %v3429, %v4003
        %v4005 = vpop.f32.mrb[0].mxu0
        %v4006 = vadd.f32 %v3425, %v4005
        %v4007 = vpop.f32.mrb[0].mxu0
        %v4008 = vadd.f32 %v3429, %v4007
        %4009 = vmatprep.mubr.bf16.mxu0 0
        %4010 = vmatmul.mubr.bf16.gmra.mrb[0].mxu0 %v3351
        %v4011 = vpop.f32.mrb[0].mxu0
        %v4012 = vadd.f32 %v3425, %v4011
        %v4013 = vpop.f32.mrb[0].mxu0
        %v4014 = vadd.f32 %v3429, %v4013
        %v4015 = vpop.f32.mrb[0].mxu0
        %v4016 = vadd.f32 %v3425, %v4015
        %v4017 = vpop.f32.mrb[0].mxu0
        %v4018 = vadd.f32 %v3429, %v4017
        %4019 = vmatprep.mubr.bf16.mxu0 0
        %4020 = vmatmul.mubr.bf16.gmra.mrb[0].mxu0 %v3352
        %v4021 = vpop.f32.mrb[0].mxu0
        %v4022 = vadd.f32 %v3425, %v4021
        %v4023 = vpop.f32.mrb[0].mxu0
        %v4024 = vadd.f32 %v3429, %v4023
        %v4025 = vpop.f32.mrb[0].mxu0
        %v4026 = vadd.f32 %v3425, %v4025
        %v4027 = vpop.f32.mrb[0].mxu0
        %v4028 = vadd.f32 %v3429, %v4027
        %4029 = vmatprep.mubr.bf16.mxu0 0
        %4030 = vmatmul.mubr.bf16.gmra.mrb[0].mxu0 %v3353
        %v4031 = vpop.f32.mrb[0].mxu0
        %v4032 = vadd.f32 %v3425, %v4031
        %v4033 = vpop.f32.mrb[0].mxu0
        %v4034 = vadd.f32 %v3429, %v4033
        %v4035 = vpop.f32.mrb[0].mxu0
        %v4036 = vadd.f32 %v3425, %v4035
        %v4037 = vpop.f32.mrb[0].mxu0
        %v4038 = vadd.f32 %v3429, %v4037
        %4039 = vmatprep.mubr.bf16.mxu0 0
        %4040 = vmatmul.mubr.bf16.gmra.mrb[0].mxu0 %v3354
        %v4041 = vpop.f32.mrb[0].mxu0
        %v4042 = vadd.f32 %v3425, %v4041
        %v4043 = vpop.f32.mrb[0].mxu0
        %v4044 = vadd.f32 %v3429, %v4043
        %v4045 = vpop.f32.mrb[0].mxu0
        %v4046 = vadd.f32 %v3425, %v4045
        %v4047 = vpop.f32.mrb[0].mxu0
        %v4048 = vadd.f32 %v3429, %v4047
        %4049 = vmatprep.mubr.bf16.mxu0 0
        %4050 = vmatmul.mubr.bf16.gmra.mrb[0].mxu0 %v3355
        %v4051 = vpop.f32.mrb[0].mxu0
        %v4052 = vadd.f32 %v3425, %v4051
        %v4053 = vpop.f32.mrb[0].mxu0
        %v4054 = vadd.f32 %v3429, %v4053
        %v4055 = vpop.f32.mrb[0].mxu0
        %v4056 = vadd.f32 %v3425, %v4055
        %v4057 = vpop.f32.mrb[0].mxu0
        %v4058 = vadd.f32 %v3429, %v4057
        %4059 = vmatprep.mubr.bf16.mxu0 0
        %4060 = vmatmul.mubr.bf16.gmra.mrb[0].mxu0 %v3356
        %v4061 = vpop.f32.mrb[0].mxu0
        %v4062 = vadd.f32 %v3425, %v4061
        %v4063 = vpop.f32.mrb[0].mxu0
        %v4064 = vadd.f32 %v3429, %v4063
        %v4065 = vpop.f32.mrb[0].mxu0
        %v4066 = vadd.f32 %v3425, %v4065
        %v4067 = vpop.f32.mrb[0].mxu0
        %v4068 = vadd.f32 %v3429, %v4067
        %4069 = vmatprep.mubr.bf16.mxu0 0
        %4070 = vmatmul.mubr.bf16.gmra.mrb[0].mxu0 %v3357
        %v4071 = vpop.f32.mrb[0].mxu0
        %v4072 = vadd.f32 %v3425, %v4071
        %v4073 = vpop.f32.mrb[0].mxu0
        %v4074 = vadd.f32 %v3429, %v4073
        %v4075 = vpop.f32.mrb[0].mxu0
        %v4076 = vadd.f32 %v3425, %v4075
        %v4077 = vpop.f32.mrb[0].mxu0
        %v4078 = vadd.f32 %v3429, %v4077
        %4079 = vmatprep.mubr.bf16.mxu0 0
        %4080 = vmatmul.mubr.bf16.gmra.mrb[0].mxu0 %v3358
        %v4081 = vpop.f32.mrb[0].mxu0
        %v4082 = vadd.f32 %v3425, %v4081
        %v4083 = vpop.f32.mrb[0].mxu0
        %v4084 = vadd.f32 %v3429, %v4083
        %v4085 = vpop.f32.mrb[0].mxu0
        %v4086 = vadd.f32 %v3425, %v4085
        %v4087 = vpop.f32.mrb[0].mxu0
        %v4088 = vadd.f32 %v3429, %v4087
        %4089 = vmatprep.mubr.bf16.mxu0 0
        %4090 = vmatmul.mubr.bf16.gmra.mrb[0].mxu0 %v3359
        %v4091 = vpop.f32.mrb[0].mxu0
        %v4092 = vadd.f32 %v3425, %v4091
        %v4093 = vpop.f32.mrb[0].mxu0
        %v4094 = vadd.f32 %v3429, %v4093
        %v4095 = vpop.f32.mrb[0].mxu0
        %v4096 = vadd.f32 %v3425, %v4095
        %v4097 = vpop.f32.mrb[0].mxu0
        %v4098 = vadd.f32 %v3429, %v4097
        %4099 = vmatprep.mubr.bf16.mxu0 0
        %4100 = vmatmul.mubr.bf16.gmra.mrb[0].mxu0 %v3360
        %v4101 = vpop.f32.mrb[0].mxu0
        %v4102 = vadd.f32 %v3425, %v4101
        %v4103 = vpop.f32.mrb[0].mxu0
        %v4104 = vadd.f32 %v3429, %v4103
        %v4105 = vpop.f32.mrb[0].mxu0
        %v4106 = vadd.f32 %v3425, %v4105
        %v4107 = vpop.f32.mrb[0].mxu0
        %v4108 = vadd.f32 %v3429, %v4107
        %4109 = vmatprep.mubr.bf16.mxu0 0
        %4110 = vmatmul.mubr.bf16.gmra.mrb[0].mxu0 %v3361
        %v4111 = vpop.f32.mrb[0].mxu0
        %v4112 = vadd.f32 %v3425, %v4111
        %v4113 = vpop.f32.mrb[0].mxu0
        %v4114 = vadd.f32 %v3429, %v4113
        %v4115 = vpop.f32.mrb[0].mxu0
        %v4116 = vadd.f32 %v3425, %v4115
        %v4117 = vpop.f32.mrb[0].mxu0
        %v4118 = vadd.f32 %v3429, %v4117
        %4119 = vmatprep.mubr.bf16.mxu0 0
        %4120 = vmatmul.mubr.bf16.gmra.mrb[0].mxu0 %v3362
        %v4121 = vpop.f32.mrb[0].mxu0
        %v4122 = vadd.f32 %v3425, %v4121
        %v4123 = vpop.f32.mrb[0].mxu0
        %v4124 = vadd.f32 %v3429, %v4123
        %v4125 = vpop.f32.mrb[0].mxu0
        %v4126 = vadd.f32 %v3425, %v4125
        %v4127 = vpop.f32.mrb[0].mxu0
        %v4128 = vadd.f32 %v3429, %v4127
        %4129 = vmatprep.mubr.bf16.mxu0 0
        %4130 = vmatmul.mubr.bf16.gmra.mrb[0].mxu0 %v3363
        %v4131 = vpop.f32.mrb[0].mxu0
        %v4132 = vadd.f32 %v3425, %v4131
        %v4133 = vpop.f32.mrb[0].mxu0
        %v4134 = vadd.f32 %v3429, %v4133
        %v4135 = vpop.f32.mrb[0].mxu0
        %v4136 = vadd.f32 %v3425, %v4135
        %v4137 = vpop.f32.mrb[0].mxu0
        %v4138 = vadd.f32 %v3429, %v4137
        %4139 = vmatprep.mubr.bf16.mxu0 0
        %4140 = vmatmul.mubr.bf16.gmra.mrb[0].mxu0 %v3364
        %v4141 = vpop.f32.mrb[0].mxu0
        %v4142 = vadd.f32 %v3425, %v4141
        %v4143 = vpop.f32.mrb[0].mxu0
        %v4144 = vadd.f32 %v3429, %v4143
        %v4145 = vpop.f32.mrb[0].mxu0
        %v4146 = vadd.f32 %v3425, %v4145
        %v4147 = vpop.f32.mrb[0].mxu0
        %v4148 = vadd.f32 %v3429, %v4147
        %4149 = vmatprep.mubr.bf16.mxu0 0
        %4150 = vmatmul.mubr.bf16.gmra.mrb[0].mxu0 %v3365
        %v4151 = vpop.f32.mrb[0].mxu0
        %v4152 = vadd.f32 %v3425, %v4151
        %v4153 = vpop.f32.mrb[0].mxu0
        %v4154 = vadd.f32 %v3429, %v4153
        %v4155 = vpop.f32.mrb[0].mxu0
        %v4156 = vadd.f32 %v3425, %v4155
        %v4157 = vpop.f32.mrb[0].mxu0
        %v4158 = vadd.f32 %v3429, %v4157
        %4159 = vmatprep.mubr.bf16.mxu0 0
        %4160 = vmatmul.mubr.bf16.gmra.mrb[0].mxu0 %v3366
        %v4161 = vpop.f32.mrb[0].mxu0
        %v4162 = vadd.f32 %v3425, %v4161
        %v4163 = vpop.f32.mrb[0].mxu0
        %v4164 = vadd.f32 %v3429, %v4163
        %v4165 = vpop.f32.mrb[0].mxu0
        %v4166 = vadd.f32 %v3425, %v4165
        %v4167 = vpop.f32.mrb[0].mxu0
        %v4168 = vadd.f32 %v3429, %v4167
        %4169 = vmatprep.mubr.bf16.mxu0 0
        %4170 = vmatmul.mubr.bf16.gmra.mrb[0].mxu0 %v3367
        %v4171 = vpop.f32.mrb[0].mxu0
        %v4172 = vadd.f32 %v3425, %v4171
        %v4173 = vpop.f32.mrb[0].mxu0
        %v4174 = vadd.f32 %v3429, %v4173
        %v4175 = vpop.f32.mrb[0].mxu0
        %v4176 = vadd.f32 %v3425, %v4175
        %v4177 = vpop.f32.mrb[0].mxu0
        %v4178 = vadd.f32 %v3429, %v4177
        %4179 = vmatprep.mubr.bf16.mxu0 0
        %4180 = vmatmul.mubr.bf16.gmra.mrb[0].mxu0 %v3368
        %v4181 = vpop.f32.mrb[0].mxu0
        %v4182 = vadd.f32 %v3425, %v4181
        %v4183 = vpop.f32.mrb[0].mxu0
        %v4184 = vadd.f32 %v3429, %v4183
        %v4185 = vpop.f32.mrb[0].mxu0
        %v4186 = vadd.f32 %v3425, %v4185
        %v4187 = vpop.f32.mrb[0].mxu0
        %v4188 = vadd.f32 %v3429, %v4187
        %4189 = vmatprep.mubr.bf16.mxu0 0
        %4190 = vmatmul.mubr.bf16.gmra.mrb[0].mxu0 %v3369
        %v4191 = vpop.f32.mrb[0].mxu0
        %v4192 = vadd.f32 %v3425, %v4191
        %v4193 = vpop.f32.mrb[0].mxu0
        %v4194 = vadd.f32 %v3429, %v4193
        %v4195 = vpop.f32.mrb[0].mxu0
        %v4196 = vadd.f32 %v3425, %v4195
        %v4197 = vpop.f32.mrb[0].mxu0
        %v4198 = vadd.f32 %v3429, %v4197
        %4199 = vmatprep.mubr.bf16.mxu0 0
        %4200 = vmatmul.mubr.bf16.gmra.mrb[0].mxu0 %v3370
        %v4201 = vpop.f32.mrb[0].mxu0
        %v4202 = vadd.f32 %v3425, %v4201
        %v4203 = vpop.f32.mrb[0].mxu0
        %v4204 = vadd.f32 %v3429, %v4203
        %v4205 = vpop.f32.mrb[0].mxu0
        %v4206 = vadd.f32 %v3425, %v4205
        %v4207 = vpop.f32.mrb[0].mxu0
        %v4208 = vadd.f32 %v3429, %v4207
        %4209 = vmatprep.mubr.bf16.mxu0 0
        %4210 = vmatmul.mubr.bf16.gmra.mrb[0].mxu0 %v3371
        %v4211 = vpop.f32.mrb[0].mxu0
        %v4212 = vadd.f32 %v3425, %v4211
        %v4213 = vpop.f32.mrb[0].mxu0
        %v4214 = vadd.f32 %v3429, %v4213
        %v4215 = vpop.f32.mrb[0].mxu0
        %v4216 = vadd.f32 %v3425, %v4215
        %v4217 = vpop.f32.mrb[0].mxu0
        %v4218 = vadd.f32 %v3429, %v4217
        %4219 = vmatprep.mubr.bf16.mxu0 0
        %4220 = vmatmul.mubr.bf16.gmra.mrb[0].mxu0 %v3372
        %v4221 = vpop.f32.mrb[0].mxu0
        %v4222 = vadd.f32 %v3425, %v4221
        %v4223 = vpop.f32.mrb[0].mxu0
        %v4224 = vadd.f32 %v3429, %v4223
        %v4225 = vpop.f32.mrb[0].mxu0
        %v4226 = vadd.f32 %v3425, %v4225
        %v4227 = vpop.f32.mrb[0].mxu0
        %v4228 = vadd.f32 %v3429, %v4227
        %4229 = vmatprep.mubr.bf16.mxu0 0
        %4230 = vmatmul.mubr.bf16.gmra.mrb[0].mxu0 %v3373
        %v4231 = vpop.f32.mrb[0].mxu0
        %v4232 = vadd.f32 %v3425, %v4231
        %v4233 = vpop.f32.mrb[0].mxu0
        %v4234 = vadd.f32 %v3429, %v4233
        %v4235 = vpop.f32.mrb[0].mxu0
        %v4236 = vadd.f32 %v3425, %v4235
        %v4237 = vpop.f32.mrb[0].mxu0
        %v4238 = vadd.f32 %v3429, %v4237
        %4239 = vmatprep.mubr.bf16.mxu0 0
        %4240 = vmatmul.mubr.bf16.gmra.mrb[0].mxu0 %v3374
        %v4241 = vpop.f32.mrb[0].mxu0
        %v4242 = vadd.f32 %v3425, %v4241
        %v4243 = vpop.f32.mrb[0].mxu0
        %v4244 = vadd.f32 %v3429, %v4243
        %v4245 = vpop.f32.mrb[0].mxu0
        %v4246 = vadd.f32 %v3425, %v4245
        %v4247 = vpop.f32.mrb[0].mxu0
        %v4248 = vadd.f32 %v3429, %v4247
        %4249 = vmatprep.mubr.bf16.mxu0 0
        %4250 = vmatmul.mubr.bf16.gmra.mrb[0].mxu0 %v3375
        %v4251 = vpop.f32.mrb[0].mxu0
        %v4252 = vadd.f32 %v3425, %v4251
        %v4253 = vpop.f32.mrb[0].mxu0
        %v4254 = vadd.f32 %v3429, %v4253
        %v4255 = vpop.f32.mrb[0].mxu0
        %v4256 = vadd.f32 %v3425, %v4255
        %v4257 = vpop.f32.mrb[0].mxu0
        %v4258 = vadd.f32 %v3429, %v4257
        %4259 = vmatprep.mubr.bf16.mxu0 0
        %4260 = vmatmul.mubr.bf16.gmra.mrb[0].mxu0 %v3376
        %v4261 = vpop.f32.mrb[0].mxu0
        %v4262 = vadd.f32 %v3425, %v4261
        %v4263 = vpop.f32.mrb[0].mxu0
        %v4264 = vadd.f32 %v3429, %v4263
        %v4265 = vpop.f32.mrb[0].mxu0
        %v4266 = vadd.f32 %v3425, %v4265
        %v4267 = vpop.f32.mrb[0].mxu0
        %v4268 = vadd.f32 %v3429, %v4267
        %4269 = vmatprep.mubr.bf16.mxu0 0
        %4270 = vmatmul.mubr.bf16.gmra.mrb[0].mxu0 %v3377
        %v4271 = vpop.f32.mrb[0].mxu0
        %v4272 = vadd.f32 %v3425, %v4271
        %v4273 = vpop.f32.mrb[0].mxu0
        %v4274 = vadd.f32 %v3429, %v4273
        %v4275 = vpop.f32.mrb[0].mxu0
        %v4276 = vadd.f32 %v3425, %v4275
        %v4277 = vpop.f32.mrb[0].mxu0
        %v4278 = vadd.f32 %v3429, %v4277
        %4279 = vmatprep.mubr.bf16.mxu0 0
        %4280 = vmatmul.mubr.bf16.gmra.mrb[0].mxu0 %v3378
        %v4281 = vpop.f32.mrb[0].mxu0
        %v4282 = vadd.f32 %v3425, %v4281
        %v4283 = vpop.f32.mrb[0].mxu0
        %v4284 = vadd.f32 %v3429, %v4283
        %v4285 = vpop.f32.mrb[0].mxu0
        %v4286 = vadd.f32 %v3425, %v4285
        %v4287 = vpop.f32.mrb[0].mxu0
        %v4288 = vadd.f32 %v3429, %v4287
        %4289 = vmatprep.mubr.bf16.mxu0 0
        %4290 = vmatmul.mubr.bf16.gmra.mrb[0].mxu0 %v3379
        %v4291 = vpop.f32.mrb[0].mxu0
        %v4292 = vadd.f32 %v3425, %v4291
        %v4293 = vpop.f32.mrb[0].mxu0
        %v4294 = vadd.f32 %v3429, %v4293
        %v4295 = vpop.f32.mrb[0].mxu0
        %v4296 = vadd.f32 %v3425, %v4295
        %v4297 = vpop.f32.mrb[0].mxu0
        %v4298 = vadd.f32 %v3429, %v4297
        %4299 = vdwg.mxu0
        %v4300 = vadd.f32 %v3284, %v3285
        %v4301 = vadd.f32 %v4300, %v3286
        %v4302 = vadd.f32 %v4301, %v3287
        %v4303 = vadd.f32 %v4302, %v3288
        %v4304 = vadd.f32 %v4303, %v3289
        %v4305 = vadd.f32 %v4304, %v3290
        %v4306 = vadd.f32 %v4305, %v3291
        %v4307 = vadd.f32 %v4306, %v3292
        %v4308 = vadd.f32 %v4307, %v3293
        %v4309 = vadd.f32 %v4308, %v3294
        %v4310 = vadd.f32 %v4309, %v3295
        %v4311 = vadd.f32 %v4310, %v3296
        %v4312 = vadd.f32 %v4311, %v3297
        %v4313 = vadd.f32 %v4312, %v3298
        %v4314 = vadd.f32 %v4313, %v3299
        %v4315 = vrot.slane %v4314, 4
        %v4316 = vadd.f32 %v4314, %v4315
        %v4317 = vrot.slane %v4316, 2
        %v4318 = vadd.f32 %v4316, %v4317
        %v4319 = vrot.slane %v4318, 1
        %v4320 = vadd.f32 %v4318, %v4319
        %v4321 = vadd.f32 %v3300, %v3301
        %v4322 = vadd.f32 %v4321, %v3302
        %v4323 = vadd.f32 %v4322, %v3303
        %v4324 = vadd.f32 %v4323, %v3304
        %v4325 = vadd.f32 %v4324, %v3305
        %v4326 = vadd.f32 %v4325, %v3306
        %v4327 = vadd.f32 %v4326, %v3307
        %v4328 = vadd.f32 %v4327, %v3308
        %v4329 = vadd.f32 %v4328, %v3309
        %v4330 = vadd.f32 %v4329, %v3310
        %v4331 = vadd.f32 %v4330, %v3311
        %v4332 = vadd.f32 %v4331, %v3312
        %v4333 = vadd.f32 %v4332, %v3313
        %v4334 = vadd.f32 %v4333, %v3314
        %v4335 = vadd.f32 %v4334, %v3315
        %v4336 = vrot.slane %v4335, 4
        %v4337 = vadd.f32 %v4335, %v4336
        %v4338 = vrot.slane %v4337, 2
        %v4339 = vadd.f32 %v4337, %v4338
        %v4340 = vrot.slane %v4339, 1
        %v4341 = vadd.f32 %v4339, %v4340
        %v4342 = vadd.f32 %v3316, %v3317
        %v4343 = vadd.f32 %v4342, %v3318
        %v4344 = vadd.f32 %v4343, %v3319
        %v4345 = vadd.f32 %v4344, %v3320
        %v4346 = vadd.f32 %v4345, %v3321
        %v4347 = vadd.f32 %v4346, %v3322
        %v4348 = vadd.f32 %v4347, %v3323
        %v4349 = vadd.f32 %v4348, %v3324
        %v4350 = vadd.f32 %v4349, %v3325
        %v4351 = vadd.f32 %v4350, %v3326
        %v4352 = vadd.f32 %v4351, %v3327
        %v4353 = vadd.f32 %v4352, %v3328
        %v4354 = vadd.f32 %v4353, %v3329
        %v4355 = vadd.f32 %v4354, %v3330
        %v4356 = vadd.f32 %v4355, %v3331
        %v4357 = vrot.slane %v4356, 4
        %v4358 = vadd.f32 %v4356, %v4357
        %v4359 = vrot.slane %v4358, 2
        %v4360 = vadd.f32 %v4358, %v4359
        %v4361 = vrot.slane %v4360, 1
        %v4362 = vadd.f32 %v4360, %v4361
        %v4363 = vadd.f32 %v3332, %v3333
        %v4364 = vadd.f32 %v4363, %v3334
        %v4365 = vadd.f32 %v4364, %v3335
        %v4366 = vadd.f32 %v4365, %v3336
        %v4367 = vadd.f32 %v4366, %v3337
        %v4368 = vadd.f32 %v4367, %v3338
        %v4369 = vadd.f32 %v4368, %v3339
        %v4370 = vadd.f32 %v4369, %v3340
        %v4371 = vadd.f32 %v4370, %v3341
        %v4372 = vadd.f32 %v4371, %v3342
        %v4373 = vadd.f32 %v4372, %v3343
        %v4374 = vadd.f32 %v4373, %v3344
        %v4375 = vadd.f32 %v4374, %v3345
        %v4376 = vadd.f32 %v4375, %v3346
        %v4377 = vadd.f32 %v4376, %v3347
        %v4378 = vrot.slane %v4377, 4
        %v4379 = vadd.f32 %v4377, %v4378
        %v4380 = vrot.slane %v4379, 2
        %v4381 = vadd.f32 %v4379, %v4380
        %v4382 = vrot.slane %v4381, 1
        %v4383 = vadd.f32 %v4381, %v4382
        %v4384 = vrcp.pop 128.0
        %v4385 = vmul.f32 %v4320, %v4384
        %v4386 = vmul.f32 %v4341, %v4384
        %v4387 = vmul.f32 %v4362, %v4384
        %v4388 = vmul.f32 %v4383, %v4384
        %v4389 = vpack.c.bf16 %v4385, %v4385
        %v4390 = vpack.c.bf16 %v4386, %v4386
        %v4391 = vpack.c.bf16 %v4387, %v4387
        %v4392 = vpack.c.bf16 %v4388, %v4388
        %v4397 = vunpack.c.l.b16 %v4389
        %v4398 = vunpack.c.l.b16 %v4390
        %v4399 = vunpack.c.l.b16 %v4391
        %v4400 = vunpack.c.l.b16 %v4392
        %vm4401 = vcmask 1041409
        %v4402 = vsel %vm4401, %v4398, %v4397
        %vm4403 = vcmask 1042434
        %v4404 = vsel %vm4403, %v4399, %v4402
        %vm4405 = vcmask 1043459
        %v4406 = vsel %vm4405, %v4400, %v4404
        %v4407 = vpack.c.b16 %v4406, %v4406
        %4409 = vmatprep.subr.bf16.mxu0 %v3531
        %4410 = vmatpush1.bf16.msra.mxu0 %v3530
        %4411 = vmatprep.subr.bf16.mxu0 %v3535
        %4412 = vmatpush1.bf16.msra.mxu0 %v3534
        %4413 = vmatprep.subr.bf16.mxu0 %v3539
        %4414 = vmatpush1.bf16.msra.mxu0 %v3538
        %4415 = vmatprep.subr.bf16.mxu0 %v3543
        %4416 = vmatpush1.bf16.msra.mxu0 %v3542
        %4417 = vmatprep.subr.bf16.mxu0 %v3547
        %4418 = vmatpush1.bf16.msra.mxu0 %v3546
        %4419 = vmatprep.subr.bf16.mxu0 %v3551
        %4420 = vmatpush1.bf16.msra.mxu0 %v3550
        %4421 = vmatprep.subr.bf16.mxu0 %v3555
        %4422 = vmatpush1.bf16.msra.mxu0 %v3554
        %4423 = vmatprep.subr.bf16.mxu0 %v3559
        %4424 = vmatpush1.bf16.msra.mxu0 %v3558
        %4425 = vmatprep.subr.bf16.mxu0 0
        %4426 = vmatpush1.bf16.msra.mxu0 0
        %4427 = vmatprep.subr.bf16.mxu0 0
        %4428 = vmatpush1.bf16.msra.mxu0 0
        %4429 = vmatprep.subr.bf16.mxu0 0
        %4430 = vmatpush1.bf16.msra.mxu0 0
        %4431 = vmatprep.subr.bf16.mxu0 0
        %4432 = vmatpush1.bf16.msra.mxu0 0
        %4433 = vmatprep.subr.bf16.mxu0 0
        %4434 = vmatpush1.bf16.msra.mxu0 0
        %4435 = vmatprep.subr.bf16.mxu0 0
        %4436 = vmatpush1.bf16.msra.mxu0 0
        %4437 = vmatprep.subr.bf16.mxu0 0
        %4438 = vmatpush1.bf16.msra.mxu0 0
        %4439 = vmatprep.subr.bf16.mxu0 0
        %4440 = vmatpush1.bf16.msra.mxu0 0
        %4441 = vmatprep.mubr.bf16.mxu0 0
        %4442 = vmatmul.mubr.bf16.gmra.mrb[0].mxu0 %v4407
        %v4443 = vpop.f32.mrb[0].mxu0
        %v4444 = vadd.f32 %v3417, %v4443
        %v4445 = vpop.f32.mrb[0].mxu0
        %v4446 = vadd.f32 %v3421, %v4445
        %v4447 = vpop.f32.mrb[0].mxu0
        %v4448 = vpop.f32.mrb[0].mxu0
        %4449 = vdwg.mxu0
        %4450 = vmatprep.subr.bf16.mxu0 %v3533
        %4451 = vmatpush1.bf16.msra.mxu0 %v3532
        %4452 = vmatprep.subr.bf16.mxu0 %v3537
        %4453 = vmatpush1.bf16.msra.mxu0 %v3536
        %4454 = vmatprep.subr.bf16.mxu0 %v3541
        %4455 = vmatpush1.bf16.msra.mxu0 %v3540
        %4456 = vmatprep.subr.bf16.mxu0 %v3545
        %4457 = vmatpush1.bf16.msra.mxu0 %v3544
        %4458 = vmatprep.subr.bf16.mxu0 %v3549
        %4459 = vmatpush1.bf16.msra.mxu0 %v3548
        %4460 = vmatprep.subr.bf16.mxu0 %v3553
        %4461 = vmatpush1.bf16.msra.mxu0 %v3552
        %4462 = vmatprep.subr.bf16.mxu0 %v3557
        %4463 = vmatpush1.bf16.msra.mxu0 %v3556
        %4464 = vmatprep.subr.bf16.mxu0 %v3561
        %4465 = vmatpush1.bf16.msra.mxu0 %v3560
        %4466 = vmatprep.subr.bf16.mxu0 0
        %4467 = vmatpush1.bf16.msra.mxu0 0
        %4468 = vmatprep.subr.bf16.mxu0 0
        %4469 = vmatpush1.bf16.msra.mxu0 0
        %4470 = vmatprep.subr.bf16.mxu0 0
        %4471 = vmatpush1.bf16.msra.mxu0 0
        %4472 = vmatprep.subr.bf16.mxu0 0
        %4473 = vmatpush1.bf16.msra.mxu0 0
        %4474 = vmatprep.subr.bf16.mxu0 0
        %4475 = vmatpush1.bf16.msra.mxu0 0
        %4476 = vmatprep.subr.bf16.mxu0 0
        %4477 = vmatpush1.bf16.msra.mxu0 0
        %4478 = vmatprep.subr.bf16.mxu0 0
        %4479 = vmatpush1.bf16.msra.mxu0 0
        %4480 = vmatprep.subr.bf16.mxu0 0
        %4481 = vmatpush1.bf16.msra.mxu0 0
        %4482 = vmatprep.mubr.bf16.mxu0 0
        %4483 = vmatmul.mubr.bf16.gmra.mrb[0].mxu0 %v4407
        %v4484 = vpop.f32.mrb[0].mxu0
        %v4485 = vadd.f32 %v3425, %v4484
        %v4486 = vpop.f32.mrb[0].mxu0
        %v4487 = vadd.f32 %v3429, %v4486
        %v4488 = vpop.f32.mrb[0].mxu0
        %v4489 = vpop.f32.mrb[0].mxu0
        %4490 = vdwg.mxu0
        %v4491 = vpack.c.bf16 %v4444, %v4444
        %v4492 = vpack.c.bf16 %v4446, %v4446
        %v4493 = vpack.c.bf16 %v4485, %v4485
        %v4494 = vpack.c.bf16 %v4487, %v4487
        %v4495 = vld [vmem:[%s7] sm:$0xf]
        %v4496 = vld [vmem:[%s7 + $0x4] sm:$0xf]
        %v4497 = vld [vmem:[%s7 + $0x8] sm:$0xf]
        %v4498 = vld [vmem:[%s7 + $0xc] sm:$0xf]
        %v4499 = vld [vmem:[%s7 + $0x10] sm:$0xf]
        %v4500 = vld [vmem:[%s7 + $0x14] sm:$0xf]
        %v4501 = vld [vmem:[%s7 + $0x18] sm:$0xf]
        %v4502 = vld [vmem:[%s7 + $0x1c] sm:$0xf]
        %v4503 = vld [vmem:[%s7 + $0x20] sm:$0xf]
        %v4504 = vld [vmem:[%s7 + $0x24] sm:$0xf]
        %v4505 = vld [vmem:[%s7 + $0x28] sm:$0xf]
        %v4506 = vld [vmem:[%s7 + $0x2c] sm:$0xf]
        %v4507 = vld [vmem:[%s7 + $0x30] sm:$0xf]
        %v4508 = vld [vmem:[%s7 + $0x34] sm:$0xf]
        %v4509 = vld [vmem:[%s7 + $0x38] sm:$0xf]
        %v4510 = vld [vmem:[%s7 + $0x3c] sm:$0xf]
        %v4511 = vld [vmem:[%s7 + $0x40] sm:$0xf]
        %v4512 = vld [vmem:[%s7 + $0x44] sm:$0xf]
        %v4513 = vld [vmem:[%s7 + $0x48] sm:$0xf]
        %v4514 = vld [vmem:[%s7 + $0x4c] sm:$0xf]
        %v4515 = vld [vmem:[%s7 + $0x50] sm:$0xf]
        %v4516 = vld [vmem:[%s7 + $0x54] sm:$0xf]
        %v4517 = vld [vmem:[%s7 + $0x58] sm:$0xf]
        %v4518 = vld [vmem:[%s7 + $0x5c] sm:$0xf]
        %v4519 = vld [vmem:[%s7 + $0x60] sm:$0xf]
        %v4520 = vld [vmem:[%s7 + $0x64] sm:$0xf]
        %v4521 = vld [vmem:[%s7 + $0x68] sm:$0xf]
        %v4522 = vld [vmem:[%s7 + $0x6c] sm:$0xf]
        %v4523 = vld [vmem:[%s7 + $0x70] sm:$0xf]
        %v4524 = vld [vmem:[%s7 + $0x74] sm:$0xf]
        %v4525 = vld [vmem:[%s7 + $0x78] sm:$0xf]
        %v4526 = vld [vmem:[%s7 + $0x7c] sm:$0xf]
        %v4527 = vld [vmem:[%s7 + $0x80] sm:$0xf]
        %v4528 = vld [vmem:[%s7 + $0x84] sm:$0xf]
        %v4529 = vld [vmem:[%s7 + $0x88] sm:$0xf]
        %v4530 = vld [vmem:[%s7 + $0x8c] sm:$0xf]
        %v4531 = vld [vmem:[%s7 + $0x90] sm:$0xf]
        %v4532 = vld [vmem:[%s7 + $0x94] sm:$0xf]
        %v4533 = vld [vmem:[%s7 + $0x98] sm:$0xf]
        %v4534 = vld [vmem:[%s7 + $0x9c] sm:$0xf]
        %v4535 = vld [vmem:[%s7 + $0xa0] sm:$0xf]
        %v4536 = vld [vmem:[%s7 + $0xa4] sm:$0xf]
        %v4537 = vld [vmem:[%s7 + $0xa8] sm:$0xf]
        %v4538 = vld [vmem:[%s7 + $0xac] sm:$0xf]
        %v4539 = vld [vmem:[%s7 + $0xb0] sm:$0xf]
        %v4540 = vld [vmem:[%s7 + $0xb4] sm:$0xf]
        %v4541 = vld [vmem:[%s7 + $0xb8] sm:$0xf]
        %v4542 = vld [vmem:[%s7 + $0xbc] sm:$0xf]
        %v4543 = vld [vmem:[%s7 + $0xc0] sm:$0xf]
        %v4544 = vld [vmem:[%s7 + $0xc4] sm:$0xf]
        %v4545 = vld [vmem:[%s7 + $0xc8] sm:$0xf]
        %v4546 = vld [vmem:[%s7 + $0xcc] sm:$0xf]
        %v4547 = vld [vmem:[%s7 + $0xd0] sm:$0xf]
        %v4548 = vld [vmem:[%s7 + $0xd4] sm:$0xf]
        %v4549 = vld [vmem:[%s7 + $0xd8] sm:$0xf]
        %v4550 = vld [vmem:[%s7 + $0xdc] sm:$0xf]
        %v4551 = vld [vmem:[%s7 + $0xe0] sm:$0xf]
        %v4552 = vld [vmem:[%s7 + $0xe4] sm:$0xf]
        %v4553 = vld [vmem:[%s7 + $0xe8] sm:$0xf]
        %v4554 = vld [vmem:[%s7 + $0xec] sm:$0xf]
        %v4555 = vld [vmem:[%s7 + $0xf0] sm:$0xf]
        %v4556 = vld [vmem:[%s7 + $0xf4] sm:$0xf]
        %v4557 = vld [vmem:[%s7 + $0xf8] sm:$0xf]
        %v4558 = vld [vmem:[%s7 + $0xfc] sm:$0xf]
        %v4623 = vunpack.c.l.b16 %v4495
        %v4624 = vunpack.c.l.b16 %v4496
        %v4625 = vunpack.c.l.b16 %v4497
        %v4626 = vunpack.c.l.b16 %v4498
        %v4627 = vunpack.c.l.b16 %v4499
        %v4628 = vunpack.c.l.b16 %v4500
        %v4629 = vunpack.c.l.b16 %v4501
        %v4630 = vunpack.c.l.b16 %v4502
        %v4631 = vunpack.c.l.b16 %v4503
        %v4632 = vunpack.c.l.b16 %v4504
        %v4633 = vunpack.c.l.b16 %v4505
        %v4634 = vunpack.c.l.b16 %v4506
        %v4635 = vunpack.c.l.b16 %v4507
        %v4636 = vunpack.c.l.b16 %v4508
        %v4637 = vunpack.c.l.b16 %v4509
        %v4638 = vunpack.c.l.b16 %v4510
        %v4639 = vunpack.c.l.b16 %v4511
        %v4640 = vunpack.c.l.b16 %v4512
        %v4641 = vunpack.c.l.b16 %v4513
        %v4642 = vunpack.c.l.b16 %v4514
        %v4643 = vunpack.c.l.b16 %v4515
        %v4644 = vunpack.c.l.b16 %v4516
        %v4645 = vunpack.c.l.b16 %v4517
        %v4646 = vunpack.c.l.b16 %v4518
        %v4647 = vunpack.c.l.b16 %v4519
        %v4648 = vunpack.c.l.b16 %v4520
        %v4649 = vunpack.c.l.b16 %v4521
        %v4650 = vunpack.c.l.b16 %v4522
        %v4651 = vunpack.c.l.b16 %v4523
        %v4652 = vunpack.c.l.b16 %v4524
        %v4653 = vunpack.c.l.b16 %v4525
        %v4654 = vunpack.c.l.b16 %v4526
        %v4655 = vunpack.c.l.b16 %v4527
        %v4656 = vunpack.c.l.b16 %v4528
        %v4657 = vunpack.c.l.b16 %v4529
        %v4658 = vunpack.c.l.b16 %v4530
        %v4659 = vunpack.c.l.b16 %v4531
        %v4660 = vunpack.c.l.b16 %v4532
        %v4661 = vunpack.c.l.b16 %v4533
        %v4662 = vunpack.c.l.b16 %v4534
        %v4663 = vunpack.c.l.b16 %v4535
        %v4664 = vunpack.c.l.b16 %v4536
        %v4665 = vunpack.c.l.b16 %v4537
        %v4666 = vunpack.c.l.b16 %v4538
        %v4667 = vunpack.c.l.b16 %v4539
        %v4668 = vunpack.c.l.b16 %v4540
        %v4669 = vunpack.c.l.b16 %v4541
        %v4670 = vunpack.c.l.b16 %v4542
        %v4671 = vunpack.c.l.b16 %v4543
        %v4672 = vunpack.c.l.b16 %v4544
        %v4673 = vunpack.c.l.b16 %v4545
        %v4674 = vunpack.c.l.b16 %v4546
        %v4675 = vunpack.c.l.b16 %v4547
        %v4676 = vunpack.c.l.b16 %v4548
        %v4677 = vunpack.c.l.b16 %v4549
        %v4678 = vunpack.c.l.b16 %v4550
        %v4679 = vunpack.c.l.b16 %v4551
        %v4680 = vunpack.c.l.b16 %v4552
        %v4681 = vunpack.c.l.b16 %v4553
        %v4682 = vunpack.c.l.b16 %v4554
        %v4683 = vunpack.c.l.b16 %v4555
        %v4684 = vunpack.c.l.b16 %v4556
        %v4685 = vunpack.c.l.b16 %v4557
        %v4686 = vunpack.c.l.b16 %v4558
        %v4687 = vpack.c.b16 %v4624, %v4623
        %v4688 = vpack.c.b16 %v4626, %v4625
        %v4689 = vpack.c.b16 %v4628, %v4627
        %v4690 = vpack.c.b16 %v4630, %v4629
        %v4691 = vpack.c.b16 %v4632, %v4631
        %v4692 = vpack.c.b16 %v4634, %v4633
        %v4693 = vpack.c.b16 %v4636, %v4635
        %v4694 = vpack.c.b16 %v4638, %v4637
        %v4695 = vpack.c.b16 %v4640, %v4639
        %v4696 = vpack.c.b16 %v4642, %v4641
        %v4697 = vpack.c.b16 %v4644, %v4643
        %v4698 = vpack.c.b16 %v4646, %v4645
        %v4699 = vpack.c.b16 %v4648, %v4647
        %v4700 = vpack.c.b16 %v4650, %v4649
        %v4701 = vpack.c.b16 %v4652, %v4651
        %v4702 = vpack.c.b16 %v4654, %v4653
        %v4703 = vpack.c.b16 %v4656, %v4655
        %v4704 = vpack.c.b16 %v4658, %v4657
        %v4705 = vpack.c.b16 %v4660, %v4659
        %v4706 = vpack.c.b16 %v4662, %v4661
        %v4707 = vpack.c.b16 %v4664, %v4663
        %v4708 = vpack.c.b16 %v4666, %v4665
        %v4709 = vpack.c.b16 %v4668, %v4667
        %v4710 = vpack.c.b16 %v4670, %v4669
        %v4711 = vpack.c.b16 %v4672, %v4671
        %v4712 = vpack.c.b16 %v4674, %v4673
        %v4713 = vpack.c.b16 %v4676, %v4675
        %v4714 = vpack.c.b16 %v4678, %v4677
        %v4715 = vpack.c.b16 %v4680, %v4679
        %v4716 = vpack.c.b16 %v4682, %v4681
        %v4717 = vpack.c.b16 %v4684, %v4683
        %v4718 = vpack.c.b16 %v4686, %v4685
        %4751 = vmatprep.subr.bf16.mxu0 0
        %4752 = vmatpush1.bf16.msra.mxu0 %v4687
        %4753 = vmatprep.subr.bf16.mxu0 0
        %4754 = vmatpush1.bf16.msra.mxu0 %v4688
        %4755 = vmatprep.subr.bf16.mxu0 0
        %4756 = vmatpush1.bf16.msra.mxu0 %v4689
        %4757 = vmatprep.subr.bf16.mxu0 0
        %4758 = vmatpush1.bf16.msra.mxu0 %v4690
        %4759 = vmatprep.subr.bf16.mxu0 0
        %4760 = vmatpush1.bf16.msra.mxu0 %v4691
        %4761 = vmatprep.subr.bf16.mxu0 0
        %4762 = vmatpush1.bf16.msra.mxu0 %v4692
        %4763 = vmatprep.subr.bf16.mxu0 0
        %4764 = vmatpush1.bf16.msra.mxu0 %v4693
        %4765 = vmatprep.subr.bf16.mxu0 0
        %4766 = vmatpush1.bf16.msra.mxu0 %v4694
        %4767 = vmatprep.subr.bf16.mxu0 0
        %4768 = vmatpush1.bf16.msra.mxu0 %v4695
        %4769 = vmatprep.subr.bf16.mxu0 0
        %4770 = vmatpush1.bf16.msra.mxu0 %v4696
        %4771 = vmatprep.subr.bf16.mxu0 0
        %4772 = vmatpush1.bf16.msra.mxu0 %v4697
        %4773 = vmatprep.subr.bf16.mxu0 0
        %4774 = vmatpush1.bf16.msra.mxu0 %v4698
        %4775 = vmatprep.subr.bf16.mxu0 0
        %4776 = vmatpush1.bf16.msra.mxu0 %v4699
        %4777 = vmatprep.subr.bf16.mxu0 0
        %4778 = vmatpush1.bf16.msra.mxu0 %v4700
        %4779 = vmatprep.subr.bf16.mxu0 0
        %4780 = vmatpush1.bf16.msra.mxu0 %v4701
        %4781 = vmatprep.subr.bf16.mxu0 0
        %4782 = vmatpush1.bf16.msra.mxu0 %v4702
        %4783 = vmatprep.mubr.bf16.mxu0 %v4492
        %4784 = vmatmul.mubr.bf16.gmra.mrb[0].mxu0 %v4491
        %v4785 = vpop.f32.mrb[0].mxu0
        %v4786 = vadd.f32 0.0, %v4785
        %v4787 = vpop.f32.mrb[0].mxu0
        %v4788 = vpop.f32.mrb[0].mxu0
        %v4789 = vpop.f32.mrb[0].mxu0
        %4790 = vdwg.mxu0
        %4791 = vmatprep.subr.bf16.mxu0 0
        %4792 = vmatpush1.bf16.msra.mxu0 %v4703
        %4793 = vmatprep.subr.bf16.mxu0 0
        %4794 = vmatpush1.bf16.msra.mxu0 %v4704
        %4795 = vmatprep.subr.bf16.mxu0 0
        %4796 = vmatpush1.bf16.msra.mxu0 %v4705
        %4797 = vmatprep.subr.bf16.mxu0 0
        %4798 = vmatpush1.bf16.msra.mxu0 %v4706
        %4799 = vmatprep.subr.bf16.mxu0 0
        %4800 = vmatpush1.bf16.msra.mxu0 %v4707
        %4801 = vmatprep.subr.bf16.mxu0 0
        %4802 = vmatpush1.bf16.msra.mxu0 %v4708
        %4803 = vmatprep.subr.bf16.mxu0 0
        %4804 = vmatpush1.bf16.msra.mxu0 %v4709
        %4805 = vmatprep.subr.bf16.mxu0 0
        %4806 = vmatpush1.bf16.msra.mxu0 %v4710
        %4807 = vmatprep.subr.bf16.mxu0 0
        %4808 = vmatpush1.bf16.msra.mxu0 %v4711
        %4809 = vmatprep.subr.bf16.mxu0 0
        %4810 = vmatpush1.bf16.msra.mxu0 %v4712
        %4811 = vmatprep.subr.bf16.mxu0 0
        %4812 = vmatpush1.bf16.msra.mxu0 %v4713
        %4813 = vmatprep.subr.bf16.mxu0 0
        %4814 = vmatpush1.bf16.msra.mxu0 %v4714
        %4815 = vmatprep.subr.bf16.mxu0 0
        %4816 = vmatpush1.bf16.msra.mxu0 %v4715
        %4817 = vmatprep.subr.bf16.mxu0 0
        %4818 = vmatpush1.bf16.msra.mxu0 %v4716
        %4819 = vmatprep.subr.bf16.mxu0 0
        %4820 = vmatpush1.bf16.msra.mxu0 %v4717
        %4821 = vmatprep.subr.bf16.mxu0 0
        %4822 = vmatpush1.bf16.msra.mxu0 %v4718
        %4823 = vmatprep.mubr.bf16.mxu0 %v4494
        %4824 = vmatmul.mubr.bf16.gmra.mrb[0].mxu0 %v4493
        %v4825 = vpop.f32.mrb[0].mxu0
        %v4826 = vadd.f32 %v4786, %v4825
        %v4827 = vpop.f32.mrb[0].mxu0
        %v4828 = vpop.f32.mrb[0].mxu0
        %v4829 = vpop.f32.mrb[0].mxu0
        %4830 = vdwg.mxu0
        %v4831 = vmax.f32 %v4826, 0.0
        %v4832 = vpack.c.bf16 %v4831, %v4831
        %v4833 = vld [vmem:[#allocation7] sm:$0xff]
        %v4834 = vld [vmem:[#allocation7 + $0x8] sm:$0xff]
        %v4835 = vld [vmem:[#allocation7 + $0x10] sm:$0xff]
        %v4836 = vld [vmem:[#allocation7 + $0x18] sm:$0xff]
        %v4837 = vld [vmem:[#allocation7 + $0x20] sm:$0xff]
        %v4838 = vld [vmem:[#allocation7 + $0x28] sm:$0xff]
        %v4839 = vld [vmem:[#allocation7 + $0x30] sm:$0xff]
        %v4840 = vld [vmem:[#allocation7 + $0x38] sm:$0xff]
        %v4849 = vunpack.c.l.b16 %v4833
        %v4850 = vunpack.c.h.b16 %v4833
        %v4851 = vunpack.c.l.b16 %v4834
        %v4852 = vunpack.c.h.b16 %v4834
        %v4853 = vunpack.c.l.b16 %v4835
        %v4854 = vunpack.c.h.b16 %v4835
        %v4855 = vunpack.c.l.b16 %v4836
        %v4856 = vunpack.c.h.b16 %v4836
        %v4857 = vunpack.c.l.b16 %v4837
        %v4858 = vunpack.c.h.b16 %v4837
        %v4859 = vunpack.c.l.b16 %v4838
        %v4860 = vunpack.c.h.b16 %v4838
        %v4861 = vunpack.c.l.b16 %v4839
        %v4862 = vunpack.c.h.b16 %v4839
        %v4863 = vunpack.c.l.b16 %v4840
        %v4864 = vunpack.c.h.b16 %v4840
        %v4865 = vpack.c.b16 %v4853, %v4849
        %v4866 = vpack.c.b16 %v4854, %v4850
        %v4867 = vpack.c.b16 %v4855, %v4851
        %v4868 = vpack.c.b16 %v4856, %v4852
        %v4869 = vpack.c.b16 %v4861, %v4857
        %v4870 = vpack.c.b16 %v4862, %v4858
        %v4871 = vpack.c.b16 %v4863, %v4859
        %v4872 = vpack.c.b16 %v4864, %v4860
        %vm4881 = vcmask 261120
        %v4883 = vsel %vm4881, %v4832, 0
        %4885 = vmatprep.subr.bf16.mxu0 %v4866
        %4886 = vmatpush1.bf16.msra.mxu0 %v4865
        %4887 = vmatprep.subr.bf16.mxu0 %v4870
        %4888 = vmatpush1.bf16.msra.mxu0 %v4869
        %4889 = vmatprep.subr.bf16.mxu0 0
        %4890 = vmatpush1.bf16.msra.mxu0 0
        %4891 = vmatprep.subr.bf16.mxu0 0
        %4892 = vmatpush1.bf16.msra.mxu0 0
        %4893 = vmatprep.subr.bf16.mxu0 0
        %4894 = vmatpush1.bf16.msra.mxu0 0
        %4895 = vmatprep.subr.bf16.mxu0 0
        %4896 = vmatpush1.bf16.msra.mxu0 0
        %4897 = vmatprep.subr.bf16.mxu0 0
        %4898 = vmatpush1.bf16.msra.mxu0 0
        %4899 = vmatprep.subr.bf16.mxu0 0
        %4900 = vmatpush1.bf16.msra.mxu0 0
        %4901 = vmatprep.subr.bf16.mxu0 0
        %4902 = vmatpush1.bf16.msra.mxu0 0
        %4903 = vmatprep.subr.bf16.mxu0 0
        %4904 = vmatpush1.bf16.msra.mxu0 0
        %4905 = vmatprep.subr.bf16.mxu0 0
        %4906 = vmatpush1.bf16.msra.mxu0 0
        %4907 = vmatprep.subr.bf16.mxu0 0
        %4908 = vmatpush1.bf16.msra.mxu0 0
        %4909 = vmatprep.subr.bf16.mxu0 0
        %4910 = vmatpush1.bf16.msra.mxu0 0
        %4911 = vmatprep.subr.bf16.mxu0 0
        %4912 = vmatpush1.bf16.msra.mxu0 0
        %4913 = vmatprep.subr.bf16.mxu0 0
        %4914 = vmatpush1.bf16.msra.mxu0 0
        %4915 = vmatprep.subr.bf16.mxu0 0
        %4916 = vmatpush1.bf16.msra.mxu0 0
        %4917 = vmatprep.mubr.bf16.mxu0 0
        %4918 = vmatmul.mubr.bf16.gmra.mrb[0].mxu0 %v4883
        %v4919 = vpop.f32.mrb[0].mxu0
        %v4920 = vadd.f32 0.0, %v4919
        %v4921 = vpop.f32.mrb[0].mxu0
        %v4922 = vadd.f32 0.0, %v4921
        %v4923 = vpop.f32.mrb[0].mxu0
        %v4924 = vpop.f32.mrb[0].mxu0
        %4925 = vdwg.mxu0
        %4926 = vmatprep.subr.bf16.mxu0 %v4868
        %4927 = vmatpush1.bf16.msra.mxu0 %v4867
        %4928 = vmatprep.subr.bf16.mxu0 %v4872
        %4929 = vmatpush1.bf16.msra.mxu0 %v4871
        %4930 = vmatprep.subr.bf16.mxu0 0
        %4931 = vmatpush1.bf16.msra.mxu0 0
        %4932 = vmatprep.subr.bf16.mxu0 0
        %4933 = vmatpush1.bf16.msra.mxu0 0
        %4934 = vmatprep.subr.bf16.mxu0 0
        %4935 = vmatpush1.bf16.msra.mxu0 0
        %4936 = vmatprep.subr.bf16.mxu0 0
        %4937 = vmatpush1.bf16.msra.mxu0 0
        %4938 = vmatprep.subr.bf16.mxu0 0
        %4939 = vmatpush1.bf16.msra.mxu0 0
        %4940 = vmatprep.subr.bf16.mxu0 0
        %4941 = vmatpush1.bf16.msra.mxu0 0
        %4942 = vmatprep.subr.bf16.mxu0 0
        %4943 = vmatpush1.bf16.msra.mxu0 0
        %4944 = vmatprep.subr.bf16.mxu0 0
        %4945 = vmatpush1.bf16.msra.mxu0 0
        %4946 = vmatprep.subr.bf16.mxu0 0
        %4947 = vmatpush1.bf16.msra.mxu0 0
        %4948 = vmatprep.subr.bf16.mxu0 0
        %4949 = vmatpush1.bf16.msra.mxu0 0
        %4950 = vmatprep.subr.bf16.mxu0 0
        %4951 = vmatpush1.bf16.msra.mxu0 0
        %4952 = vmatprep.subr.bf16.mxu0 0
        %4953 = vmatpush1.bf16.msra.mxu0 0
        %4954 = vmatprep.subr.bf16.mxu0 0
        %4955 = vmatpush1.bf16.msra.mxu0 0
        %4956 = vmatprep.subr.bf16.mxu0 0
        %4957 = vmatpush1.bf16.msra.mxu0 0
        %4958 = vmatprep.mubr.bf16.mxu0 0
        %4959 = vmatmul.mubr.bf16.gmra.mrb[0].mxu0 %v4883
        %v4960 = vpop.f32.mrb[0].mxu0
        %v4961 = vadd.f32 0.0, %v4960
        %v4962 = vpop.f32.mrb[0].mxu0
        %v4963 = vadd.f32 0.0, %v4962
        %v4964 = vpop.f32.mrb[0].mxu0
        %v4965 = vpop.f32.mrb[0].mxu0
        %4966 = vdwg.mxu0
        %v4967 = vxor.u32 %v4920, 2147483648
        %v4968 = vxor.u32 %v4922, 2147483648
        %v4969 = vxor.u32 %v4961, 2147483648
        %v4970 = vxor.u32 %v4963, 2147483648
        %v4971 = vmul.f32 %v4967, 1.442695
        %v4972 = vpow.pop %v4971
        %v4973 = vmul.f32 %v4968, 1.442695
        %v4974 = vpow.pop %v4973
        %v4975 = vmul.f32 %v4969, 1.442695
        %v4976 = vpow.pop %v4975
        %v4977 = vmul.f32 %v4970, 1.442695
        %v4978 = vpow.pop %v4977
        %v4979 = vadd.f32 %v4972, 1.0
        %v4980 = vadd.f32 %v4974, 1.0
        %v4981 = vadd.f32 %v4976, 1.0
        %v4982 = vadd.f32 %v4978, 1.0
        %v4983 = vrcp.pop %v4979
        %v4984 = vmul.f32 1.0, %v4983
        %v4985 = vrcp.pop %v4980
        %v4986 = vmul.f32 1.0, %v4985
        %v4987 = vrcp.pop %v4981
        %v4988 = vmul.f32 1.0, %v4987
        %v4989 = vrcp.pop %v4982
        %v4990 = vmul.f32 1.0, %v4989
        %v4991 = vadd.f32 %v4984, 1.0
        %v4992 = vadd.f32 %v4986, 1.0
        %v4993 = vadd.f32 %v4988, 1.0
        %v4994 = vadd.f32 %v4990, 1.0
        %v4999 = vcombine.low %v4991, %v4992
        %v5000 = vcombine.low %v4993, %v4994
        %v5002 = vunpack.c.l.s4 1966171168
        %v5003 = vunpack.c.0.s8 %v5002
        %v5004 = vlaneseq
        %v5005 = vshrl.u32 %v5004, 7
        %v5006 = vsub.s32 %v5003, %v5005
        %v5007 = vrot.slane %v4999, %v5006
        %v5009 = vunpack.c.l.s4 1966171168
        %v5010 = vunpack.c.0.s8 %v5009
        %v5011 = vlaneseq
        %v5012 = vshrl.u32 %v5011, 7
        %v5013 = vsub.s32 %v5010, %v5012
        %v5014 = vrot.slane %v5000, %v5013
        %v5015 = vcombine.low %v5007, %v5014
        %v5016 = vcombine.high %v5007, %v5014
        %v5018 = vunpack.c.l.s4 1966171168
        %v5019 = vunpack.c.0.s8 %v5018
        %v5020 = vlaneseq
        %v5021 = vshrl.u32 %v5020, 7
        %v5022 = vsub.s32 %v5019, %v5021
        %v5023 = vrot.slane %v5015, %v5022
        %v5025 = vunpack.c.l.s4 1966171168
        %v5026 = vunpack.c.0.s8 %v5025
        %v5027 = vlaneseq
        %v5028 = vshrl.u32 %v5027, 7
        %v5029 = vsub.s32 %v5026, %v5028
        %v5030 = vrot.slane %v5016, %v5029
        %v5031 = vcombine.high %v5023, %v5023
        %v5032 = vcombine.high %v5030, %v5030
        %v5033 = vlaneseq
        %v5034 = vshrl.u32 %v5033, 7
        %v5035 = vsub.s32 0, %v5034
        %v5036 = vrot.slane %v5023, %v5035
        %v5037 = vlaneseq
        %v5038 = vshrl.u32 %v5037, 7
        %v5039 = vsub.s32 1, %v5038
        %v5040 = vrot.slane %v5023, %v5039
        %v5041 = vlaneseq
        %v5042 = vshrl.u32 %v5041, 7
        %v5043 = vsub.s32 2, %v5042
        %v5044 = vrot.slane %v5023, %v5043
        %v5045 = vlaneseq
        %v5046 = vshrl.u32 %v5045, 7
        %v5047 = vsub.s32 3, %v5046
        %v5048 = vrot.slane %v5023, %v5047
        %v5049 = vlaneseq
        %v5050 = vshrl.u32 %v5049, 7
        %v5051 = vsub.s32 0, %v5050
        %v5052 = vrot.slane %v5030, %v5051
        %v5053 = vlaneseq
        %v5054 = vshrl.u32 %v5053, 7
        %v5055 = vsub.s32 1, %v5054
        %v5056 = vrot.slane %v5030, %v5055
        %v5057 = vlaneseq
        %v5058 = vshrl.u32 %v5057, 7
        %v5059 = vsub.s32 2, %v5058
        %v5060 = vrot.slane %v5030, %v5059
        %v5061 = vlaneseq
        %v5062 = vshrl.u32 %v5061, 7
        %v5063 = vsub.s32 3, %v5062
        %v5064 = vrot.slane %v5030, %v5063
        %v5065 = vlaneseq
        %v5066 = vshrl.u32 %v5065, 7
        %v5067 = vsub.s32 0, %v5066
        %v5068 = vrot.slane %v5031, %v5067
        %v5069 = vlaneseq
        %v5070 = vshrl.u32 %v5069, 7
        %v5071 = vsub.s32 1, %v5070
        %v5072 = vrot.slane %v5031, %v5071
        %v5073 = vlaneseq
        %v5074 = vshrl.u32 %v5073, 7
        %v5075 = vsub.s32 2, %v5074
        %v5076 = vrot.slane %v5031, %v5075
        %v5077 = vlaneseq
        %v5078 = vshrl.u32 %v5077, 7
        %v5079 = vsub.s32 3, %v5078
        %v5080 = vrot.slane %v5031, %v5079
        %v5081 = vlaneseq
        %v5082 = vshrl.u32 %v5081, 7
        %v5083 = vsub.s32 0, %v5082
        %v5084 = vrot.slane %v5032, %v5083
        %v5085 = vlaneseq
        %v5086 = vshrl.u32 %v5085, 7
        %v5087 = vsub.s32 1, %v5086
        %v5088 = vrot.slane %v5032, %v5087
        %v5089 = vlaneseq
        %v5090 = vshrl.u32 %v5089, 7
        %v5091 = vsub.s32 2, %v5090
        %v5092 = vrot.slane %v5032, %v5091
        %v5093 = vlaneseq
        %v5094 = vshrl.u32 %v5093, 7
        %v5095 = vsub.s32 3, %v5094
        %v5096 = vrot.slane %v5032, %v5095
        %v5113 = vmul.f32 %v3629, %v5036
        %v5114 = vmul.f32 %v3631, %v5040
        %v5115 = vmul.f32 %v3982, %v5044
        %v5116 = vmul.f32 %v3984, %v5048
        %v5117 = vmul.f32 %v3633, %v5036
        %v5118 = vmul.f32 %v3635, %v5040
        %v5119 = vmul.f32 %v3986, %v5044
        %v5120 = vmul.f32 %v3988, %v5048
        %v5121 = vmul.f32 %v3639, %v5036
        %v5122 = vmul.f32 %v3641, %v5040
        %v5123 = vmul.f32 %v3992, %v5044
        %v5124 = vmul.f32 %v3994, %v5048
        %v5125 = vmul.f32 %v3643, %v5036
        %v5126 = vmul.f32 %v3645, %v5040
        %v5127 = vmul.f32 %v3996, %v5044
        %v5128 = vmul.f32 %v3998, %v5048
        %v5129 = vmul.f32 %v3649, %v5036
        %v5130 = vmul.f32 %v3651, %v5040
        %v5131 = vmul.f32 %v4002, %v5044
        %v5132 = vmul.f32 %v4004, %v5048
        %v5133 = vmul.f32 %v3653, %v5036
        %v5134 = vmul.f32 %v3655, %v5040
        %v5135 = vmul.f32 %v4006, %v5044
        %v5136 = vmul.f32 %v4008, %v5048
        %v5137 = vmul.f32 %v3659, %v5036
        %v5138 = vmul.f32 %v3661, %v5040
        %v5139 = vmul.f32 %v4012, %v5044
        %v5140 = vmul.f32 %v4014, %v5048
        %v5141 = vmul.f32 %v3663, %v5036
        %v5142 = vmul.f32 %v3665, %v5040
        %v5143 = vmul.f32 %v4016, %v5044
        %v5144 = vmul.f32 %v4018, %v5048
        %v5145 = vmul.f32 %v3669, %v5036
        %v5146 = vmul.f32 %v3671, %v5040
        %v5147 = vmul.f32 %v4022, %v5044
        %v5148 = vmul.f32 %v4024, %v5048
        %v5149 = vmul.f32 %v3673, %v5036
        %v5150 = vmul.f32 %v3675, %v5040
        %v5151 = vmul.f32 %v4026, %v5044
        %v5152 = vmul.f32 %v4028, %v5048
        %v5153 = vmul.f32 %v3679, %v5036
        %v5154 = vmul.f32 %v3681, %v5040
        %v5155 = vmul.f32 %v4032, %v5044
        %v5156 = vmul.f32 %v4034, %v5048
        %v5157 = vmul.f32 %v3683, %v5036
        %v5158 = vmul.f32 %v3685, %v5040
        %v5159 = vmul.f32 %v4036, %v5044
        %v5160 = vmul.f32 %v4038, %v5048
        %v5161 = vmul.f32 %v3689, %v5036
        %v5162 = vmul.f32 %v3691, %v5040
        %v5163 = vmul.f32 %v4042, %v5044
        %v5164 = vmul.f32 %v4044, %v5048
        %v5165 = vmul.f32 %v3693, %v5036
        %v5166 = vmul.f32 %v3695, %v5040
        %v5167 = vmul.f32 %v4046, %v5044
        %v5168 = vmul.f32 %v4048, %v5048
        %v5169 = vmul.f32 %v3699, %v5036
        %v5170 = vmul.f32 %v3701, %v5040
        %v5171 = vmul.f32 %v4052, %v5044
        %v5172 = vmul.f32 %v4054, %v5048
        %v5173 = vmul.f32 %v3703, %v5036
        %v5174 = vmul.f32 %v3705, %v5040
        %v5175 = vmul.f32 %v4056, %v5044
        %v5176 = vmul.f32 %v4058, %v5048
        %v5177 = vmul.f32 %v3709, %v5052
        %v5178 = vmul.f32 %v3711, %v5056
        %v5179 = vmul.f32 %v4062, %v5060
        %v5180 = vmul.f32 %v4064, %v5064
        %v5181 = vmul.f32 %v3713, %v5052
        %v5182 = vmul.f32 %v3715, %v5056
        %v5183 = vmul.f32 %v4066, %v5060
        %v5184 = vmul.f32 %v4068, %v5064
        %v5185 = vmul.f32 %v3719, %v5052
        %v5186 = vmul.f32 %v3721, %v5056
        %v5187 = vmul.f32 %v4072, %v5060
        %v5188 = vmul.f32 %v4074, %v5064
        %v5189 = vmul.f32 %v3723, %v5052
        %v5190 = vmul.f32 %v3725, %v5056
        %v5191 = vmul.f32 %v4076, %v5060
        %v5192 = vmul.f32 %v4078, %v5064
        %v5193 = vmul.f32 %v3729, %v5052
        %v5194 = vmul.f32 %v3731, %v5056
        %v5195 = vmul.f32 %v4082, %v5060
        %v5196 = vmul.f32 %v4084, %v5064
        %v5197 = vmul.f32 %v3733, %v5052
        %v5198 = vmul.f32 %v3735, %v5056
        %v5199 = vmul.f32 %v4086, %v5060
        %v5200 = vmul.f32 %v4088, %v5064
        %v5201 = vmul.f32 %v3739, %v5052
        %v5202 = vmul.f32 %v3741, %v5056
        %v5203 = vmul.f32 %v4092, %v5060
        %v5204 = vmul.f32 %v4094, %v5064
        %v5205 = vmul.f32 %v3743, %v5052
        %v5206 = vmul.f32 %v3745, %v5056
        %v5207 = vmul.f32 %v4096, %v5060
        %v5208 = vmul.f32 %v4098, %v5064
        %v5209 = vmul.f32 %v3749, %v5052
        %v5210 = vmul.f32 %v3751, %v5056
        %v5211 = vmul.f32 %v4102, %v5060
        %v5212 = vmul.f32 %v4104, %v5064
        %v5213 = vmul.f32 %v3753, %v5052
        %v5214 = vmul.f32 %v3755, %v5056
        %v5215 = vmul.f32 %v4106, %v5060
        %v5216 = vmul.f32 %v4108, %v5064
        %v5217 = vmul.f32 %v3759, %v5052
        %v5218 = vmul.f32 %v3761, %v5056
        %v5219 = vmul.f32 %v4112, %v5060
        %v5220 = vmul.f32 %v4114, %v5064
        %v5221 = vmul.f32 %v3763, %v5052
        %v5222 = vmul.f32 %v3765, %v5056
        %v5223 = vmul.f32 %v4116, %v5060
        %v5224 = vmul.f32 %v4118, %v5064
        %v5225 = vmul.f32 %v3769, %v5052
        %v5226 = vmul.f32 %v3771, %v5056
        %v5227 = vmul.f32 %v4122, %v5060
        %v5228 = vmul.f32 %v4124, %v5064
        %v5229 = vmul.f32 %v3773, %v5052
        %v5230 = vmul.f32 %v3775, %v5056
        %v5231 = vmul.f32 %v4126, %v5060
        %v5232 = vmul.f32 %v4128, %v5064
        %v5233 = vmul.f32 %v3779, %v5052
        %v5234 = vmul.f32 %v3781, %v5056
        %v5235 = vmul.f32 %v4132, %v5060
        %v5236 = vmul.f32 %v4134, %v5064
        %v5237 = vmul.f32 %v3783, %v5052
        %v5238 = vmul.f32 %v3785, %v5056
        %v5239 = vmul.f32 %v4136, %v5060
        %v5240 = vmul.f32 %v4138, %v5064
        %v5241 = vmul.f32 %v3789, %v5068
        %v5242 = vmul.f32 %v3791, %v5072
        %v5243 = vmul.f32 %v4142, %v5076
        %v5244 = vmul.f32 %v4144, %v5080
        %v5245 = vmul.f32 %v3793, %v5068
        %v5246 = vmul.f32 %v3795, %v5072
        %v5247 = vmul.f32 %v4146, %v5076
        %v5248 = vmul.f32 %v4148, %v5080
        %v5249 = vmul.f32 %v3799, %v5068
        %v5250 = vmul.f32 %v3801, %v5072
        %v5251 = vmul.f32 %v4152, %v5076
        %v5252 = vmul.f32 %v4154, %v5080
        %v5253 = vmul.f32 %v3803, %v5068
        %v5254 = vmul.f32 %v3805, %v5072
        %v5255 = vmul.f32 %v4156, %v5076
        %v5256 = vmul.f32 %v4158, %v5080
        %v5257 = vmul.f32 %v3809, %v5068
        %v5258 = vmul.f32 %v3811, %v5072
        %v5259 = vmul.f32 %v4162, %v5076
        %v5260 = vmul.f32 %v4164, %v5080
        %v5261 = vmul.f32 %v3813, %v5068
        %v5262 = vmul.f32 %v3815, %v5072
        %v5263 = vmul.f32 %v4166, %v5076
        %v5264 = vmul.f32 %v4168, %v5080
        %v5265 = vmul.f32 %v3819, %v5068
        %v5266 = vmul.f32 %v3821, %v5072
        %v5267 = vmul.f32 %v4172, %v5076
        %v5268 = vmul.f32 %v4174, %v5080
        %v5269 = vmul.f32 %v3823, %v5068
        %v5270 = vmul.f32 %v3825, %v5072
        %v5271 = vmul.f32 %v4176, %v5076
        %v5272 = vmul.f32 %v4178, %v5080
        %v5273 = vmul.f32 %v3829, %v5068
        %v5274 = vmul.f32 %v3831, %v5072
        %v5275 = vmul.f32 %v4182, %v5076
        %v5276 = vmul.f32 %v4184, %v5080
        %v5277 = vmul.f32 %v3833, %v5068
        %v5278 = vmul.f32 %v3835, %v5072
        %v5279 = vmul.f32 %v4186, %v5076
        %v5280 = vmul.f32 %v4188, %v5080
        %v5281 = vmul.f32 %v3839, %v5068
        %v5282 = vmul.f32 %v3841, %v5072
        %v5283 = vmul.f32 %v4192, %v5076
        %v5284 = vmul.f32 %v4194, %v5080
        %v5285 = vmul.f32 %v3843, %v5068
        %v5286 = vmul.f32 %v3845, %v5072
        %v5287 = vmul.f32 %v4196, %v5076
        %v5288 = vmul.f32 %v4198, %v5080
        %v5289 = vmul.f32 %v3849, %v5068
        %v5290 = vmul.f32 %v3851, %v5072
        %v5291 = vmul.f32 %v4202, %v5076
        %v5292 = vmul.f32 %v4204, %v5080
        %v5293 = vmul.f32 %v3853, %v5068
        %v5294 = vmul.f32 %v3855, %v5072
        %v5295 = vmul.f32 %v4206, %v5076
        %v5296 = vmul.f32 %v4208, %v5080
        %v5297 = vmul.f32 %v3859, %v5068
        %v5298 = vmul.f32 %v3861, %v5072
        %v5299 = vmul.f32 %v4212, %v5076
        %v5300 = vmul.f32 %v4214, %v5080
        %v5301 = vmul.f32 %v3863, %v5068
        %v5302 = vmul.f32 %v3865, %v5072
        %v5303 = vmul.f32 %v4216, %v5076
        %v5304 = vmul.f32 %v4218, %v5080
        %v5305 = vmul.f32 %v3869, %v5084
        %v5306 = vmul.f32 %v3871, %v5088
        %v5307 = vmul.f32 %v4222, %v5092
        %v5308 = vmul.f32 %v4224, %v5096
        %v5309 = vmul.f32 %v3873, %v5084
        %v5310 = vmul.f32 %v3875, %v5088
        %v5311 = vmul.f32 %v4226, %v5092
        %v5312 = vmul.f32 %v4228, %v5096
        %v5313 = vmul.f32 %v3879, %v5084
        %v5314 = vmul.f32 %v3881, %v5088
        %v5315 = vmul.f32 %v4232, %v5092
        %v5316 = vmul.f32 %v4234, %v5096
        %v5317 = vmul.f32 %v3883, %v5084
        %v5318 = vmul.f32 %v3885, %v5088
        %v5319 = vmul.f32 %v4236, %v5092
        %v5320 = vmul.f32 %v4238, %v5096
        %v5321 = vmul.f32 %v3889, %v5084
        %v5322 = vmul.f32 %v3891, %v5088
        %v5323 = vmul.f32 %v4242, %v5092
        %v5324 = vmul.f32 %v4244, %v5096
        %v5325 = vmul.f32 %v3893, %v5084
        %v5326 = vmul.f32 %v3895, %v5088
        %v5327 = vmul.f32 %v4246, %v5092
        %v5328 = vmul.f32 %v4248, %v5096
        %v5329 = vmul.f32 %v3899, %v5084
        %v5330 = vmul.f32 %v3901, %v5088
        %v5331 = vmul.f32 %v4252, %v5092
        %v5332 = vmul.f32 %v4254, %v5096
        %v5333 = vmul.f32 %v3903, %v5084
        %v5334 = vmul.f32 %v3905, %v5088
        %v5335 = vmul.f32 %v4256, %v5092
        %v5336 = vmul.f32 %v4258, %v5096
        %v5337 = vmul.f32 %v3909, %v5084
        %v5338 = vmul.f32 %v3911, %v5088
        %v5339 = vmul.f32 %v4262, %v5092
        %v5340 = vmul.f32 %v4264, %v5096
        %v5341 = vmul.f32 %v3913, %v5084
        %v5342 = vmul.f32 %v3915, %v5088
        %v5343 = vmul.f32 %v4266, %v5092
        %v5344 = vmul.f32 %v4268, %v5096
        %v5345 = vmul.f32 %v3919, %v5084
        %v5346 = vmul.f32 %v3921, %v5088
        %v5347 = vmul.f32 %v4272, %v5092
        %v5348 = vmul.f32 %v4274, %v5096
        %v5349 = vmul.f32 %v3923, %v5084
        %v5350 = vmul.f32 %v3925, %v5088
        %v5351 = vmul.f32 %v4276, %v5092
        %v5352 = vmul.f32 %v4278, %v5096
        %v5353 = vmul.f32 %v3929, %v5084
        %v5354 = vmul.f32 %v3931, %v5088
        %v5355 = vmul.f32 %v4282, %v5092
        %v5356 = vmul.f32 %v4284, %v5096
        %v5357 = vmul.f32 %v3933, %v5084
        %v5358 = vmul.f32 %v3935, %v5088
        %v5359 = vmul.f32 %v4286, %v5092
        %v5360 = vmul.f32 %v4288, %v5096
        %v5361 = vmul.f32 %v3939, %v5084
        %v5362 = vmul.f32 %v3941, %v5088
        %v5363 = vmul.f32 %v4292, %v5092
        %v5364 = vmul.f32 %v4294, %v5096
        %v5365 = vmul.f32 %v3943, %v5084
        %v5366 = vmul.f32 %v3945, %v5088
        %v5367 = vmul.f32 %v4296, %v5092
        %v5368 = vmul.f32 %v4298, %v5096
        %v5369 = vmax.f32 %v5113, 0.0
        %v5370 = vmax.f32 %v5114, 0.0
        %v5371 = vmax.f32 %v5115, 0.0
        %v5372 = vmax.f32 %v5116, 0.0
        %v5373 = vmax.f32 %v5117, 0.0
        %v5374 = vmax.f32 %v5118, 0.0
        %v5375 = vmax.f32 %v5119, 0.0
        %v5376 = vmax.f32 %v5120, 0.0
        %v5377 = vmax.f32 %v5121, 0.0
        %v5378 = vmax.f32 %v5122, 0.0
        %v5379 = vmax.f32 %v5123, 0.0
        %v5380 = vmax.f32 %v5124, 0.0
        %v5381 = vmax.f32 %v5125, 0.0
        %v5382 = vmax.f32 %v5126, 0.0
        %v5383 = vmax.f32 %v5127, 0.0
        %v5384 = vmax.f32 %v5128, 0.0
        %v5385 = vmax.f32 %v5129, 0.0
        %v5386 = vmax.f32 %v5130, 0.0
        %v5387 = vmax.f32 %v5131, 0.0
        %v5388 = vmax.f32 %v5132, 0.0
        %v5389 = vmax.f32 %v5133, 0.0
        %v5390 = vmax.f32 %v5134, 0.0
        %v5391 = vmax.f32 %v5135, 0.0
        %v5392 = vmax.f32 %v5136, 0.0
        %v5393 = vmax.f32 %v5137, 0.0
        %v5394 = vmax.f32 %v5138, 0.0
        %v5395 = vmax.f32 %v5139, 0.0
        %v5396 = vmax.f32 %v5140, 0.0
        %v5397 = vmax.f32 %v5141, 0.0
        %v5398 = vmax.f32 %v5142, 0.0
        %v5399 = vmax.f32 %v5143, 0.0
        %v5400 = vmax.f32 %v5144, 0.0
        %v5401 = vmax.f32 %v5145, 0.0
        %v5402 = vmax.f32 %v5146, 0.0
        %v5403 = vmax.f32 %v5147, 0.0
        %v5404 = vmax.f32 %v5148, 0.0
        %v5405 = vmax.f32 %v5149, 0.0
        %v5406 = vmax.f32 %v5150, 0.0
        %v5407 = vmax.f32 %v5151, 0.0
        %v5408 = vmax.f32 %v5152, 0.0
        %v5409 = vmax.f32 %v5153, 0.0
        %v5410 = vmax.f32 %v5154, 0.0
        %v5411 = vmax.f32 %v5155, 0.0
        %v5412 = vmax.f32 %v5156, 0.0
        %v5413 = vmax.f32 %v5157, 0.0
        %v5414 = vmax.f32 %v5158, 0.0
        %v5415 = vmax.f32 %v5159, 0.0
        %v5416 = vmax.f32 %v5160, 0.0
        %v5417 = vmax.f32 %v5161, 0.0
        %v5418 = vmax.f32 %v5162, 0.0
        %v5419 = vmax.f32 %v5163, 0.0
        %v5420 = vmax.f32 %v5164, 0.0
        %v5421 = vmax.f32 %v5165, 0.0
        %v5422 = vmax.f32 %v5166, 0.0
        %v5423 = vmax.f32 %v5167, 0.0
        %v5424 = vmax.f32 %v5168, 0.0
        %v5425 = vmax.f32 %v5169, 0.0
        %v5426 = vmax.f32 %v5170, 0.0
        %v5427 = vmax.f32 %v5171, 0.0
        %v5428 = vmax.f32 %v5172, 0.0
        %v5429 = vmax.f32 %v5173, 0.0
        %v5430 = vmax.f32 %v5174, 0.0
        %v5431 = vmax.f32 %v5175, 0.0
        %v5432 = vmax.f32 %v5176, 0.0
        %v5433 = vmax.f32 %v5177, 0.0
        %v5434 = vmax.f32 %v5178, 0.0
        %v5435 = vmax.f32 %v5179, 0.0
        %v5436 = vmax.f32 %v5180, 0.0
        %v5437 = vmax.f32 %v5181, 0.0
        %v5438 = vmax.f32 %v5182, 0.0
        %v5439 = vmax.f32 %v5183, 0.0
        %v5440 = vmax.f32 %v5184, 0.0
        %v5441 = vmax.f32 %v5185, 0.0
        %v5442 = vmax.f32 %v5186, 0.0
        %v5443 = vmax.f32 %v5187, 0.0
        %v5444 = vmax.f32 %v5188, 0.0
        %v5445 = vmax.f32 %v5189, 0.0
        %v5446 = vmax.f32 %v5190, 0.0
        %v5447 = vmax.f32 %v5191, 0.0
        %v5448 = vmax.f32 %v5192, 0.0
        %v5449 = vmax.f32 %v5193, 0.0
        %v5450 = vmax.f32 %v5194, 0.0
        %v5451 = vmax.f32 %v5195, 0.0
        %v5452 = vmax.f32 %v5196, 0.0
        %v5453 = vmax.f32 %v5197, 0.0
        %v5454 = vmax.f32 %v5198, 0.0
        %v5455 = vmax.f32 %v5199, 0.0
        %v5456 = vmax.f32 %v5200, 0.0
        %v5457 = vmax.f32 %v5201, 0.0
        %v5458 = vmax.f32 %v5202, 0.0
        %v5459 = vmax.f32 %v5203, 0.0
        %v5460 = vmax.f32 %v5204, 0.0
        %v5461 = vmax.f32 %v5205, 0.0
        %v5462 = vmax.f32 %v5206, 0.0
        %v5463 = vmax.f32 %v5207, 0.0
        %v5464 = vmax.f32 %v5208, 0.0
        %v5465 = vmax.f32 %v5209, 0.0
        %v5466 = vmax.f32 %v5210, 0.0
        %v5467 = vmax.f32 %v5211, 0.0
        %v5468 = vmax.f32 %v5212, 0.0
        %v5469 = vmax.f32 %v5213, 0.0
        %v5470 = vmax.f32 %v5214, 0.0
        %v5471 = vmax.f32 %v5215, 0.0
        %v5472 = vmax.f32 %v5216, 0.0
        %v5473 = vmax.f32 %v5217, 0.0
        %v5474 = vmax.f32 %v5218, 0.0
        %v5475 = vmax.f32 %v5219, 0.0
        %v5476 = vmax.f32 %v5220, 0.0
        %v5477 = vmax.f32 %v5221, 0.0
        %v5478 = vmax.f32 %v5222, 0.0
        %v5479 = vmax.f32 %v5223, 0.0
        %v5480 = vmax.f32 %v5224, 0.0
        %v5481 = vmax.f32 %v5225, 0.0
        %v5482 = vmax.f32 %v5226, 0.0
        %v5483 = vmax.f32 %v5227, 0.0
        %v5484 = vmax.f32 %v5228, 0.0
        %v5485 = vmax.f32 %v5229, 0.0
        %v5486 = vmax.f32 %v5230, 0.0
        %v5487 = vmax.f32 %v5231, 0.0
        %v5488 = vmax.f32 %v5232, 0.0
        %v5489 = vmax.f32 %v5233, 0.0
        %v5490 = vmax.f32 %v5234, 0.0
        %v5491 = vmax.f32 %v5235, 0.0
        %v5492 = vmax.f32 %v5236, 0.0
        %v5493 = vmax.f32 %v5237, 0.0
        %v5494 = vmax.f32 %v5238, 0.0
        %v5495 = vmax.f32 %v5239, 0.0
        %v5496 = vmax.f32 %v5240, 0.0
        %v5497 = vmax.f32 %v5241, 0.0
        %v5498 = vmax.f32 %v5242, 0.0
        %v5499 = vmax.f32 %v5243, 0.0
        %v5500 = vmax.f32 %v5244, 0.0
        %v5501 = vmax.f32 %v5245, 0.0
        %v5502 = vmax.f32 %v5246, 0.0
        %v5503 = vmax.f32 %v5247, 0.0
        %v5504 = vmax.f32 %v5248, 0.0
        %v5505 = vmax.f32 %v5249, 0.0
        %v5506 = vmax.f32 %v5250, 0.0
        %v5507 = vmax.f32 %v5251, 0.0
        %v5508 = vmax.f32 %v5252, 0.0
        %v5509 = vmax.f32 %v5253, 0.0
        %v5510 = vmax.f32 %v5254, 0.0
        %v5511 = vmax.f32 %v5255, 0.0
        %v5512 = vmax.f32 %v5256, 0.0
        %v5513 = vmax.f32 %v5257, 0.0
        %v5514 = vmax.f32 %v5258, 0.0
        %v5515 = vmax.f32 %v5259, 0.0
        %v5516 = vmax.f32 %v5260, 0.0
        %v5517 = vmax.f32 %v5261, 0.0
        %v5518 = vmax.f32 %v5262, 0.0
        %v5519 = vmax.f32 %v5263, 0.0
        %v5520 = vmax.f32 %v5264, 0.0
        %v5521 = vmax.f32 %v5265, 0.0
        %v5522 = vmax.f32 %v5266, 0.0
        %v5523 = vmax.f32 %v5267, 0.0
        %v5524 = vmax.f32 %v5268, 0.0
        %v5525 = vmax.f32 %v5269, 0.0
        %v5526 = vmax.f32 %v5270, 0.0
        %v5527 = vmax.f32 %v5271, 0.0
        %v5528 = vmax.f32 %v5272, 0.0
        %v5529 = vmax.f32 %v5273, 0.0
        %v5530 = vmax.f32 %v5274, 0.0
        %v5531 = vmax.f32 %v5275, 0.0
        %v5532 = vmax.f32 %v5276, 0.0
        %v5533 = vmax.f32 %v5277, 0.0
        %v5534 = vmax.f32 %v5278, 0.0
        %v5535 = vmax.f32 %v5279, 0.0
        %v5536 = vmax.f32 %v5280, 0.0
        %v5537 = vmax.f32 %v5281, 0.0
        %v5538 = vmax.f32 %v5282, 0.0
        %v5539 = vmax.f32 %v5283, 0.0
        %v5540 = vmax.f32 %v5284, 0.0
        %v5541 = vmax.f32 %v5285, 0.0
        %v5542 = vmax.f32 %v5286, 0.0
        %v5543 = vmax.f32 %v5287, 0.0
        %v5544 = vmax.f32 %v5288, 0.0
        %v5545 = vmax.f32 %v5289, 0.0
        %v5546 = vmax.f32 %v5290, 0.0
        %v5547 = vmax.f32 %v5291, 0.0
        %v5548 = vmax.f32 %v5292, 0.0
        %v5549 = vmax.f32 %v5293, 0.0
        %v5550 = vmax.f32 %v5294, 0.0
        %v5551 = vmax.f32 %v5295, 0.0
        %v5552 = vmax.f32 %v5296, 0.0
        %v5553 = vmax.f32 %v5297, 0.0
        %v5554 = vmax.f32 %v5298, 0.0
        %v5555 = vmax.f32 %v5299, 0.0
        %v5556 = vmax.f32 %v5300, 0.0
        %v5557 = vmax.f32 %v5301, 0.0
        %v5558 = vmax.f32 %v5302, 0.0
        %v5559 = vmax.f32 %v5303, 0.0
        %v5560 = vmax.f32 %v5304, 0.0
        %v5561 = vmax.f32 %v5305, 0.0
        %v5562 = vmax.f32 %v5306, 0.0
        %v5563 = vmax.f32 %v5307, 0.0
        %v5564 = vmax.f32 %v5308, 0.0
        %v5565 = vmax.f32 %v5309, 0.0
        %v5566 = vmax.f32 %v5310, 0.0
        %v5567 = vmax.f32 %v5311, 0.0
        %v5568 = vmax.f32 %v5312, 0.0
        %v5569 = vmax.f32 %v5313, 0.0
        %v5570 = vmax.f32 %v5314, 0.0
        %v5571 = vmax.f32 %v5315, 0.0
        %v5572 = vmax.f32 %v5316, 0.0
        %v5573 = vmax.f32 %v5317, 0.0
        %v5574 = vmax.f32 %v5318, 0.0
        %v5575 = vmax.f32 %v5319, 0.0
        %v5576 = vmax.f32 %v5320, 0.0
        %v5577 = vmax.f32 %v5321, 0.0
        %v5578 = vmax.f32 %v5322, 0.0
        %v5579 = vmax.f32 %v5323, 0.0
        %v5580 = vmax.f32 %v5324, 0.0
        %v5581 = vmax.f32 %v5325, 0.0
        %v5582 = vmax.f32 %v5326, 0.0
        %v5583 = vmax.f32 %v5327, 0.0
        %v5584 = vmax.f32 %v5328, 0.0
        %v5585 = vmax.f32 %v5329, 0.0
        %v5586 = vmax.f32 %v5330, 0.0
        %v5587 = vmax.f32 %v5331, 0.0
        %v5588 = vmax.f32 %v5332, 0.0
        %v5589 = vmax.f32 %v5333, 0.0
        %v5590 = vmax.f32 %v5334, 0.0
        %v5591 = vmax.f32 %v5335, 0.0
        %v5592 = vmax.f32 %v5336, 0.0
        %v5593 = vmax.f32 %v5337, 0.0
        %v5594 = vmax.f32 %v5338, 0.0
        %v5595 = vmax.f32 %v5339, 0.0
        %v5596 = vmax.f32 %v5340, 0.0
        %v5597 = vmax.f32 %v5341, 0.0
        %v5598 = vmax.f32 %v5342, 0.0
        %v5599 = vmax.f32 %v5343, 0.0
        %v5600 = vmax.f32 %v5344, 0.0
        %v5601 = vmax.f32 %v5345, 0.0
        %v5602 = vmax.f32 %v5346, 0.0
        %v5603 = vmax.f32 %v5347, 0.0
        %v5604 = vmax.f32 %v5348, 0.0
        %v5605 = vmax.f32 %v5349, 0.0
        %v5606 = vmax.f32 %v5350, 0.0
        %v5607 = vmax.f32 %v5351, 0.0
        %v5608 = vmax.f32 %v5352, 0.0
        %v5609 = vmax.f32 %v5353, 0.0
        %v5610 = vmax.f32 %v5354, 0.0
        %v5611 = vmax.f32 %v5355, 0.0
        %v5612 = vmax.f32 %v5356, 0.0
        %v5613 = vmax.f32 %v5357, 0.0
        %v5614 = vmax.f32 %v5358, 0.0
        %v5615 = vmax.f32 %v5359, 0.0
        %v5616 = vmax.f32 %v5360, 0.0
        %v5617 = vmax.f32 %v5361, 0.0
        %v5618 = vmax.f32 %v5362, 0.0
        %v5619 = vmax.f32 %v5363, 0.0
        %v5620 = vmax.f32 %v5364, 0.0
        %v5621 = vmax.f32 %v5365, 0.0
        %v5622 = vmax.f32 %v5366, 0.0
        %v5623 = vmax.f32 %v5367, 0.0
        %v5624 = vmax.f32 %v5368, 0.0
        %v5625 = vpack.c.bf16 %v5373, %v5369
        %v5626 = vpack.c.bf16 %v5374, %v5370
        %v5627 = vpack.c.bf16 %v5375, %v5371
        %v5628 = vpack.c.bf16 %v5376, %v5372
        %v5629 = vpack.c.bf16 %v5381, %v5377
        %v5630 = vpack.c.bf16 %v5382, %v5378
        %v5631 = vpack.c.bf16 %v5383, %v5379
        %v5632 = vpack.c.bf16 %v5384, %v5380
        %v5633 = vpack.c.bf16 %v5389, %v5385
        %v5634 = vpack.c.bf16 %v5390, %v5386
        %v5635 = vpack.c.bf16 %v5391, %v5387
        %v5636 = vpack.c.bf16 %v5392, %v5388
        %v5637 = vpack.c.bf16 %v5397, %v5393
        %v5638 = vpack.c.bf16 %v5398, %v5394
        %v5639 = vpack.c.bf16 %v5399, %v5395
        %v5640 = vpack.c.bf16 %v5400, %v5396
        %v5641 = vpack.c.bf16 %v5405, %v5401
        %v5642 = vpack.c.bf16 %v5406, %v5402
        %v5643 = vpack.c.bf16 %v5407, %v5403
        %v5644 = vpack.c.bf16 %v5408, %v5404
        %v5645 = vpack.c.bf16 %v5413, %v5409
        %v5646 = vpack.c.bf16 %v5414, %v5410
        %v5647 = vpack.c.bf16 %v5415, %v5411
        %v5648 = vpack.c.bf16 %v5416, %v5412
        %v5649 = vpack.c.bf16 %v5421, %v5417
        %v5650 = vpack.c.bf16 %v5422, %v5418
        %v5651 = vpack.c.bf16 %v5423, %v5419
        %v5652 = vpack.c.bf16 %v5424, %v5420
        %v5653 = vpack.c.bf16 %v5429, %v5425
        %v5654 = vpack.c.bf16 %v5430, %v5426
        %v5655 = vpack.c.bf16 %v5431, %v5427
        %v5656 = vpack.c.bf16 %v5432, %v5428
        %v5657 = vpack.c.bf16 %v5437, %v5433
        %v5658 = vpack.c.bf16 %v5438, %v5434
        %v5659 = vpack.c.bf16 %v5439, %v5435
        %v5660 = vpack.c.bf16 %v5440, %v5436
        %v5661 = vpack.c.bf16 %v5445, %v5441
        %v5662 = vpack.c.bf16 %v5446, %v5442
        %v5663 = vpack.c.bf16 %v5447, %v5443
        %v5664 = vpack.c.bf16 %v5448, %v5444
        %v5665 = vpack.c.bf16 %v5453, %v5449
        %v5666 = vpack.c.bf16 %v5454, %v5450
        %v5667 = vpack.c.bf16 %v5455, %v5451
        %v5668 = vpack.c.bf16 %v5456, %v5452
        %v5669 = vpack.c.bf16 %v5461, %v5457
        %v5670 = vpack.c.bf16 %v5462, %v5458
        %v5671 = vpack.c.bf16 %v5463, %v5459
        %v5672 = vpack.c.bf16 %v5464, %v5460
        %v5673 = vpack.c.bf16 %v5469, %v5465
        %v5674 = vpack.c.bf16 %v5470, %v5466
        %v5675 = vpack.c.bf16 %v5471, %v5467
        %v5676 = vpack.c.bf16 %v5472, %v5468
        %v5677 = vpack.c.bf16 %v5477, %v5473
        %v5678 = vpack.c.bf16 %v5478, %v5474
        %v5679 = vpack.c.bf16 %v5479, %v5475
        %v5680 = vpack.c.bf16 %v5480, %v5476
        %v5681 = vpack.c.bf16 %v5485, %v5481
        %v5682 = vpack.c.bf16 %v5486, %v5482
        %v5683 = vpack.c.bf16 %v5487, %v5483
        %v5684 = vpack.c.bf16 %v5488, %v5484
        %v5685 = vpack.c.bf16 %v5493, %v5489
        %v5686 = vpack.c.bf16 %v5494, %v5490
        %v5687 = vpack.c.bf16 %v5495, %v5491
        %v5688 = vpack.c.bf16 %v5496, %v5492
        %v5689 = vpack.c.bf16 %v5501, %v5497
        %v5690 = vpack.c.bf16 %v5502, %v5498
        %v5691 = vpack.c.bf16 %v5503, %v5499
        %v5692 = vpack.c.bf16 %v5504, %v5500
        %v5693 = vpack.c.bf16 %v5509, %v5505
        %v5694 = vpack.c.bf16 %v5510, %v5506
        %v5695 = vpack.c.bf16 %v5511, %v5507
        %v5696 = vpack.c.bf16 %v5512, %v5508
        %v5697 = vpack.c.bf16 %v5517, %v5513
        %v5698 = vpack.c.bf16 %v5518, %v5514
        %v5699 = vpack.c.bf16 %v5519, %v5515
        %v5700 = vpack.c.bf16 %v5520, %v5516
        %v5701 = vpack.c.bf16 %v5525, %v5521
        %v5702 = vpack.c.bf16 %v5526, %v5522
        %v5703 = vpack.c.bf16 %v5527, %v5523
        %v5704 = vpack.c.bf16 %v5528, %v5524
        %v5705 = vpack.c.bf16 %v5533, %v5529
        %v5706 = vpack.c.bf16 %v5534, %v5530
        %v5707 = vpack.c.bf16 %v5535, %v5531
        %v5708 = vpack.c.bf16 %v5536, %v5532
        %v5709 = vpack.c.bf16 %v5541, %v5537
        %v5710 = vpack.c.bf16 %v5542, %v5538
        %v5711 = vpack.c.bf16 %v5543, %v5539
        %v5712 = vpack.c.bf16 %v5544, %v5540
        %v5713 = vpack.c.bf16 %v5549, %v5545
        %v5714 = vpack.c.bf16 %v5550, %v5546
        %v5715 = vpack.c.bf16 %v5551, %v5547
        %v5716 = vpack.c.bf16 %v5552, %v5548
        %v5717 = vpack.c.bf16 %v5557, %v5553
        %v5718 = vpack.c.bf16 %v5558, %v5554
        %v5719 = vpack.c.bf16 %v5559, %v5555
        %v5720 = vpack.c.bf16 %v5560, %v5556
        %v5721 = vpack.c.bf16 %v5565, %v5561
        %v5722 = vpack.c.bf16 %v5566, %v5562
        %v5723 = vpack.c.bf16 %v5567, %v5563
        %v5724 = vpack.c.bf16 %v5568, %v5564
        %v5725 = vpack.c.bf16 %v5573, %v5569
        %v5726 = vpack.c.bf16 %v5574, %v5570
        %v5727 = vpack.c.bf16 %v5575, %v5571
        %v5728 = vpack.c.bf16 %v5576, %v5572
        %v5729 = vpack.c.bf16 %v5581, %v5577
        %v5730 = vpack.c.bf16 %v5582, %v5578
        %v5731 = vpack.c.bf16 %v5583, %v5579
        %v5732 = vpack.c.bf16 %v5584, %v5580
        %v5733 = vpack.c.bf16 %v5589, %v5585
        %v5734 = vpack.c.bf16 %v5590, %v5586
        %v5735 = vpack.c.bf16 %v5591, %v5587
        %v5736 = vpack.c.bf16 %v5592, %v5588
        %v5737 = vpack.c.bf16 %v5597, %v5593
        %v5738 = vpack.c.bf16 %v5598, %v5594
        %v5739 = vpack.c.bf16 %v5599, %v5595
        %v5740 = vpack.c.bf16 %v5600, %v5596
        %v5741 = vpack.c.bf16 %v5605, %v5601
        %v5742 = vpack.c.bf16 %v5606, %v5602
        %v5743 = vpack.c.bf16 %v5607, %v5603
        %v5744 = vpack.c.bf16 %v5608, %v5604
        %v5745 = vpack.c.bf16 %v5613, %v5609
        %v5746 = vpack.c.bf16 %v5614, %v5610
        %v5747 = vpack.c.bf16 %v5615, %v5611
        %v5748 = vpack.c.bf16 %v5616, %v5612
        %v5749 = vpack.c.bf16 %v5621, %v5617
        %v5750 = vpack.c.bf16 %v5622, %v5618
        %v5751 = vpack.c.bf16 %v5623, %v5619
        %v5752 = vpack.c.bf16 %v5624, %v5620
        %v5881 = vunpack.c.l.b16 %v5625
        %v5882 = vunpack.c.l.b16 %v5626
        %v5883 = vunpack.c.l.b16 %v5627
        %v5884 = vunpack.c.l.b16 %v5628
        %v5885 = vunpack.c.h.b16 %v5625
        %v5886 = vunpack.c.h.b16 %v5626
        %v5887 = vunpack.c.h.b16 %v5627
        %v5888 = vunpack.c.h.b16 %v5628
        %v5889 = vunpack.c.l.b16 %v5629
        %v5890 = vunpack.c.l.b16 %v5630
        %v5891 = vunpack.c.l.b16 %v5631
        %v5892 = vunpack.c.l.b16 %v5632
        %v5893 = vunpack.c.h.b16 %v5629
        %v5894 = vunpack.c.h.b16 %v5630
        %v5895 = vunpack.c.h.b16 %v5631
        %v5896 = vunpack.c.h.b16 %v5632
        %v5897 = vunpack.c.l.b16 %v5633
        %v5898 = vunpack.c.l.b16 %v5634
        %v5899 = vunpack.c.l.b16 %v5635
        %v5900 = vunpack.c.l.b16 %v5636
        %v5901 = vunpack.c.h.b16 %v5633
        %v5902 = vunpack.c.h.b16 %v5634
        %v5903 = vunpack.c.h.b16 %v5635
        %v5904 = vunpack.c.h.b16 %v5636
        %v5905 = vunpack.c.l.b16 %v5637
        %v5906 = vunpack.c.l.b16 %v5638
        %v5907 = vunpack.c.l.b16 %v5639
        %v5908 = vunpack.c.l.b16 %v5640
        %v5909 = vunpack.c.h.b16 %v5637
        %v5910 = vunpack.c.h.b16 %v5638
        %v5911 = vunpack.c.h.b16 %v5639
        %v5912 = vunpack.c.h.b16 %v5640
        %v5913 = vunpack.c.l.b16 %v5641
        %v5914 = vunpack.c.l.b16 %v5642
        %v5915 = vunpack.c.l.b16 %v5643
        %v5916 = vunpack.c.l.b16 %v5644
        %v5917 = vunpack.c.h.b16 %v5641
        %v5918 = vunpack.c.h.b16 %v5642
        %v5919 = vunpack.c.h.b16 %v5643
        %v5920 = vunpack.c.h.b16 %v5644
        %v5921 = vunpack.c.l.b16 %v5645
        %v5922 = vunpack.c.l.b16 %v5646
        %v5923 = vunpack.c.l.b16 %v5647
        %v5924 = vunpack.c.l.b16 %v5648
        %v5925 = vunpack.c.h.b16 %v5645
        %v5926 = vunpack.c.h.b16 %v5646
        %v5927 = vunpack.c.h.b16 %v5647
        %v5928 = vunpack.c.h.b16 %v5648
        %v5929 = vunpack.c.l.b16 %v5649
        %v5930 = vunpack.c.l.b16 %v5650
        %v5931 = vunpack.c.l.b16 %v5651
        %v5932 = vunpack.c.l.b16 %v5652
        %v5933 = vunpack.c.h.b16 %v5649
        %v5934 = vunpack.c.h.b16 %v5650
        %v5935 = vunpack.c.h.b16 %v5651
        %v5936 = vunpack.c.h.b16 %v5652
        %v5937 = vunpack.c.l.b16 %v5653
        %v5938 = vunpack.c.l.b16 %v5654
        %v5939 = vunpack.c.l.b16 %v5655
        %v5940 = vunpack.c.l.b16 %v5656
        %v5941 = vunpack.c.h.b16 %v5653
        %v5942 = vunpack.c.h.b16 %v5654
        %v5943 = vunpack.c.h.b16 %v5655
        %v5944 = vunpack.c.h.b16 %v5656
        %v5945 = vunpack.c.l.b16 %v5657
        %v5946 = vunpack.c.l.b16 %v5658
        %v5947 = vunpack.c.l.b16 %v5659
        %v5948 = vunpack.c.l.b16 %v5660
        %v5949 = vunpack.c.h.b16 %v5657
        %v5950 = vunpack.c.h.b16 %v5658
        %v5951 = vunpack.c.h.b16 %v5659
        %v5952 = vunpack.c.h.b16 %v5660
        %v5953 = vunpack.c.l.b16 %v5661
        %v5954 = vunpack.c.l.b16 %v5662
        %v5955 = vunpack.c.l.b16 %v5663
        %v5956 = vunpack.c.l.b16 %v5664
        %v5957 = vunpack.c.h.b16 %v5661
        %v5958 = vunpack.c.h.b16 %v5662
        %v5959 = vunpack.c.h.b16 %v5663
        %v5960 = vunpack.c.h.b16 %v5664
        %v5961 = vunpack.c.l.b16 %v5665
        %v5962 = vunpack.c.l.b16 %v5666
        %v5963 = vunpack.c.l.b16 %v5667
        %v5964 = vunpack.c.l.b16 %v5668
        %v5965 = vunpack.c.h.b16 %v5665
        %v5966 = vunpack.c.h.b16 %v5666
        %v5967 = vunpack.c.h.b16 %v5667
        %v5968 = vunpack.c.h.b16 %v5668
        %v5969 = vunpack.c.l.b16 %v5669
        %v5970 = vunpack.c.l.b16 %v5670
        %v5971 = vunpack.c.l.b16 %v5671
        %v5972 = vunpack.c.l.b16 %v5672
        %v5973 = vunpack.c.h.b16 %v5669
        %v5974 = vunpack.c.h.b16 %v5670
        %v5975 = vunpack.c.h.b16 %v5671
        %v5976 = vunpack.c.h.b16 %v5672
        %v5977 = vunpack.c.l.b16 %v5673
        %v5978 = vunpack.c.l.b16 %v5674
        %v5979 = vunpack.c.l.b16 %v5675
        %v5980 = vunpack.c.l.b16 %v5676
        %v5981 = vunpack.c.h.b16 %v5673
        %v5982 = vunpack.c.h.b16 %v5674
        %v5983 = vunpack.c.h.b16 %v5675
        %v5984 = vunpack.c.h.b16 %v5676
        %v5985 = vunpack.c.l.b16 %v5677
        %v5986 = vunpack.c.l.b16 %v5678
        %v5987 = vunpack.c.l.b16 %v5679
        %v5988 = vunpack.c.l.b16 %v5680
        %v5989 = vunpack.c.h.b16 %v5677
        %v5990 = vunpack.c.h.b16 %v5678
        %v5991 = vunpack.c.h.b16 %v5679
        %v5992 = vunpack.c.h.b16 %v5680
        %v5993 = vunpack.c.l.b16 %v5681
        %v5994 = vunpack.c.l.b16 %v5682
        %v5995 = vunpack.c.l.b16 %v5683
        %v5996 = vunpack.c.l.b16 %v5684
        %v5997 = vunpack.c.h.b16 %v5681
        %v5998 = vunpack.c.h.b16 %v5682
        %v5999 = vunpack.c.h.b16 %v5683
        %v6000 = vunpack.c.h.b16 %v5684
        %v6001 = vunpack.c.l.b16 %v5685
        %v6002 = vunpack.c.l.b16 %v5686
        %v6003 = vunpack.c.l.b16 %v5687
        %v6004 = vunpack.c.l.b16 %v5688
        %v6005 = vunpack.c.h.b16 %v5685
        %v6006 = vunpack.c.h.b16 %v5686
        %v6007 = vunpack.c.h.b16 %v5687
        %v6008 = vunpack.c.h.b16 %v5688
        %v6009 = vunpack.c.l.b16 %v5689
        %v6010 = vunpack.c.l.b16 %v5690
        %v6011 = vunpack.c.l.b16 %v5691
        %v6012 = vunpack.c.l.b16 %v5692
        %v6013 = vunpack.c.h.b16 %v5689
        %v6014 = vunpack.c.h.b16 %v5690
        %v6015 = vunpack.c.h.b16 %v5691
        %v6016 = vunpack.c.h.b16 %v5692
        %v6017 = vunpack.c.l.b16 %v5693
        %v6018 = vunpack.c.l.b16 %v5694
        %v6019 = vunpack.c.l.b16 %v5695
        %v6020 = vunpack.c.l.b16 %v5696
        %v6021 = vunpack.c.h.b16 %v5693
        %v6022 = vunpack.c.h.b16 %v5694
        %v6023 = vunpack.c.h.b16 %v5695
        %v6024 = vunpack.c.h.b16 %v5696
        %v6025 = vunpack.c.l.b16 %v5697
        %v6026 = vunpack.c.l.b16 %v5698
        %v6027 = vunpack.c.l.b16 %v5699
        %v6028 = vunpack.c.l.b16 %v5700
        %v6029 = vunpack.c.h.b16 %v5697
        %v6030 = vunpack.c.h.b16 %v5698
        %v6031 = vunpack.c.h.b16 %v5699
        %v6032 = vunpack.c.h.b16 %v5700
        %v6033 = vunpack.c.l.b16 %v5701
        %v6034 = vunpack.c.l.b16 %v5702
        %v6035 = vunpack.c.l.b16 %v5703
        %v6036 = vunpack.c.l.b16 %v5704
        %v6037 = vunpack.c.h.b16 %v5701
        %v6038 = vunpack.c.h.b16 %v5702
        %v6039 = vunpack.c.h.b16 %v5703
        %v6040 = vunpack.c.h.b16 %v5704
        %v6041 = vunpack.c.l.b16 %v5705
        %v6042 = vunpack.c.l.b16 %v5706
        %v6043 = vunpack.c.l.b16 %v5707
        %v6044 = vunpack.c.l.b16 %v5708
        %v6045 = vunpack.c.h.b16 %v5705
        %v6046 = vunpack.c.h.b16 %v5706
        %v6047 = vunpack.c.h.b16 %v5707
        %v6048 = vunpack.c.h.b16 %v5708
        %v6049 = vunpack.c.l.b16 %v5709
        %v6050 = vunpack.c.l.b16 %v5710
        %v6051 = vunpack.c.l.b16 %v5711
        %v6052 = vunpack.c.l.b16 %v5712
        %v6053 = vunpack.c.h.b16 %v5709
        %v6054 = vunpack.c.h.b16 %v5710
        %v6055 = vunpack.c.h.b16 %v5711
        %v6056 = vunpack.c.h.b16 %v5712
        %v6057 = vunpack.c.l.b16 %v5713
        %v6058 = vunpack.c.l.b16 %v5714
        %v6059 = vunpack.c.l.b16 %v5715
        %v6060 = vunpack.c.l.b16 %v5716
        %v6061 = vunpack.c.h.b16 %v5713
        %v6062 = vunpack.c.h.b16 %v5714
        %v6063 = vunpack.c.h.b16 %v5715
        %v6064 = vunpack.c.h.b16 %v5716
        %v6065 = vunpack.c.l.b16 %v5717
        %v6066 = vunpack.c.l.b16 %v5718
        %v6067 = vunpack.c.l.b16 %v5719
        %v6068 = vunpack.c.l.b16 %v5720
        %v6069 = vunpack.c.h.b16 %v5717
        %v6070 = vunpack.c.h.b16 %v5718
        %v6071 = vunpack.c.h.b16 %v5719
        %v6072 = vunpack.c.h.b16 %v5720
        %v6073 = vunpack.c.l.b16 %v5721
        %v6074 = vunpack.c.l.b16 %v5722
        %v6075 = vunpack.c.l.b16 %v5723
        %v6076 = vunpack.c.l.b16 %v5724
        %v6077 = vunpack.c.h.b16 %v5721
        %v6078 = vunpack.c.h.b16 %v5722
        %v6079 = vunpack.c.h.b16 %v5723
        %v6080 = vunpack.c.h.b16 %v5724
        %v6081 = vunpack.c.l.b16 %v5725
        %v6082 = vunpack.c.l.b16 %v5726
        %v6083 = vunpack.c.l.b16 %v5727
        %v6084 = vunpack.c.l.b16 %v5728
        %v6085 = vunpack.c.h.b16 %v5725
        %v6086 = vunpack.c.h.b16 %v5726
        %v6087 = vunpack.c.h.b16 %v5727
        %v6088 = vunpack.c.h.b16 %v5728
        %v6089 = vunpack.c.l.b16 %v5729
        %v6090 = vunpack.c.l.b16 %v5730
        %v6091 = vunpack.c.l.b16 %v5731
        %v6092 = vunpack.c.l.b16 %v5732
        %v6093 = vunpack.c.h.b16 %v5729
        %v6094 = vunpack.c.h.b16 %v5730
        %v6095 = vunpack.c.h.b16 %v5731
        %v6096 = vunpack.c.h.b16 %v5732
        %v6097 = vunpack.c.l.b16 %v5733
        %v6098 = vunpack.c.l.b16 %v5734
        %v6099 = vunpack.c.l.b16 %v5735
        %v6100 = vunpack.c.l.b16 %v5736
        %v6101 = vunpack.c.h.b16 %v5733
        %v6102 = vunpack.c.h.b16 %v5734
        %v6103 = vunpack.c.h.b16 %v5735
        %v6104 = vunpack.c.h.b16 %v5736
        %v6105 = vunpack.c.l.b16 %v5737
        %v6106 = vunpack.c.l.b16 %v5738
        %v6107 = vunpack.c.l.b16 %v5739
        %v6108 = vunpack.c.l.b16 %v5740
        %v6109 = vunpack.c.h.b16 %v5737
        %v6110 = vunpack.c.h.b16 %v5738
        %v6111 = vunpack.c.h.b16 %v5739
        %v6112 = vunpack.c.h.b16 %v5740
        %v6113 = vunpack.c.l.b16 %v5741
        %v6114 = vunpack.c.l.b16 %v5742
        %v6115 = vunpack.c.l.b16 %v5743
        %v6116 = vunpack.c.l.b16 %v5744
        %v6117 = vunpack.c.h.b16 %v5741
        %v6118 = vunpack.c.h.b16 %v5742
        %v6119 = vunpack.c.h.b16 %v5743
        %v6120 = vunpack.c.h.b16 %v5744
        %v6121 = vunpack.c.l.b16 %v5745
        %v6122 = vunpack.c.l.b16 %v5746
        %v6123 = vunpack.c.l.b16 %v5747
        %v6124 = vunpack.c.l.b16 %v5748
        %v6125 = vunpack.c.h.b16 %v5745
        %v6126 = vunpack.c.h.b16 %v5746
        %v6127 = vunpack.c.h.b16 %v5747
        %v6128 = vunpack.c.h.b16 %v5748
        %v6129 = vunpack.c.l.b16 %v5749
        %v6130 = vunpack.c.l.b16 %v5750
        %v6131 = vunpack.c.l.b16 %v5751
        %v6132 = vunpack.c.l.b16 %v5752
        %v6133 = vunpack.c.h.b16 %v5749
        %v6134 = vunpack.c.h.b16 %v5750
        %v6135 = vunpack.c.h.b16 %v5751
        %v6136 = vunpack.c.h.b16 %v5752
        %v6137 = vpack.c.b16 %v5882, %v5881
        %v6138 = vpack.c.b16 %v5884, %v5883
        %v6139 = vpack.c.b16 %v5886, %v5885
        %v6140 = vpack.c.b16 %v5888, %v5887
        %v6141 = vpack.c.b16 %v5890, %v5889
        %v6142 = vpack.c.b16 %v5892, %v5891
        %v6143 = vpack.c.b16 %v5894, %v5893
        %v6144 = vpack.c.b16 %v5896, %v5895
        %v6145 = vpack.c.b16 %v5898, %v5897
        %v6146 = vpack.c.b16 %v5900, %v5899
        %v6147 = vpack.c.b16 %v5902, %v5901
        %v6148 = vpack.c.b16 %v5904, %v5903
        %v6149 = vpack.c.b16 %v5906, %v5905
        %v6150 = vpack.c.b16 %v5908, %v5907
        %v6151 = vpack.c.b16 %v5910, %v5909
        %v6152 = vpack.c.b16 %v5912, %v5911
        %v6153 = vpack.c.b16 %v5914, %v5913
        %v6154 = vpack.c.b16 %v5916, %v5915
        %v6155 = vpack.c.b16 %v5918, %v5917
        %v6156 = vpack.c.b16 %v5920, %v5919
        %v6157 = vpack.c.b16 %v5922, %v5921
        %v6158 = vpack.c.b16 %v5924, %v5923
        %v6159 = vpack.c.b16 %v5926, %v5925
        %v6160 = vpack.c.b16 %v5928, %v5927
        %v6161 = vpack.c.b16 %v5930, %v5929
        %v6162 = vpack.c.b16 %v5932, %v5931
        %v6163 = vpack.c.b16 %v5934, %v5933
        %v6164 = vpack.c.b16 %v5936, %v5935
        %v6165 = vpack.c.b16 %v5938, %v5937
        %v6166 = vpack.c.b16 %v5940, %v5939
        %v6167 = vpack.c.b16 %v5942, %v5941
        %v6168 = vpack.c.b16 %v5944, %v5943
        %v6169 = vpack.c.b16 %v5946, %v5945
        %v6170 = vpack.c.b16 %v5948, %v5947
        %v6171 = vpack.c.b16 %v5950, %v5949
        %v6172 = vpack.c.b16 %v5952, %v5951
        %v6173 = vpack.c.b16 %v5954, %v5953
        %v6174 = vpack.c.b16 %v5956, %v5955
        %v6175 = vpack.c.b16 %v5958, %v5957
        %v6176 = vpack.c.b16 %v5960, %v5959
        %v6177 = vpack.c.b16 %v5962, %v5961
        %v6178 = vpack.c.b16 %v5964, %v5963
        %v6179 = vpack.c.b16 %v5966, %v5965
        %v6180 = vpack.c.b16 %v5968, %v5967
        %v6181 = vpack.c.b16 %v5970, %v5969
        %v6182 = vpack.c.b16 %v5972, %v5971
        %v6183 = vpack.c.b16 %v5974, %v5973
        %v6184 = vpack.c.b16 %v5976, %v5975
        %v6185 = vpack.c.b16 %v5978, %v5977
        %v6186 = vpack.c.b16 %v5980, %v5979
        %v6187 = vpack.c.b16 %v5982, %v5981
        %v6188 = vpack.c.b16 %v5984, %v5983
        %v6189 = vpack.c.b16 %v5986, %v5985
        %v6190 = vpack.c.b16 %v5988, %v5987
        %v6191 = vpack.c.b16 %v5990, %v5989
        %v6192 = vpack.c.b16 %v5992, %v5991
        %v6193 = vpack.c.b16 %v5994, %v5993
        %v6194 = vpack.c.b16 %v5996, %v5995
        %v6195 = vpack.c.b16 %v5998, %v5997
        %v6196 = vpack.c.b16 %v6000, %v5999
        %v6197 = vpack.c.b16 %v6002, %v6001
        %v6198 = vpack.c.b16 %v6004, %v6003
        %v6199 = vpack.c.b16 %v6006, %v6005
        %v6200 = vpack.c.b16 %v6008, %v6007
        %v6201 = vpack.c.b16 %v6010, %v6009
        %v6202 = vpack.c.b16 %v6012, %v6011
        %v6203 = vpack.c.b16 %v6014, %v6013
        %v6204 = vpack.c.b16 %v6016, %v6015
        %v6205 = vpack.c.b16 %v6018, %v6017
        %v6206 = vpack.c.b16 %v6020, %v6019
        %v6207 = vpack.c.b16 %v6022, %v6021
        %v6208 = vpack.c.b16 %v6024, %v6023
        %v6209 = vpack.c.b16 %v6026, %v6025
        %v6210 = vpack.c.b16 %v6028, %v6027
        %v6211 = vpack.c.b16 %v6030, %v6029
        %v6212 = vpack.c.b16 %v6032, %v6031
        %v6213 = vpack.c.b16 %v6034, %v6033
        %v6214 = vpack.c.b16 %v6036, %v6035
        %v6215 = vpack.c.b16 %v6038, %v6037
        %v6216 = vpack.c.b16 %v6040, %v6039
        %v6217 = vpack.c.b16 %v6042, %v6041
        %v6218 = vpack.c.b16 %v6044, %v6043
        %v6219 = vpack.c.b16 %v6046, %v6045
        %v6220 = vpack.c.b16 %v6048, %v6047
        %v6221 = vpack.c.b16 %v6050, %v6049
        %v6222 = vpack.c.b16 %v6052, %v6051
        %v6223 = vpack.c.b16 %v6054, %v6053
        %v6224 = vpack.c.b16 %v6056, %v6055
        %v6225 = vpack.c.b16 %v6058, %v6057
        %v6226 = vpack.c.b16 %v6060, %v6059
        %v6227 = vpack.c.b16 %v6062, %v6061
        %v6228 = vpack.c.b16 %v6064, %v6063
        %v6229 = vpack.c.b16 %v6066, %v6065
        %v6230 = vpack.c.b16 %v6068, %v6067
        %v6231 = vpack.c.b16 %v6070, %v6069
        %v6232 = vpack.c.b16 %v6072, %v6071
        %v6233 = vpack.c.b16 %v6074, %v6073
        %v6234 = vpack.c.b16 %v6076, %v6075
        %v6235 = vpack.c.b16 %v6078, %v6077
        %v6236 = vpack.c.b16 %v6080, %v6079
        %v6237 = vpack.c.b16 %v6082, %v6081
        %v6238 = vpack.c.b16 %v6084, %v6083
        %v6239 = vpack.c.b16 %v6086, %v6085
        %v6240 = vpack.c.b16 %v6088, %v6087
        %v6241 = vpack.c.b16 %v6090, %v6089
        %v6242 = vpack.c.b16 %v6092, %v6091
        %v6243 = vpack.c.b16 %v6094, %v6093
        %v6244 = vpack.c.b16 %v6096, %v6095
        %v6245 = vpack.c.b16 %v6098, %v6097
        %v6246 = vpack.c.b16 %v6100, %v6099
        %v6247 = vpack.c.b16 %v6102, %v6101
        %v6248 = vpack.c.b16 %v6104, %v6103
        %v6249 = vpack.c.b16 %v6106, %v6105
        %v6250 = vpack.c.b16 %v6108, %v6107
        %v6251 = vpack.c.b16 %v6110, %v6109
        %v6252 = vpack.c.b16 %v6112, %v6111
        %v6253 = vpack.c.b16 %v6114, %v6113
        %v6254 = vpack.c.b16 %v6116, %v6115
        %v6255 = vpack.c.b16 %v6118, %v6117
        %v6256 = vpack.c.b16 %v6120, %v6119
        %v6257 = vpack.c.b16 %v6122, %v6121
        %v6258 = vpack.c.b16 %v6124, %v6123
        %v6259 = vpack.c.b16 %v6126, %v6125
        %v6260 = vpack.c.b16 %v6128, %v6127
        %v6261 = vpack.c.b16 %v6130, %v6129
        %v6262 = vpack.c.b16 %v6132, %v6131
        %v6263 = vpack.c.b16 %v6134, %v6133
        %v6264 = vpack.c.b16 %v6136, %v6135
        %6393 = vst [vmem:[%s380] sm:$0xff] %v6137
        %6394 = vst [vmem:[%s380 + $0x8] sm:$0xff] %v6138
        %6395 = vst [vmem:[%s380 + $0x10] sm:$0xff] %v6139
        %6396 = vst [vmem:[%s380 + $0x18] sm:$0xff] %v6140
        %6397 = vst [vmem:[%s380 + $0x20] sm:$0xff] %v6141
        %6398 = vst [vmem:[%s380 + $0x28] sm:$0xff] %v6142
        %6399 = vst [vmem:[%s380 + $0x30] sm:$0xff] %v6143
        %6400 = vst [vmem:[%s380 + $0x38] sm:$0xff] %v6144
        %6401 = vst [vmem:[%s380 + $0x40] sm:$0xff] %v6145
        %6402 = vst [vmem:[%s380 + $0x48] sm:$0xff] %v6146
        %6403 = vst [vmem:[%s380 + $0x50] sm:$0xff] %v6147
        %6404 = vst [vmem:[%s380 + $0x58] sm:$0xff] %v6148
        %6405 = vst [vmem:[%s380 + $0x60] sm:$0xff] %v6149
        %6406 = vst [vmem:[%s380 + $0x68] sm:$0xff] %v6150
        %6407 = vst [vmem:[%s380 + $0x70] sm:$0xff] %v6151
        %6408 = vst [vmem:[%s380 + $0x78] sm:$0xff] %v6152
        %6409 = vst [vmem:[%s380 + $0x80] sm:$0xff] %v6153
        %6410 = vst [vmem:[%s380 + $0x88] sm:$0xff] %v6154
        %6411 = vst [vmem:[%s380 + $0x90] sm:$0xff] %v6155
        %6412 = vst [vmem:[%s380 + $0x98] sm:$0xff] %v6156
        %6413 = vst [vmem:[%s380 + $0xa0] sm:$0xff] %v6157
        %6414 = vst [vmem:[%s380 + $0xa8] sm:$0xff] %v6158
        %6415 = vst [vmem:[%s380 + $0xb0] sm:$0xff] %v6159
        %6416 = vst [vmem:[%s380 + $0xb8] sm:$0xff] %v6160
        %6417 = vst [vmem:[%s380 + $0xc0] sm:$0xff] %v6161
        %6418 = vst [vmem:[%s380 + $0xc8] sm:$0xff] %v6162
        %6419 = vst [vmem:[%s380 + $0xd0] sm:$0xff] %v6163
        %6420 = vst [vmem:[%s380 + $0xd8] sm:$0xff] %v6164
        %6421 = vst [vmem:[%s380 + $0xe0] sm:$0xff] %v6165
        %6422 = vst [vmem:[%s380 + $0xe8] sm:$0xff] %v6166
        %6423 = vst [vmem:[%s380 + $0xf0] sm:$0xff] %v6167
        %6424 = vst [vmem:[%s380 + $0xf8] sm:$0xff] %v6168
        %6425 = vst [vmem:[%s380 + $0x100] sm:$0xff] %v6169
        %6426 = vst [vmem:[%s380 + $0x108] sm:$0xff] %v6170
        %6427 = vst [vmem:[%s380 + $0x110] sm:$0xff] %v6171
        %6428 = vst [vmem:[%s380 + $0x118] sm:$0xff] %v6172
        %6429 = vst [vmem:[%s380 + $0x120] sm:$0xff] %v6173
        %6430 = vst [vmem:[%s380 + $0x128] sm:$0xff] %v6174
        %6431 = vst [vmem:[%s380 + $0x130] sm:$0xff] %v6175
        %6432 = vst [vmem:[%s380 + $0x138] sm:$0xff] %v6176
        %6433 = vst [vmem:[%s380 + $0x140] sm:$0xff] %v6177
        %6434 = vst [vmem:[%s380 + $0x148] sm:$0xff] %v6178
        %6435 = vst [vmem:[%s380 + $0x150] sm:$0xff] %v6179
        %6436 = vst [vmem:[%s380 + $0x158] sm:$0xff] %v6180
        %6437 = vst [vmem:[%s380 + $0x160] sm:$0xff] %v6181
        %6438 = vst [vmem:[%s380 + $0x168] sm:$0xff] %v6182
        %6439 = vst [vmem:[%s380 + $0x170] sm:$0xff] %v6183
        %6440 = vst [vmem:[%s380 + $0x178] sm:$0xff] %v6184
        %6441 = vst [vmem:[%s380 + $0x180] sm:$0xff] %v6185
        %6442 = vst [vmem:[%s380 + $0x188] sm:$0xff] %v6186
        %6443 = vst [vmem:[%s380 + $0x190] sm:$0xff] %v6187
        %6444 = vst [vmem:[%s380 + $0x198] sm:$0xff] %v6188
        %6445 = vst [vmem:[%s380 + $0x1a0] sm:$0xff] %v6189
        %6446 = vst [vmem:[%s380 + $0x1a8] sm:$0xff] %v6190
        %6447 = vst [vmem:[%s380 + $0x1b0] sm:$0xff] %v6191
        %6448 = vst [vmem:[%s380 + $0x1b8] sm:$0xff] %v6192
        %6449 = vst [vmem:[%s380 + $0x1c0] sm:$0xff] %v6193
        %6450 = vst [vmem:[%s380 + $0x1c8] sm:$0xff] %v6194
        %6451 = vst [vmem:[%s380 + $0x1d0] sm:$0xff] %v6195
        %6452 = vst [vmem:[%s380 + $0x1d8] sm:$0xff] %v6196
        %6453 = vst [vmem:[%s380 + $0x1e0] sm:$0xff] %v6197
        %6454 = vst [vmem:[%s380 + $0x1e8] sm:$0xff] %v6198
        %6455 = vst [vmem:[%s380 + $0x1f0] sm:$0xff] %v6199
        %6456 = vst [vmem:[%s380 + $0x1f8] sm:$0xff] %v6200
        %6457 = vst [vmem:[%s380 + $0x200] sm:$0xff] %v6201
        %6458 = vst [vmem:[%s380 + $0x208] sm:$0xff] %v6202
        %6459 = vst [vmem:[%s380 + $0x210] sm:$0xff] %v6203
        %6460 = vst [vmem:[%s380 + $0x218] sm:$0xff] %v6204
        %6461 = vst [vmem:[%s380 + $0x220] sm:$0xff] %v6205
        %6462 = vst [vmem:[%s380 + $0x228] sm:$0xff] %v6206
        %6463 = vst [vmem:[%s380 + $0x230] sm:$0xff] %v6207
        %6464 = vst [vmem:[%s380 + $0x238] sm:$0xff] %v6208
        %6465 = vst [vmem:[%s380 + $0x240] sm:$0xff] %v6209
        %6466 = vst [vmem:[%s380 + $0x248] sm:$0xff] %v6210
        %6467 = vst [vmem:[%s380 + $0x250] sm:$0xff] %v6211
        %6468 = vst [vmem:[%s380 + $0x258] sm:$0xff] %v6212
        %6469 = vst [vmem:[%s380 + $0x260] sm:$0xff] %v6213
        %6470 = vst [vmem:[%s380 + $0x268] sm:$0xff] %v6214
        %6471 = vst [vmem:[%s380 + $0x270] sm:$0xff] %v6215
        %6472 = vst [vmem:[%s380 + $0x278] sm:$0xff] %v6216
        %6473 = vst [vmem:[%s380 + $0x280] sm:$0xff] %v6217
        %6474 = vst [vmem:[%s380 + $0x288] sm:$0xff] %v6218
        %6475 = vst [vmem:[%s380 + $0x290] sm:$0xff] %v6219
        %6476 = vst [vmem:[%s380 + $0x298] sm:$0xff] %v6220
        %6477 = vst [vmem:[%s380 + $0x2a0] sm:$0xff] %v6221
        %6478 = vst [vmem:[%s380 + $0x2a8] sm:$0xff] %v6222
        %6479 = vst [vmem:[%s380 + $0x2b0] sm:$0xff] %v6223
        %6480 = vst [vmem:[%s380 + $0x2b8] sm:$0xff] %v6224
        %6481 = vst [vmem:[%s380 + $0x2c0] sm:$0xff] %v6225
        %6482 = vst [vmem:[%s380 + $0x2c8] sm:$0xff] %v6226
        %6483 = vst [vmem:[%s380 + $0x2d0] sm:$0xff] %v6227
        %6484 = vst [vmem:[%s380 + $0x2d8] sm:$0xff] %v6228
        %6485 = vst [vmem:[%s380 + $0x2e0] sm:$0xff] %v6229
        %6486 = vst [vmem:[%s380 + $0x2e8] sm:$0xff] %v6230
        %6487 = vst [vmem:[%s380 + $0x2f0] sm:$0xff] %v6231
        %6488 = vst [vmem:[%s380 + $0x2f8] sm:$0xff] %v6232
        %6489 = vst [vmem:[%s380 + $0x300] sm:$0xff] %v6233
        %6490 = vst [vmem:[%s380 + $0x308] sm:$0xff] %v6234
        %6491 = vst [vmem:[%s380 + $0x310] sm:$0xff] %v6235
        %6492 = vst [vmem:[%s380 + $0x318] sm:$0xff] %v6236
        %6493 = vst [vmem:[%s380 + $0x320] sm:$0xff] %v6237
        %6494 = vst [vmem:[%s380 + $0x328] sm:$0xff] %v6238
        %6495 = vst [vmem:[%s380 + $0x330] sm:$0xff] %v6239
        %6496 = vst [vmem:[%s380 + $0x338] sm:$0xff] %v6240
        %6497 = vst [vmem:[%s380 + $0x340] sm:$0xff] %v6241
        %6498 = vst [vmem:[%s380 + $0x348] sm:$0xff] %v6242
        %6499 = vst [vmem:[%s380 + $0x350] sm:$0xff] %v6243
        %6500 = vst [vmem:[%s380 + $0x358] sm:$0xff] %v6244
        %6501 = vst [vmem:[%s380 + $0x360] sm:$0xff] %v6245
        %6502 = vst [vmem:[%s380 + $0x368] sm:$0xff] %v6246
        %6503 = vst [vmem:[%s380 + $0x370] sm:$0xff] %v6247
        %6504 = vst [vmem:[%s380 + $0x378] sm:$0xff] %v6248
        %6505 = vst [vmem:[%s380 + $0x380] sm:$0xff] %v6249
        %6506 = vst [vmem:[%s380 + $0x388] sm:$0xff] %v6250
        %6507 = vst [vmem:[%s380 + $0x390] sm:$0xff] %v6251
        %6508 = vst [vmem:[%s380 + $0x398] sm:$0xff] %v6252
        %6509 = vst [vmem:[%s380 + $0x3a0] sm:$0xff] %v6253
        %6510 = vst [vmem:[%s380 + $0x3a8] sm:$0xff] %v6254
        %6511 = vst [vmem:[%s380 + $0x3b0] sm:$0xff] %v6255
        %6512 = vst [vmem:[%s380 + $0x3b8] sm:$0xff] %v6256
        %6513 = vst [vmem:[%s380 + $0x3c0] sm:$0xff] %v6257
        %6514 = vst [vmem:[%s380 + $0x3c8] sm:$0xff] %v6258
        %6515 = vst [vmem:[%s380 + $0x3d0] sm:$0xff] %v6259
        %6516 = vst [vmem:[%s380 + $0x3d8] sm:$0xff] %v6260
        %6517 = vst [vmem:[%s380 + $0x3e0] sm:$0xff] %v6261
        %6518 = vst [vmem:[%s380 + $0x3e8] sm:$0xff] %v6262
        %6519 = vst [vmem:[%s380 + $0x3f0] sm:$0xff] %v6263
        %6520 = vst [vmem:[%s380 + $0x3f8] sm:$0xff] %v6264
        %s6521 = sand.u32 %s229, 1
        %s6522 = scalar_lea.sflag [#allocation4], %s6521
        %s6523 = sand.u32 %s229, 1
        %s6524 = smul.addr %s6523, 1024
        %s6525 = scalar_lea.vmem [#allocation8], %s6524
        // Predicated region
        $region69: #{tpu_custom_call.1} parent=55 // pred_check
          %p6526 = pneg %p239
        $region70: #{tpu_custom_call.1} parent=55 // pred_check_branch
          %6528 = sbr.rel (%p6526) target = $region72
        $region71: #{tpu_custom_call.1} parent=55 // pred_region
          %s6529 = smul.u32 4, %s27
          %s6531 = ssub.s32 16384, 16384
          %6532 = vsyncadd %s6522, %s6531
          %s6533 = smul.addr %s6529, 64
          %s6534 = smul.addr %s6533, 64
          %s6535 = scalar_lea.hbm %s9, %s6534
          %s6536 = sshll.u32 %s6525, 4
          %s6537 = int_to_ptr.vmem [resolvable:$true] %s6536
          %6542 = dma.vmem_to_hbm [thread:$0]  %s6537, 16384, %s6535, %s6522, 256, 256, 16
        $region72: #{tpu_custom_call.1} parent=55 // pred_fallthru
          _
      $region56: #{tpu_custom_call.1} parent=5 // pred_fallthru
        _
      %p6543 = scmp.le.s32.totalorder 2, %s22
      // Predicated region
      $region73: #{tpu_custom_call.1} parent=5 // pred_check
        %p6544 = pneg %p6543
      $region74: #{tpu_custom_call.1} parent=5 // pred_check_branch
        %6546 = sbr.rel (%p6544) target = $region76
      $region75: #{tpu_custom_call.1} parent=5 // pred_region
        %s6547 = ssub.s32 %s22, 2
        // Predicated region
        $region77: #{tpu_custom_call.1} parent=75 // pred_check
          %p6548 = pneg %p245
        $region78: #{tpu_custom_call.1} parent=75 // pred_check_branch
          %6550 = sbr.rel (%p6548) target = $region80
        $region79: #{tpu_custom_call.1} parent=75 // pred_region
          %s6551 = sand.u32 %s230, 1
          %s6552 = scalar_lea.sflag [#allocation4], %s6551
          %s6553 = sand.u32 %s230, 1
          %s6554 = smul.addr %s6553, 1024
          %s6555 = scalar_lea.vmem [#allocation8], %s6554
          %6556 = dma.done %s6552, 16384
        $region80: #{tpu_custom_call.1} parent=75 // pred_fallthru
          _
      $region76: #{tpu_custom_call.1} parent=5 // pred_fallthru
        _
    $region6: #{tpu_custom_call.1} parent=1 // loop_footer
      %s26 = sadd.s32 1, %s22
    $region7: #{tpu_custom_call.1} parent=1 // loop_footer_branch
      %21 = sbr.rel target = $region3
    $region8: #{tpu_custom_call.1} parent=1 // loop_exit
      _
    %6557 = vsyncpa [#allocation3], 1
    %s6558 = scalar_lea.sflag [#allocation3], 1
    %6559 = vsyncpa %s6558, 1
    %6560 = vsyncpa [#allocation6], 1
    %6561 = vsyncpa [#allocation4], 1
    %s6562 = scalar_lea.sflag [#allocation4], 1
    %6563 = vsyncpa %s6562, 1

</llo_original>
